<compile_context>
chip_gen: v7x
topology: tpu7x:2x2x1
jax: 0.10.0
libtpu: 0.0.40
codegen_flags: <defaults>
</compile_context>

<pallas_src>
import numpy as np
import jax
import jax.numpy as jnp
from jax import lax
from jax.experimental import pallas as pl
from jax.experimental.pallas import tpu as pltpu

# ----------------------------- model config ---------------------------------
BATCH = 2
SEQ = 8
D_MODEL = 32
N_HEADS = 4
D_HEAD = D_MODEL // N_HEADS
N_LAYERS = 2
VOCAB = 64
VPAD = 128           # vocab padded to a lane-dense multiple of 128
MAX_POS = 16
LN_EPS = 1e-5
NEG_INF = -1e9


# ----------------------------- in-kernel helpers -----------------------------
def _layernorm(x, g, b):
    mean = jnp.mean(x, axis=-1, keepdims=True)
    xc = x - mean
    var = jnp.mean(xc * xc, axis=-1, keepdims=True)
    return xc * lax.rsqrt(var + LN_EPS) * g + b


def _gelu_new(y):
    # GPT-2 "gelu_new" (tanh approximation)
    return 0.5 * y * (1.0 + jnp.tanh(0.7978845608028654 * (y + 0.044715 * y * y * y)))


# ----------------------------- fused decoder kernel --------------------------
def _decoder_kernel(ids_ref, bias_ref, pos_ref, wte_ref,
                    qkv_w_ref, proj_w_ref, fc_w_ref, fc2_w_ref,
                    slab_ref, o_ref):
    f32 = jnp.float32
    bs = ids_ref.shape[0]
    vpad, d_model = wte_ref.shape
    n_layers = qkv_w_ref.shape[0]
    D = d_model
    d_head = D // N_HEADS
    scale = 1.0 / float(d_head) ** 0.5

    wte = wte_ref[...]                                            # [VPAD, D]

    # --- token embedding: one-hot(ids) @ wte_pad (MXU "gather", K=128) ---
    ids = ids_ref[...]                                            # [BS, 1] int32
    v_iota = lax.broadcasted_iota(jnp.int32, (bs, vpad), 1)
    tok_oh = jnp.where(v_iota == ids, 1.0, 0.0).astype(f32)       # [BS, VPAD]
    x = jnp.dot(tok_oh, wte, preferred_element_type=f32)          # [BS, D]

    # --- positional embedding rows precomputed in wrapper (VPU add) ---
    x = x + pos_ref[...]

    # --- combined causal + same-batch + key-padding bias (precomputed) ---
    attn_bias = bias_ref[...]                                     # [BS, BS]

    for l in range(n_layers):                 # static unroll (N_LAYERS is tiny)
        slab = slab_ref[l]                                        # [4, 128]
        ln1_g = slab[0:1, 0:D];        ln1_b = slab[0:1, D:2 * D]
        ln2_g = slab[0:1, 2 * D:3 * D]; ln2_b = slab[0:1, 3 * D:4 * D]
        bq = slab[1:2, 0:D]; bk = slab[1:2, D:2 * D]; bv = slab[1:2, 2 * D:3 * D]
        proj_b = slab[1:2, 3 * D:4 * D]
        fc_b = slab[2:3, :]                                       # [1, 4*D=128]
        fc2_b = slab[3:4, 0:D]

        # ---- attention sub-block (pre-LN) ----
        h = _layernorm(x, ln1_g, ln1_b)
        q = jnp.dot(h, qkv_w_ref[l, 0], preferred_element_type=f32) + bq
        k = jnp.dot(h, qkv_w_ref[l, 1], preferred_element_type=f32) + bk
        v = jnp.dot(h, qkv_w_ref[l, 2], preferred_element_type=f32) + bv

        o_heads = []
        for hh in range(N_HEADS):             # static head split (lane slices)
            lo = hh * d_head
            q_h = q[:, lo:lo + d_head]
            k_h = k[:, lo:lo + d_head]
            v_h = v[:, lo:lo + d_head]
            # q @ k^T for ALL batches at once; block-diag bias keeps them apart
            s = lax.dot_general(q_h, k_h, (((1,), (1,)), ((), ())),
                                preferred_element_type=f32) * scale + attn_bias
            m = jnp.max(s, axis=-1, keepdims=True)
            p = jnp.exp(s - m)
            p = p * pl.reciprocal(jnp.sum(p, axis=-1, keepdims=True), approx=True)
            o_heads.append(jnp.dot(p, v_h, preferred_element_type=f32))  # [BS, Dh]

        # single output projection: [BS,D] @ [D,D] (one MXU push, not 4 chained)
        attn_cat = jnp.concatenate(o_heads, axis=-1)              # [BS, D]
        attn_out = jnp.dot(attn_cat, proj_w_ref[l],
                           preferred_element_type=f32) + proj_b
        x = x + attn_out

        # ---- MLP sub-block (pre-LN) ----
        h = _layernorm(x, ln2_g, ln2_b)
        h = jnp.dot(h, fc_w_ref[l], preferred_element_type=f32) + fc_b
        h = _gelu_new(h)
        h = jnp.dot(h, fc2_w_ref[l], preferred_element_type=f32) + fc2_b
        x = x + h

    # ---- final LN + weight-tied LM head (contract wte_pad on its last dim) ----
    slab0 = slab_ref[0]
    lnf_g = slab0[3:4, D:2 * D]
    lnf_b = slab0[3:4, 2 * D:3 * D]
    x = _layernorm(x, lnf_g, lnf_b)
    logits = lax.dot_general(x, wte, (((1,), (1,)), ((), ())),
                             preferred_element_type=f32)          # [BS, VPAD]
    o_ref[...] = logits.astype(o_ref.dtype)                       # lane-dense store


# ----------------------------- wrapper ---------------------------------------
def _full_spec(shape):
    nd = len(shape)
    return pl.BlockSpec(shape, lambda i, _nd=nd: (0,) * _nd)


@jax.jit
def text_decoder_forward(params, input_ids, attention_mask=None):
    B, S = input_ids.shape
    assert S <= MAX_POS
    bs = B * S
    L, D = N_LAYERS, D_MODEL
    ids = input_ids.reshape(bs, 1).astype(jnp.int32)

    # trace-time constant: block-diagonal (same batch) causal mask
    r = np.arange(bs)
    allowed_np = (((r[:, None] // S) == (r[None, :] // S)) &
                  ((r[None, :] % S) <= (r[:, None] % S)))
    allowed = jnp.asarray(allowed_np)
    if attention_mask is None:
        key_ok = jnp.ones((1, bs), dtype=bool)
    else:
        key_ok = attention_mask.reshape(1, bs).astype(bool)
    attn_bias = jnp.where(allowed & key_ok, 0.0, NEG_INF).astype(jnp.float32)

    # positional rows: wpe[row % S]  (no in-kernel one-hot matmul)
    pos_rows = jnp.tile(params["wpe"][:S], (B, 1)).astype(jnp.float32)   # [BS, D]

    # vocab padded to 128 lanes -> lane-dense LM-head output & full-depth gather
    wte_pad = jnp.pad(params["wte"], ((0, VPAD - VOCAB), (0, 0)))        # [VPAD, D]

    # qkv weights regrouped so W_q/W_k/W_v are leading-dim selectable in-kernel
    qkv_w = params["attn_w"].reshape(L, D, 3, D).transpose(0, 2, 1, 3)   # [L,3,D,D]

    # pack all tiny per-layer tensors into one lane-dense [L, 4, 128] slab
    row0 = jnp.concatenate([params["ln1_g"], params["ln1_b"],
                            params["ln2_g"], params["ln2_b"]], axis=-1)  # [L,1,128]
    row1 = jnp.concatenate([params["attn_b"], params["proj_b"]], axis=-1)  # [L,1,128]
    row2 = params["fc_b"]                                                # [L,1,128]
    lnf = jnp.concatenate([params["lnf_g"], params["lnf_b"]], axis=-1)[None]  # [1,1,2D]
    lnf_rows = jnp.concatenate(
        [lnf, jnp.zeros((L - 1, 1, 2 * D), jnp.float32)], axis=0)        # [L,1,2D]
    row3 = jnp.concatenate(
        [params["fc2_b"], lnf_rows, jnp.zeros((L, 1, D), jnp.float32)], axis=-1)
    slab = jnp.concatenate([row0, row1, row2, row3], axis=1)             # [L,4,128]

    inputs = (ids, attn_bias, pos_rows, wte_pad,
              qkv_w, params["proj_w"], params["fc_w"], params["fc2_w"], slab)

    logits = pl.pallas_call(
        _decoder_kernel,
        out_shape=jax.ShapeDtypeStruct((bs, VPAD), jnp.float32),
        grid=(1,),
        in_specs=[_full_spec(t.shape) for t in inputs],
        out_specs=_full_spec((bs, VPAD)),
        compiler_params=pltpu.CompilerParams(
            dimension_semantics=("arbitrary",)),
    )(*inputs)
    return logits[:, :VOCAB].reshape(B, S, VOCAB)


# ----------------------------- parameters ------------------------------------
def init_params(key):
    def normal(kk, shape, scale=0.02):
        return scale * jax.random.normal(kk, shape, dtype=jnp.float32)

    k = jax.random.split(key, 6)
    return {
        "wte": normal(k[0], (VOCAB, D_MODEL)),
        "wpe": normal(k[1], (MAX_POS, D_MODEL)),
        "ln1_g": jnp.ones((N_LAYERS, 1, D_MODEL), jnp.float32),
        "ln1_b": jnp.zeros((N_LAYERS, 1, D_MODEL), jnp.float32),
        "attn_w": normal(k[2], (N_LAYERS, D_MODEL, 3 * D_MODEL)),
        "attn_b": jnp.zeros((N_LAYERS, 1, 3 * D_MODEL), jnp.float32),
        "proj_w": normal(k[3], (N_LAYERS, D_MODEL, D_MODEL)),
        "proj_b": jnp.zeros((N_LAYERS, 1, D_MODEL), jnp.float32),
        "ln2_g": jnp.ones((N_LAYERS, 1, D_MODEL), jnp.float32),
        "ln2_b": jnp.zeros((N_LAYERS, 1, D_MODEL), jnp.float32),
        "fc_w": normal(k[4], (N_LAYERS, D_MODEL, 4 * D_MODEL)),
        "fc_b": jnp.zeros((N_LAYERS, 1, 4 * D_MODEL), jnp.float32),
        "fc2_w": normal(k[5], (N_LAYERS, 4 * D_MODEL, D_MODEL)),
        "fc2_b": jnp.zeros((N_LAYERS, 1, D_MODEL), jnp.float32),
        "lnf_g": jnp.ones((1, D_MODEL), jnp.float32),
        "lnf_b": jnp.zeros((1, D_MODEL), jnp.float32),
    }


# ----------------------------- main -------------------------------------------
if __name__ == "__main__":
    key = jax.random.PRNGKey(0)
    pkey, ikey = jax.random.split(key)
    params = init_params(pkey)

    input_ids = jax.random.randint(ikey, (BATCH, SEQ), 0, VOCAB, dtype=jnp.int32)
    attention_mask = jnp.ones((BATCH, SEQ), dtype=jnp.int32)

    logits = text_decoder_forward(params, input_ids, attention_mask)
    logits = jax.block_until_ready(logits)

    assert logits.shape == (BATCH, SEQ, VOCAB), logits.shape
    assert logits.dtype == jnp.float32
    assert bool(jnp.all(jnp.isfinite(logits)))
    print("KERNEL_OK")
</pallas_src>

<mosaic_0001>
module attributes {stable_mosaic.version = 11 : i64} {
  func.func @_decoder_kernel(%arg0: i32, %arg1: memref<16x1xi32, #tpu.memory_space<vmem>>, %arg2: memref<16x16xf32, #tpu.memory_space<vmem>>, %arg3: memref<16x32xf32, #tpu.memory_space<vmem>>, %arg4: memref<128x32xf32, #tpu.memory_space<vmem>>, %arg5: memref<2x3x32x32xf32, #tpu.memory_space<vmem>>, %arg6: memref<2x32x32xf32, #tpu.memory_space<vmem>>, %arg7: memref<2x32x128xf32, #tpu.memory_space<vmem>>, %arg8: memref<2x128x32xf32, #tpu.memory_space<vmem>>, %arg9: memref<2x4x128xf32, #tpu.memory_space<vmem>>, %arg10: memref<16x128xf32, #tpu.memory_space<vmem>>) attributes {dimension_semantics = [#tpu.dimension_semantics<arbitrary>], iteration_bounds = array<i64: 1>, scalar_prefetch = 0 : i64, scratch_operands = 0 : i64, tpu.core_type = #tpu.core_type<tc>, window_params = [{pipeline_mode = #tpu.pipeline_mode<synchronous>, transform_indices = @transform_0, window_bounds = array<i64: 16, 1>}, {pipeline_mode = #tpu.pipeline_mode<synchronous>, transform_indices = @transform_1, window_bounds = array<i64: 16, 16>}, {pipeline_mode = #tpu.pipeline_mode<synchronous>, transform_indices = @transform_2, window_bounds = array<i64: 16, 32>}, {pipeline_mode = #tpu.pipeline_mode<synchronous>, transform_indices = @transform_3, window_bounds = array<i64: 128, 32>}, {pipeline_mode = #tpu.pipeline_mode<synchronous>, transform_indices = @transform_4, window_bounds = array<i64: 2, 3, 32, 32>}, {pipeline_mode = #tpu.pipeline_mode<synchronous>, transform_indices = @transform_5, window_bounds = array<i64: 2, 32, 32>}, {pipeline_mode = #tpu.pipeline_mode<synchronous>, transform_indices = @transform_6, window_bounds = array<i64: 2, 32, 128>}, {pipeline_mode = #tpu.pipeline_mode<synchronous>, transform_indices = @transform_7, window_bounds = array<i64: 2, 128, 32>}, {pipeline_mode = #tpu.pipeline_mode<synchronous>, transform_indices = @transform_8, window_bounds = array<i64: 2, 4, 128>}, {pipeline_mode = #tpu.pipeline_mode<synchronous>, transform_indices = @transform_9, window_bounds = array<i64: 16, 128>}]} {
    %c0 = arith.constant 0 : index
    %c0_0 = arith.constant 0 : index
    %0 = vector.load %arg4[%c0, %c0_0] : memref<128x32xf32, #tpu.memory_space<vmem>>, vector<128x32xf32>
    %c0_1 = arith.constant 0 : index
    %c0_2 = arith.constant 0 : index
    %1 = vector.load %arg1[%c0_1, %c0_2] : memref<16x1xi32, #tpu.memory_space<vmem>>, vector<16x1xi32>
    %2 = tpu.iota {dimensions = array<i32: 1>} : vector<16x128xi32>
    %3 = vector.broadcast %1 : vector<16x1xi32> to vector<16x128xi32>
    %4 = arith.cmpi eq, %2, %3 : vector<16x128xi32>
    %cst = arith.constant 1.000000e+00 : f32
    %cst_3 = arith.constant 0.000000e+00 : f32
    %5 = vector.broadcast %cst : f32 to vector<16x128xf32>
    %6 = vector.broadcast %cst_3 : f32 to vector<16x128xf32>
    %7 = arith.select %4, %5, %6 : vector<16x128xi1>, vector<16x128xf32>
    %cst_4 = arith.constant dense<0.000000e+00> : vector<16x32xf32>
    %8 = tpu.matmul %7, %0, %cst_4 {dimension_numbers = #tpu.dot_dimension_numbers<[1], [0], [0], [1], [0, 0, 1, 1], [], []>} : vector<16x128xf32>, vector<128x32xf32>, vector<16x32xf32> -> vector<16x32xf32>
    %c0_5 = arith.constant 0 : index
    %c0_6 = arith.constant 0 : index
    %9 = vector.load %arg3[%c0_5, %c0_6] : memref<16x32xf32, #tpu.memory_space<vmem>>, vector<16x32xf32>
    %10 = arith.addf %8, %9 : vector<16x32xf32>
    %c0_7 = arith.constant 0 : index
    %c0_8 = arith.constant 0 : index
    %11 = vector.load %arg2[%c0_7, %c0_8] : memref<16x16xf32, #tpu.memory_space<vmem>>, vector<16x16xf32>
    %c0_9 = arith.constant 0 : index
    %c0_10 = arith.constant 0 : index
    %c0_11 = arith.constant 0 : index
    %12 = vector.load %arg9[%c0_9, %c0_10, %c0_11] : memref<2x4x128xf32, #tpu.memory_space<vmem>>, vector<1x4x128xf32>
    %13 = vector.shape_cast %12 : vector<1x4x128xf32> to vector<4x128xf32>
    %14 = vector.extract_strided_slice %13 {offsets = [0, 0], sizes = [1, 32], strides = [1, 1]} : vector<4x128xf32> to vector<1x32xf32>
    %15 = vector.extract_strided_slice %13 {offsets = [0, 32], sizes = [1, 32], strides = [1, 1]} : vector<4x128xf32> to vector<1x32xf32>
    %16 = vector.extract_strided_slice %13 {offsets = [0, 64], sizes = [1, 32], strides = [1, 1]} : vector<4x128xf32> to vector<1x32xf32>
    %17 = vector.extract_strided_slice %13 {offsets = [0, 96], sizes = [1, 32], strides = [1, 1]} : vector<4x128xf32> to vector<1x32xf32>
    %18 = vector.extract_strided_slice %13 {offsets = [1, 0], sizes = [1, 32], strides = [1, 1]} : vector<4x128xf32> to vector<1x32xf32>
    %19 = vector.extract_strided_slice %13 {offsets = [1, 32], sizes = [1, 32], strides = [1, 1]} : vector<4x128xf32> to vector<1x32xf32>
    %20 = vector.extract_strided_slice %13 {offsets = [1, 64], sizes = [1, 32], strides = [1, 1]} : vector<4x128xf32> to vector<1x32xf32>
    %21 = vector.extract_strided_slice %13 {offsets = [1, 96], sizes = [1, 32], strides = [1, 1]} : vector<4x128xf32> to vector<1x32xf32>
    %22 = vector.extract_strided_slice %13 {offsets = [2, 0], sizes = [1, 128], strides = [1, 1]} : vector<4x128xf32> to vector<1x128xf32>
    %23 = vector.extract_strided_slice %13 {offsets = [3, 0], sizes = [1, 32], strides = [1, 1]} : vector<4x128xf32> to vector<1x32xf32>
    %cst_12 = arith.constant dense<0.000000e+00> : vector<16xf32>
    %24 = vector.multi_reduction <add>, %10, %cst_12 [1] : vector<16x32xf32> to vector<16xf32>
    %25 = vector.shape_cast %24 : vector<16xf32> to vector<16x1xf32>
    %cst_13 = arith.constant 3.200000e+01 : f32
    %26 = vector.broadcast %cst_13 : f32 to vector<16x1xf32>
    %27 = arith.divf %25, %26 : vector<16x1xf32>
    %28 = vector.broadcast %27 : vector<16x1xf32> to vector<16x32xf32>
    %29 = arith.subf %10, %28 : vector<16x32xf32>
    %30 = arith.mulf %29, %29 : vector<16x32xf32>
    %cst_14 = arith.constant dense<0.000000e+00> : vector<16xf32>
    %31 = vector.multi_reduction <add>, %30, %cst_14 [1] : vector<16x32xf32> to vector<16xf32>
    %32 = vector.shape_cast %31 : vector<16xf32> to vector<16x1xf32>
    %cst_15 = arith.constant 3.200000e+01 : f32
    %33 = vector.broadcast %cst_15 : f32 to vector<16x1xf32>
    %34 = arith.divf %32, %33 : vector<16x1xf32>
    %cst_16 = arith.constant 9.99999974E-6 : f32
    %35 = vector.broadcast %cst_16 : f32 to vector<16x1xf32>
    %36 = arith.addf %34, %35 : vector<16x1xf32>
    %37 = math.rsqrt %36 : vector<16x1xf32>
    %38 = vector.broadcast %37 : vector<16x1xf32> to vector<16x32xf32>
    %39 = arith.mulf %29, %38 : vector<16x32xf32>
    %40 = vector.broadcast %14 : vector<1x32xf32> to vector<16x32xf32>
    %41 = arith.mulf %39, %40 : vector<16x32xf32>
    %42 = vector.broadcast %15 : vector<1x32xf32> to vector<16x32xf32>
    %43 = arith.addf %41, %42 : vector<16x32xf32>
    %c0_17 = arith.constant 0 : index
    %c0_18 = arith.constant 0 : index
    %c0_19 = arith.constant 0 : index
    %c0_20 = arith.constant 0 : index
    %44 = vector.load %arg5[%c0_17, %c0_18, %c0_19, %c0_20] : memref<2x3x32x32xf32, #tpu.memory_space<vmem>>, vector<1x1x32x32xf32>
    %45 = vector.shape_cast %44 : vector<1x1x32x32xf32> to vector<32x32xf32>
    %cst_21 = arith.constant dense<0.000000e+00> : vector<16x32xf32>
    %46 = tpu.matmul %43, %45, %cst_21 {dimension_numbers = #tpu.dot_dimension_numbers<[1], [0], [0], [1], [0, 0, 1, 1], [], []>} : vector<16x32xf32>, vector<32x32xf32>, vector<16x32xf32> -> vector<16x32xf32>
    %47 = vector.broadcast %18 : vector<1x32xf32> to vector<16x32xf32>
    %48 = arith.addf %46, %47 : vector<16x32xf32>
    %c0_22 = arith.constant 0 : index
    %c1 = arith.constant 1 : index
    %c0_23 = arith.constant 0 : index
    %c0_24 = arith.constant 0 : index
    %49 = vector.load %arg5[%c0_22, %c1, %c0_23, %c0_24] : memref<2x3x32x32xf32, #tpu.memory_space<vmem>>, vector<1x1x32x32xf32>
    %50 = vector.shape_cast %49 : vector<1x1x32x32xf32> to vector<32x32xf32>
    %cst_25 = arith.constant dense<0.000000e+00> : vector<16x32xf32>
    %51 = tpu.matmul %43, %50, %cst_25 {dimension_numbers = #tpu.dot_dimension_numbers<[1], [0], [0], [1], [0, 0, 1, 1], [], []>} : vector<16x32xf32>, vector<32x32xf32>, vector<16x32xf32> -> vector<16x32xf32>
    %52 = vector.broadcast %19 : vector<1x32xf32> to vector<16x32xf32>
    %53 = arith.addf %51, %52 : vector<16x32xf32>
    %c0_26 = arith.constant 0 : index
    %c2 = arith.constant 2 : index
    %c0_27 = arith.constant 0 : index
    %c0_28 = arith.constant 0 : index
    %54 = vector.load %arg5[%c0_26, %c2, %c0_27, %c0_28] : memref<2x3x32x32xf32, #tpu.memory_space<vmem>>, vector<1x1x32x32xf32>
    %55 = vector.shape_cast %54 : vector<1x1x32x32xf32> to vector<32x32xf32>
    %cst_29 = arith.constant dense<0.000000e+00> : vector<16x32xf32>
    %56 = tpu.matmul %43, %55, %cst_29 {dimension_numbers = #tpu.dot_dimension_numbers<[1], [0], [0], [1], [0, 0, 1, 1], [], []>} : vector<16x32xf32>, vector<32x32xf32>, vector<16x32xf32> -> vector<16x32xf32>
    %57 = vector.broadcast %20 : vector<1x32xf32> to vector<16x32xf32>
    %58 = arith.addf %56, %57 : vector<16x32xf32>
    %59 = vector.extract_strided_slice %48 {offsets = [0, 0], sizes = [16, 8], strides = [1, 1]} : vector<16x32xf32> to vector<16x8xf32>
    %60 = vector.extract_strided_slice %53 {offsets = [0, 0], sizes = [16, 8], strides = [1, 1]} : vector<16x32xf32> to vector<16x8xf32>
    %61 = vector.extract_strided_slice %58 {offsets = [0, 0], sizes = [16, 8], strides = [1, 1]} : vector<16x32xf32> to vector<16x8xf32>
    %cst_30 = arith.constant dense<0.000000e+00> : vector<16x16xf32>
    %62 = tpu.matmul %59, %60, %cst_30 {dimension_numbers = #tpu.dot_dimension_numbers<[1], [1], [0], [0], [0, 0, 1, 0], [], []>} : vector<16x8xf32>, vector<16x8xf32>, vector<16x16xf32> -> vector<16x16xf32>
    %cst_31 = arith.constant 0.353553385 : f32
    %63 = vector.broadcast %cst_31 : f32 to vector<16x16xf32>
    %64 = arith.mulf %62, %63 : vector<16x16xf32>
    %65 = arith.addf %64, %11 : vector<16x16xf32>
    %cst_32 = arith.constant dense<0xFF800000> : vector<16xf32>
    %66 = vector.multi_reduction <maximumf>, %65, %cst_32 [1] : vector<16x16xf32> to vector<16xf32>
    %67 = vector.shape_cast %66 : vector<16xf32> to vector<16x1xf32>
    %68 = vector.broadcast %67 : vector<16x1xf32> to vector<16x16xf32>
    %69 = arith.subf %65, %68 : vector<16x16xf32>
    %70 = math.exp %69 : vector<16x16xf32>
    %cst_33 = arith.constant dense<0.000000e+00> : vector<16xf32>
    %71 = vector.multi_reduction <add>, %70, %cst_33 [1] : vector<16x16xf32> to vector<16xf32>
    %72 = vector.shape_cast %71 : vector<16xf32> to vector<16x1xf32>
    %73 = tpu.reciprocal %72 {approx = true} : vector<16x1xf32> -> vector<16x1xf32>
    %74 = vector.broadcast %73 : vector<16x1xf32> to vector<16x16xf32>
    %75 = arith.mulf %70, %74 : vector<16x16xf32>
    %cst_34 = arith.constant dense<0.000000e+00> : vector<16x8xf32>
    %76 = tpu.matmul %75, %61, %cst_34 {dimension_numbers = #tpu.dot_dimension_numbers<[1], [0], [0], [1], [0, 0, 1, 1], [], []>} : vector<16x16xf32>, vector<16x8xf32>, vector<16x8xf32> -> vector<16x8xf32>
    %77 = vector.extract_strided_slice %48 {offsets = [0, 8], sizes = [16, 8], strides = [1, 1]} : vector<16x32xf32> to vector<16x8xf32>
    %78 = vector.extract_strided_slice %53 {offsets = [0, 8], sizes = [16, 8], strides = [1, 1]} : vector<16x32xf32> to vector<16x8xf32>
    %79 = vector.extract_strided_slice %58 {offsets = [0, 8], sizes = [16, 8], strides = [1, 1]} : vector<16x32xf32> to vector<16x8xf32>
    %cst_35 = arith.constant dense<0.000000e+00> : vector<16x16xf32>
    %80 = tpu.matmul %77, %78, %cst_35 {dimension_numbers = #tpu.dot_dimension_numbers<[1], [1], [0], [0], [0, 0, 1, 0], [], []>} : vector<16x8xf32>, vector<16x8xf32>, vector<16x16xf32> -> vector<16x16xf32>
    %cst_36 = arith.constant 0.353553385 : f32
    %81 = vector.broadcast %cst_36 : f32 to vector<16x16xf32>
    %82 = arith.mulf %80, %81 : vector<16x16xf32>
    %83 = arith.addf %82, %11 : vector<16x16xf32>
    %cst_37 = arith.constant dense<0xFF800000> : vector<16xf32>
    %84 = vector.multi_reduction <maximumf>, %83, %cst_37 [1] : vector<16x16xf32> to vector<16xf32>
    %85 = vector.shape_cast %84 : vector<16xf32> to vector<16x1xf32>
    %86 = vector.broadcast %85 : vector<16x1xf32> to vector<16x16xf32>
    %87 = arith.subf %83, %86 : vector<16x16xf32>
    %88 = math.exp %87 : vector<16x16xf32>
    %cst_38 = arith.constant dense<0.000000e+00> : vector<16xf32>
    %89 = vector.multi_reduction <add>, %88, %cst_38 [1] : vector<16x16xf32> to vector<16xf32>
    %90 = vector.shape_cast %89 : vector<16xf32> to vector<16x1xf32>
    %91 = tpu.reciprocal %90 {approx = true} : vector<16x1xf32> -> vector<16x1xf32>
    %92 = vector.broadcast %91 : vector<16x1xf32> to vector<16x16xf32>
    %93 = arith.mulf %88, %92 : vector<16x16xf32>
    %cst_39 = arith.constant dense<0.000000e+00> : vector<16x8xf32>
    %94 = tpu.matmul %93, %79, %cst_39 {dimension_numbers = #tpu.dot_dimension_numbers<[1], [0], [0], [1], [0, 0, 1, 1], [], []>} : vector<16x16xf32>, vector<16x8xf32>, vector<16x8xf32> -> vector<16x8xf32>
    %95 = vector.extract_strided_slice %48 {offsets = [0, 16], sizes = [16, 8], strides = [1, 1]} : vector<16x32xf32> to vector<16x8xf32>
    %96 = vector.extract_strided_slice %53 {offsets = [0, 16], sizes = [16, 8], strides = [1, 1]} : vector<16x32xf32> to vector<16x8xf32>
    %97 = vector.extract_strided_slice %58 {offsets = [0, 16], sizes = [16, 8], strides = [1, 1]} : vector<16x32xf32> to vector<16x8xf32>
    %cst_40 = arith.constant dense<0.000000e+00> : vector<16x16xf32>
    %98 = tpu.matmul %95, %96, %cst_40 {dimension_numbers = #tpu.dot_dimension_numbers<[1], [1], [0], [0], [0, 0, 1, 0], [], []>} : vector<16x8xf32>, vector<16x8xf32>, vector<16x16xf32> -> vector<16x16xf32>
    %cst_41 = arith.constant 0.353553385 : f32
    %99 = vector.broadcast %cst_41 : f32 to vector<16x16xf32>
    %100 = arith.mulf %98, %99 : vector<16x16xf32>
    %101 = arith.addf %100, %11 : vector<16x16xf32>
    %cst_42 = arith.constant dense<0xFF800000> : vector<16xf32>
    %102 = vector.multi_reduction <maximumf>, %101, %cst_42 [1] : vector<16x16xf32> to vector<16xf32>
    %103 = vector.shape_cast %102 : vector<16xf32> to vector<16x1xf32>
    %104 = vector.broadcast %103 : vector<16x1xf32> to vector<16x16xf32>
    %105 = arith.subf %101, %104 : vector<16x16xf32>
    %106 = math.exp %105 : vector<16x16xf32>
    %cst_43 = arith.constant dense<0.000000e+00> : vector<16xf32>
    %107 = vector.multi_reduction <add>, %106, %cst_43 [1] : vector<16x16xf32> to vector<16xf32>
    %108 = vector.shape_cast %107 : vector<16xf32> to vector<16x1xf32>
    %109 = tpu.reciprocal %108 {approx = true} : vector<16x1xf32> -> vector<16x1xf32>
    %110 = vector.broadcast %109 : vector<16x1xf32> to vector<16x16xf32>
    %111 = arith.mulf %106, %110 : vector<16x16xf32>
    %cst_44 = arith.constant dense<0.000000e+00> : vector<16x8xf32>
    %112 = tpu.matmul %111, %97, %cst_44 {dimension_numbers = #tpu.dot_dimension_numbers<[1], [0], [0], [1], [0, 0, 1, 1], [], []>} : vector<16x16xf32>, vector<16x8xf32>, vector<16x8xf32> -> vector<16x8xf32>
    %113 = vector.extract_strided_slice %48 {offsets = [0, 24], sizes = [16, 8], strides = [1, 1]} : vector<16x32xf32> to vector<16x8xf32>
    %114 = vector.extract_strided_slice %53 {offsets = [0, 24], sizes = [16, 8], strides = [1, 1]} : vector<16x32xf32> to vector<16x8xf32>
    %115 = vector.extract_strided_slice %58 {offsets = [0, 24], sizes = [16, 8], strides = [1, 1]} : vector<16x32xf32> to vector<16x8xf32>
    %cst_45 = arith.constant dense<0.000000e+00> : vector<16x16xf32>
    %116 = tpu.matmul %113, %114, %cst_45 {dimension_numbers = #tpu.dot_dimension_numbers<[1], [1], [0], [0], [0, 0, 1, 0], [], []>} : vector<16x8xf32>, vector<16x8xf32>, vector<16x16xf32> -> vector<16x16xf32>
    %cst_46 = arith.constant 0.353553385 : f32
    %117 = vector.broadcast %cst_46 : f32 to vector<16x16xf32>
    %118 = arith.mulf %116, %117 : vector<16x16xf32>
    %119 = arith.addf %118, %11 : vector<16x16xf32>
    %cst_47 = arith.constant dense<0xFF800000> : vector<16xf32>
    %120 = vector.multi_reduction <maximumf>, %119, %cst_47 [1] : vector<16x16xf32> to vector<16xf32>
    %121 = vector.shape_cast %120 : vector<16xf32> to vector<16x1xf32>
    %122 = vector.broadcast %121 : vector<16x1xf32> to vector<16x16xf32>
    %123 = arith.subf %119, %122 : vector<16x16xf32>
    %124 = math.exp %123 : vector<16x16xf32>
    %cst_48 = arith.constant dense<0.000000e+00> : vector<16xf32>
    %125 = vector.multi_reduction <add>, %124, %cst_48 [1] : vector<16x16xf32> to vector<16xf32>
    %126 = vector.shape_cast %125 : vector<16xf32> to vector<16x1xf32>
    %127 = tpu.reciprocal %126 {approx = true} : vector<16x1xf32> -> vector<16x1xf32>
    %128 = vector.broadcast %127 : vector<16x1xf32> to vector<16x16xf32>
    %129 = arith.mulf %124, %128 : vector<16x16xf32>
    %cst_49 = arith.constant dense<0.000000e+00> : vector<16x8xf32>
    %130 = tpu.matmul %129, %115, %cst_49 {dimension_numbers = #tpu.dot_dimension_numbers<[1], [0], [0], [1], [0, 0, 1, 1], [], []>} : vector<16x16xf32>, vector<16x8xf32>, vector<16x8xf32> -> vector<16x8xf32>
    %131 = tpu.concatenate %76, %94, %112, %130 in 1 : vector<16x8xf32>, vector<16x8xf32>, vector<16x8xf32>, vector<16x8xf32> -> vector<16x32xf32>
    %c0_50 = arith.constant 0 : index
    %c0_51 = arith.constant 0 : index
    %c0_52 = arith.constant 0 : index
    %132 = vector.load %arg6[%c0_50, %c0_51, %c0_52] : memref<2x32x32xf32, #tpu.memory_space<vmem>>, vector<1x32x32xf32>
    %133 = vector.shape_cast %132 : vector<1x32x32xf32> to vector<32x32xf32>
    %cst_53 = arith.constant dense<0.000000e+00> : vector<16x32xf32>
    %134 = tpu.matmul %131, %133, %cst_53 {dimension_numbers = #tpu.dot_dimension_numbers<[1], [0], [0], [1], [0, 0, 1, 1], [], []>} : vector<16x32xf32>, vector<32x32xf32>, vector<16x32xf32> -> vector<16x32xf32>
    %135 = vector.broadcast %21 : vector<1x32xf32> to vector<16x32xf32>
    %136 = arith.addf %134, %135 : vector<16x32xf32>
    %137 = arith.addf %10, %136 : vector<16x32xf32>
    %cst_54 = arith.constant dense<0.000000e+00> : vector<16xf32>
    %138 = vector.multi_reduction <add>, %137, %cst_54 [1] : vector<16x32xf32> to vector<16xf32>
    %139 = vector.shape_cast %138 : vector<16xf32> to vector<16x1xf32>
    %cst_55 = arith.constant 3.200000e+01 : f32
    %140 = vector.broadcast %cst_55 : f32 to vector<16x1xf32>
    %141 = arith.divf %139, %140 : vector<16x1xf32>
    %142 = vector.broadcast %141 : vector<16x1xf32> to vector<16x32xf32>
    %143 = arith.subf %137, %142 : vector<16x32xf32>
    %144 = arith.mulf %143, %143 : vector<16x32xf32>
    %cst_56 = arith.constant dense<0.000000e+00> : vector<16xf32>
    %145 = vector.multi_reduction <add>, %144, %cst_56 [1] : vector<16x32xf32> to vector<16xf32>
    %146 = vector.shape_cast %145 : vector<16xf32> to vector<16x1xf32>
    %cst_57 = arith.constant 3.200000e+01 : f32
    %147 = vector.broadcast %cst_57 : f32 to vector<16x1xf32>
    %148 = arith.divf %146, %147 : vector<16x1xf32>
    %cst_58 = arith.constant 9.99999974E-6 : f32
    %149 = vector.broadcast %cst_58 : f32 to vector<16x1xf32>
    %150 = arith.addf %148, %149 : vector<16x1xf32>
    %151 = math.rsqrt %150 : vector<16x1xf32>
    %152 = vector.broadcast %151 : vector<16x1xf32> to vector<16x32xf32>
    %153 = arith.mulf %143, %152 : vector<16x32xf32>
    %154 = vector.broadcast %16 : vector<1x32xf32> to vector<16x32xf32>
    %155 = arith.mulf %153, %154 : vector<16x32xf32>
    %156 = vector.broadcast %17 : vector<1x32xf32> to vector<16x32xf32>
    %157 = arith.addf %155, %156 : vector<16x32xf32>
    %c0_59 = arith.constant 0 : index
    %c0_60 = arith.constant 0 : index
    %c0_61 = arith.constant 0 : index
    %158 = vector.load %arg7[%c0_59, %c0_60, %c0_61] : memref<2x32x128xf32, #tpu.memory_space<vmem>>, vector<1x32x128xf32>
    %159 = vector.shape_cast %158 : vector<1x32x128xf32> to vector<32x128xf32>
    %cst_62 = arith.constant dense<0.000000e+00> : vector<16x128xf32>
    %160 = tpu.matmul %157, %159, %cst_62 {dimension_numbers = #tpu.dot_dimension_numbers<[1], [0], [0], [1], [0, 0, 1, 1], [], []>} : vector<16x32xf32>, vector<32x128xf32>, vector<16x128xf32> -> vector<16x128xf32>
    %161 = vector.broadcast %22 : vector<1x128xf32> to vector<16x128xf32>
    %162 = arith.addf %160, %161 : vector<16x128xf32>
    %cst_63 = arith.constant 5.000000e-01 : f32
    %163 = vector.broadcast %cst_63 : f32 to vector<16x128xf32>
    %164 = arith.mulf %163, %162 : vector<16x128xf32>
    %cst_64 = arith.constant 4.471500e-02 : f32
    %165 = vector.broadcast %cst_64 : f32 to vector<16x128xf32>
    %166 = arith.mulf %165, %162 : vector<16x128xf32>
    %167 = arith.mulf %166, %162 : vector<16x128xf32>
    %168 = arith.mulf %167, %162 : vector<16x128xf32>
    %169 = arith.addf %162, %168 : vector<16x128xf32>
    %cst_65 = arith.constant 0.797884583 : f32
    %170 = vector.broadcast %cst_65 : f32 to vector<16x128xf32>
    %171 = arith.mulf %170, %169 : vector<16x128xf32>
    %172 = math.tanh %171 : vector<16x128xf32>
    %cst_66 = arith.constant 1.000000e+00 : f32
    %173 = vector.broadcast %cst_66 : f32 to vector<16x128xf32>
    %174 = arith.addf %173, %172 : vector<16x128xf32>
    %175 = arith.mulf %164, %174 : vector<16x128xf32>
    %c0_67 = arith.constant 0 : index
    %c0_68 = arith.constant 0 : index
    %c0_69 = arith.constant 0 : index
    %176 = vector.load %arg8[%c0_67, %c0_68, %c0_69] : memref<2x128x32xf32, #tpu.memory_space<vmem>>, vector<1x128x32xf32>
    %177 = vector.shape_cast %176 : vector<1x128x32xf32> to vector<128x32xf32>
    %cst_70 = arith.constant dense<0.000000e+00> : vector<16x32xf32>
    %178 = tpu.matmul %175, %177, %cst_70 {dimension_numbers = #tpu.dot_dimension_numbers<[1], [0], [0], [1], [0, 0, 1, 1], [], []>} : vector<16x128xf32>, vector<128x32xf32>, vector<16x32xf32> -> vector<16x32xf32>
    %179 = vector.broadcast %23 : vector<1x32xf32> to vector<16x32xf32>
    %180 = arith.addf %178, %179 : vector<16x32xf32>
    %181 = arith.addf %137, %180 : vector<16x32xf32>
    %c1_71 = arith.constant 1 : index
    %c0_72 = arith.constant 0 : index
    %c0_73 = arith.constant 0 : index
    %182 = vector.load %arg9[%c1_71, %c0_72, %c0_73] : memref<2x4x128xf32, #tpu.memory_space<vmem>>, vector<1x4x128xf32>
    %183 = vector.shape_cast %182 : vector<1x4x128xf32> to vector<4x128xf32>
    %184 = vector.extract_strided_slice %183 {offsets = [0, 0], sizes = [1, 32], strides = [1, 1]} : vector<4x128xf32> to vector<1x32xf32>
    %185 = vector.extract_strided_slice %183 {offsets = [0, 32], sizes = [1, 32], strides = [1, 1]} : vector<4x128xf32> to vector<1x32xf32>
    %186 = vector.extract_strided_slice %183 {offsets = [0, 64], sizes = [1, 32], strides = [1, 1]} : vector<4x128xf32> to vector<1x32xf32>
    %187 = vector.extract_strided_slice %183 {offsets = [0, 96], sizes = [1, 32], strides = [1, 1]} : vector<4x128xf32> to vector<1x32xf32>
    %188 = vector.extract_strided_slice %183 {offsets = [1, 0], sizes = [1, 32], strides = [1, 1]} : vector<4x128xf32> to vector<1x32xf32>
    %189 = vector.extract_strided_slice %183 {offsets = [1, 32], sizes = [1, 32], strides = [1, 1]} : vector<4x128xf32> to vector<1x32xf32>
    %190 = vector.extract_strided_slice %183 {offsets = [1, 64], sizes = [1, 32], strides = [1, 1]} : vector<4x128xf32> to vector<1x32xf32>
    %191 = vector.extract_strided_slice %183 {offsets = [1, 96], sizes = [1, 32], strides = [1, 1]} : vector<4x128xf32> to vector<1x32xf32>
    %192 = vector.extract_strided_slice %183 {offsets = [2, 0], sizes = [1, 128], strides = [1, 1]} : vector<4x128xf32> to vector<1x128xf32>
    %193 = vector.extract_strided_slice %183 {offsets = [3, 0], sizes = [1, 32], strides = [1, 1]} : vector<4x128xf32> to vector<1x32xf32>
    %cst_74 = arith.constant dense<0.000000e+00> : vector<16xf32>
    %194 = vector.multi_reduction <add>, %181, %cst_74 [1] : vector<16x32xf32> to vector<16xf32>
    %195 = vector.shape_cast %194 : vector<16xf32> to vector<16x1xf32>
    %cst_75 = arith.constant 3.200000e+01 : f32
    %196 = vector.broadcast %cst_75 : f32 to vector<16x1xf32>
    %197 = arith.divf %195, %196 : vector<16x1xf32>
    %198 = vector.broadcast %197 : vector<16x1xf32> to vector<16x32xf32>
    %199 = arith.subf %181, %198 : vector<16x32xf32>
    %200 = arith.mulf %199, %199 : vector<16x32xf32>
    %cst_76 = arith.constant dense<0.000000e+00> : vector<16xf32>
    %201 = vector.multi_reduction <add>, %200, %cst_76 [1] : vector<16x32xf32> to vector<16xf32>
    %202 = vector.shape_cast %201 : vector<16xf32> to vector<16x1xf32>
    %cst_77 = arith.constant 3.200000e+01 : f32
    %203 = vector.broadcast %cst_77 : f32 to vector<16x1xf32>
    %204 = arith.divf %202, %203 : vector<16x1xf32>
    %cst_78 = arith.constant 9.99999974E-6 : f32
    %205 = vector.broadcast %cst_78 : f32 to vector<16x1xf32>
    %206 = arith.addf %204, %205 : vector<16x1xf32>
    %207 = math.rsqrt %206 : vector<16x1xf32>
    %208 = vector.broadcast %207 : vector<16x1xf32> to vector<16x32xf32>
    %209 = arith.mulf %199, %208 : vector<16x32xf32>
    %210 = vector.broadcast %184 : vector<1x32xf32> to vector<16x32xf32>
    %211 = arith.mulf %209, %210 : vector<16x32xf32>
    %212 = vector.broadcast %185 : vector<1x32xf32> to vector<16x32xf32>
    %213 = arith.addf %211, %212 : vector<16x32xf32>
    %c1_79 = arith.constant 1 : index
    %c0_80 = arith.constant 0 : index
    %c0_81 = arith.constant 0 : index
    %c0_82 = arith.constant 0 : index
    %214 = vector.load %arg5[%c1_79, %c0_80, %c0_81, %c0_82] : memref<2x3x32x32xf32, #tpu.memory_space<vmem>>, vector<1x1x32x32xf32>
    %215 = vector.shape_cast %214 : vector<1x1x32x32xf32> to vector<32x32xf32>
    %cst_83 = arith.constant dense<0.000000e+00> : vector<16x32xf32>
    %216 = tpu.matmul %213, %215, %cst_83 {dimension_numbers = #tpu.dot_dimension_numbers<[1], [0], [0], [1], [0, 0, 1, 1], [], []>} : vector<16x32xf32>, vector<32x32xf32>, vector<16x32xf32> -> vector<16x32xf32>
    %217 = vector.broadcast %188 : vector<1x32xf32> to vector<16x32xf32>
    %218 = arith.addf %216, %217 : vector<16x32xf32>
    %c1_84 = arith.constant 1 : index
    %c1_85 = arith.constant 1 : index
    %c0_86 = arith.constant 0 : index
    %c0_87 = arith.constant 0 : index
    %219 = vector.load %arg5[%c1_84, %c1_85, %c0_86, %c0_87] : memref<2x3x32x32xf32, #tpu.memory_space<vmem>>, vector<1x1x32x32xf32>
    %220 = vector.shape_cast %219 : vector<1x1x32x32xf32> to vector<32x32xf32>
    %cst_88 = arith.constant dense<0.000000e+00> : vector<16x32xf32>
    %221 = tpu.matmul %213, %220, %cst_88 {dimension_numbers = #tpu.dot_dimension_numbers<[1], [0], [0], [1], [0, 0, 1, 1], [], []>} : vector<16x32xf32>, vector<32x32xf32>, vector<16x32xf32> -> vector<16x32xf32>
    %222 = vector.broadcast %189 : vector<1x32xf32> to vector<16x32xf32>
    %223 = arith.addf %221, %222 : vector<16x32xf32>
    %c1_89 = arith.constant 1 : index
    %c2_90 = arith.constant 2 : index
    %c0_91 = arith.constant 0 : index
    %c0_92 = arith.constant 0 : index
    %224 = vector.load %arg5[%c1_89, %c2_90, %c0_91, %c0_92] : memref<2x3x32x32xf32, #tpu.memory_space<vmem>>, vector<1x1x32x32xf32>
    %225 = vector.shape_cast %224 : vector<1x1x32x32xf32> to vector<32x32xf32>
    %cst_93 = arith.constant dense<0.000000e+00> : vector<16x32xf32>
    %226 = tpu.matmul %213, %225, %cst_93 {dimension_numbers = #tpu.dot_dimension_numbers<[1], [0], [0], [1], [0, 0, 1, 1], [], []>} : vector<16x32xf32>, vector<32x32xf32>, vector<16x32xf32> -> vector<16x32xf32>
    %227 = vector.broadcast %190 : vector<1x32xf32> to vector<16x32xf32>
    %228 = arith.addf %226, %227 : vector<16x32xf32>
    %229 = vector.extract_strided_slice %218 {offsets = [0, 0], sizes = [16, 8], strides = [1, 1]} : vector<16x32xf32> to vector<16x8xf32>
    %230 = vector.extract_strided_slice %223 {offsets = [0, 0], sizes = [16, 8], strides = [1, 1]} : vector<16x32xf32> to vector<16x8xf32>
    %231 = vector.extract_strided_slice %228 {offsets = [0, 0], sizes = [16, 8], strides = [1, 1]} : vector<16x32xf32> to vector<16x8xf32>
    %cst_94 = arith.constant dense<0.000000e+00> : vector<16x16xf32>
    %232 = tpu.matmul %229, %230, %cst_94 {dimension_numbers = #tpu.dot_dimension_numbers<[1], [1], [0], [0], [0, 0, 1, 0], [], []>} : vector<16x8xf32>, vector<16x8xf32>, vector<16x16xf32> -> vector<16x16xf32>
    %cst_95 = arith.constant 0.353553385 : f32
    %233 = vector.broadcast %cst_95 : f32 to vector<16x16xf32>
    %234 = arith.mulf %232, %233 : vector<16x16xf32>
    %235 = arith.addf %234, %11 : vector<16x16xf32>
    %cst_96 = arith.constant dense<0xFF800000> : vector<16xf32>
    %236 = vector.multi_reduction <maximumf>, %235, %cst_96 [1] : vector<16x16xf32> to vector<16xf32>
    %237 = vector.shape_cast %236 : vector<16xf32> to vector<16x1xf32>
    %238 = vector.broadcast %237 : vector<16x1xf32> to vector<16x16xf32>
    %239 = arith.subf %235, %238 : vector<16x16xf32>
    %240 = math.exp %239 : vector<16x16xf32>
    %cst_97 = arith.constant dense<0.000000e+00> : vector<16xf32>
    %241 = vector.multi_reduction <add>, %240, %cst_97 [1] : vector<16x16xf32> to vector<16xf32>
    %242 = vector.shape_cast %241 : vector<16xf32> to vector<16x1xf32>
    %243 = tpu.reciprocal %242 {approx = true} : vector<16x1xf32> -> vector<16x1xf32>
    %244 = vector.broadcast %243 : vector<16x1xf32> to vector<16x16xf32>
    %245 = arith.mulf %240, %244 : vector<16x16xf32>
    %cst_98 = arith.constant dense<0.000000e+00> : vector<16x8xf32>
    %246 = tpu.matmul %245, %231, %cst_98 {dimension_numbers = #tpu.dot_dimension_numbers<[1], [0], [0], [1], [0, 0, 1, 1], [], []>} : vector<16x16xf32>, vector<16x8xf32>, vector<16x8xf32> -> vector<16x8xf32>
    %247 = vector.extract_strided_slice %218 {offsets = [0, 8], sizes = [16, 8], strides = [1, 1]} : vector<16x32xf32> to vector<16x8xf32>
    %248 = vector.extract_strided_slice %223 {offsets = [0, 8], sizes = [16, 8], strides = [1, 1]} : vector<16x32xf32> to vector<16x8xf32>
    %249 = vector.extract_strided_slice %228 {offsets = [0, 8], sizes = [16, 8], strides = [1, 1]} : vector<16x32xf32> to vector<16x8xf32>
    %cst_99 = arith.constant dense<0.000000e+00> : vector<16x16xf32>
    %250 = tpu.matmul %247, %248, %cst_99 {dimension_numbers = #tpu.dot_dimension_numbers<[1], [1], [0], [0], [0, 0, 1, 0], [], []>} : vector<16x8xf32>, vector<16x8xf32>, vector<16x16xf32> -> vector<16x16xf32>
    %cst_100 = arith.constant 0.353553385 : f32
    %251 = vector.broadcast %cst_100 : f32 to vector<16x16xf32>
    %252 = arith.mulf %250, %251 : vector<16x16xf32>
    %253 = arith.addf %252, %11 : vector<16x16xf32>
    %cst_101 = arith.constant dense<0xFF800000> : vector<16xf32>
    %254 = vector.multi_reduction <maximumf>, %253, %cst_101 [1] : vector<16x16xf32> to vector<16xf32>
    %255 = vector.shape_cast %254 : vector<16xf32> to vector<16x1xf32>
    %256 = vector.broadcast %255 : vector<16x1xf32> to vector<16x16xf32>
    %257 = arith.subf %253, %256 : vector<16x16xf32>
    %258 = math.exp %257 : vector<16x16xf32>
    %cst_102 = arith.constant dense<0.000000e+00> : vector<16xf32>
    %259 = vector.multi_reduction <add>, %258, %cst_102 [1] : vector<16x16xf32> to vector<16xf32>
    %260 = vector.shape_cast %259 : vector<16xf32> to vector<16x1xf32>
    %261 = tpu.reciprocal %260 {approx = true} : vector<16x1xf32> -> vector<16x1xf32>
    %262 = vector.broadcast %261 : vector<16x1xf32> to vector<16x16xf32>
    %263 = arith.mulf %258, %262 : vector<16x16xf32>
    %cst_103 = arith.constant dense<0.000000e+00> : vector<16x8xf32>
    %264 = tpu.matmul %263, %249, %cst_103 {dimension_numbers = #tpu.dot_dimension_numbers<[1], [0], [0], [1], [0, 0, 1, 1], [], []>} : vector<16x16xf32>, vector<16x8xf32>, vector<16x8xf32> -> vector<16x8xf32>
    %265 = vector.extract_strided_slice %218 {offsets = [0, 16], sizes = [16, 8], strides = [1, 1]} : vector<16x32xf32> to vector<16x8xf32>
    %266 = vector.extract_strided_slice %223 {offsets = [0, 16], sizes = [16, 8], strides = [1, 1]} : vector<16x32xf32> to vector<16x8xf32>
    %267 = vector.extract_strided_slice %228 {offsets = [0, 16], sizes = [16, 8], strides = [1, 1]} : vector<16x32xf32> to vector<16x8xf32>
    %cst_104 = arith.constant dense<0.000000e+00> : vector<16x16xf32>
    %268 = tpu.matmul %265, %266, %cst_104 {dimension_numbers = #tpu.dot_dimension_numbers<[1], [1], [0], [0], [0, 0, 1, 0], [], []>} : vector<16x8xf32>, vector<16x8xf32>, vector<16x16xf32> -> vector<16x16xf32>
    %cst_105 = arith.constant 0.353553385 : f32
    %269 = vector.broadcast %cst_105 : f32 to vector<16x16xf32>
    %270 = arith.mulf %268, %269 : vector<16x16xf32>
    %271 = arith.addf %270, %11 : vector<16x16xf32>
    %cst_106 = arith.constant dense<0xFF800000> : vector<16xf32>
    %272 = vector.multi_reduction <maximumf>, %271, %cst_106 [1] : vector<16x16xf32> to vector<16xf32>
    %273 = vector.shape_cast %272 : vector<16xf32> to vector<16x1xf32>
    %274 = vector.broadcast %273 : vector<16x1xf32> to vector<16x16xf32>
    %275 = arith.subf %271, %274 : vector<16x16xf32>
    %276 = math.exp %275 : vector<16x16xf32>
    %cst_107 = arith.constant dense<0.000000e+00> : vector<16xf32>
    %277 = vector.multi_reduction <add>, %276, %cst_107 [1] : vector<16x16xf32> to vector<16xf32>
    %278 = vector.shape_cast %277 : vector<16xf32> to vector<16x1xf32>
    %279 = tpu.reciprocal %278 {approx = true} : vector<16x1xf32> -> vector<16x1xf32>
    %280 = vector.broadcast %279 : vector<16x1xf32> to vector<16x16xf32>
    %281 = arith.mulf %276, %280 : vector<16x16xf32>
    %cst_108 = arith.constant dense<0.000000e+00> : vector<16x8xf32>
    %282 = tpu.matmul %281, %267, %cst_108 {dimension_numbers = #tpu.dot_dimension_numbers<[1], [0], [0], [1], [0, 0, 1, 1], [], []>} : vector<16x16xf32>, vector<16x8xf32>, vector<16x8xf32> -> vector<16x8xf32>
    %283 = vector.extract_strided_slice %218 {offsets = [0, 24], sizes = [16, 8], strides = [1, 1]} : vector<16x32xf32> to vector<16x8xf32>
    %284 = vector.extract_strided_slice %223 {offsets = [0, 24], sizes = [16, 8], strides = [1, 1]} : vector<16x32xf32> to vector<16x8xf32>
    %285 = vector.extract_strided_slice %228 {offsets = [0, 24], sizes = [16, 8], strides = [1, 1]} : vector<16x32xf32> to vector<16x8xf32>
    %cst_109 = arith.constant dense<0.000000e+00> : vector<16x16xf32>
    %286 = tpu.matmul %283, %284, %cst_109 {dimension_numbers = #tpu.dot_dimension_numbers<[1], [1], [0], [0], [0, 0, 1, 0], [], []>} : vector<16x8xf32>, vector<16x8xf32>, vector<16x16xf32> -> vector<16x16xf32>
    %cst_110 = arith.constant 0.353553385 : f32
    %287 = vector.broadcast %cst_110 : f32 to vector<16x16xf32>
    %288 = arith.mulf %286, %287 : vector<16x16xf32>
    %289 = arith.addf %288, %11 : vector<16x16xf32>
    %cst_111 = arith.constant dense<0xFF800000> : vector<16xf32>
    %290 = vector.multi_reduction <maximumf>, %289, %cst_111 [1] : vector<16x16xf32> to vector<16xf32>
    %291 = vector.shape_cast %290 : vector<16xf32> to vector<16x1xf32>
    %292 = vector.broadcast %291 : vector<16x1xf32> to vector<16x16xf32>
    %293 = arith.subf %289, %292 : vector<16x16xf32>
    %294 = math.exp %293 : vector<16x16xf32>
    %cst_112 = arith.constant dense<0.000000e+00> : vector<16xf32>
    %295 = vector.multi_reduction <add>, %294, %cst_112 [1] : vector<16x16xf32> to vector<16xf32>
    %296 = vector.shape_cast %295 : vector<16xf32> to vector<16x1xf32>
    %297 = tpu.reciprocal %296 {approx = true} : vector<16x1xf32> -> vector<16x1xf32>
    %298 = vector.broadcast %297 : vector<16x1xf32> to vector<16x16xf32>
    %299 = arith.mulf %294, %298 : vector<16x16xf32>
    %cst_113 = arith.constant dense<0.000000e+00> : vector<16x8xf32>
    %300 = tpu.matmul %299, %285, %cst_113 {dimension_numbers = #tpu.dot_dimension_numbers<[1], [0], [0], [1], [0, 0, 1, 1], [], []>} : vector<16x16xf32>, vector<16x8xf32>, vector<16x8xf32> -> vector<16x8xf32>
    %301 = tpu.concatenate %246, %264, %282, %300 in 1 : vector<16x8xf32>, vector<16x8xf32>, vector<16x8xf32>, vector<16x8xf32> -> vector<16x32xf32>
    %c1_114 = arith.constant 1 : index
    %c0_115 = arith.constant 0 : index
    %c0_116 = arith.constant 0 : index
    %302 = vector.load %arg6[%c1_114, %c0_115, %c0_116] : memref<2x32x32xf32, #tpu.memory_space<vmem>>, vector<1x32x32xf32>
    %303 = vector.shape_cast %302 : vector<1x32x32xf32> to vector<32x32xf32>
    %cst_117 = arith.constant dense<0.000000e+00> : vector<16x32xf32>
    %304 = tpu.matmul %301, %303, %cst_117 {dimension_numbers = #tpu.dot_dimension_numbers<[1], [0], [0], [1], [0, 0, 1, 1], [], []>} : vector<16x32xf32>, vector<32x32xf32>, vector<16x32xf32> -> vector<16x32xf32>
    %305 = vector.broadcast %191 : vector<1x32xf32> to vector<16x32xf32>
    %306 = arith.addf %304, %305 : vector<16x32xf32>
    %307 = arith.addf %181, %306 : vector<16x32xf32>
    %cst_118 = arith.constant dense<0.000000e+00> : vector<16xf32>
    %308 = vector.multi_reduction <add>, %307, %cst_118 [1] : vector<16x32xf32> to vector<16xf32>
    %309 = vector.shape_cast %308 : vector<16xf32> to vector<16x1xf32>
    %cst_119 = arith.constant 3.200000e+01 : f32
    %310 = vector.broadcast %cst_119 : f32 to vector<16x1xf32>
    %311 = arith.divf %309, %310 : vector<16x1xf32>
    %312 = vector.broadcast %311 : vector<16x1xf32> to vector<16x32xf32>
    %313 = arith.subf %307, %312 : vector<16x32xf32>
    %314 = arith.mulf %313, %313 : vector<16x32xf32>
    %cst_120 = arith.constant dense<0.000000e+00> : vector<16xf32>
    %315 = vector.multi_reduction <add>, %314, %cst_120 [1] : vector<16x32xf32> to vector<16xf32>
    %316 = vector.shape_cast %315 : vector<16xf32> to vector<16x1xf32>
    %cst_121 = arith.constant 3.200000e+01 : f32
    %317 = vector.broadcast %cst_121 : f32 to vector<16x1xf32>
    %318 = arith.divf %316, %317 : vector<16x1xf32>
    %cst_122 = arith.constant 9.99999974E-6 : f32
    %319 = vector.broadcast %cst_122 : f32 to vector<16x1xf32>
    %320 = arith.addf %318, %319 : vector<16x1xf32>
    %321 = math.rsqrt %320 : vector<16x1xf32>
    %322 = vector.broadcast %321 : vector<16x1xf32> to vector<16x32xf32>
    %323 = arith.mulf %313, %322 : vector<16x32xf32>
    %324 = vector.broadcast %186 : vector<1x32xf32> to vector<16x32xf32>
    %325 = arith.mulf %323, %324 : vector<16x32xf32>
    %326 = vector.broadcast %187 : vector<1x32xf32> to vector<16x32xf32>
    %327 = arith.addf %325, %326 : vector<16x32xf32>
    %c1_123 = arith.constant 1 : index
    %c0_124 = arith.constant 0 : index
    %c0_125 = arith.constant 0 : index
    %328 = vector.load %arg7[%c1_123, %c0_124, %c0_125] : memref<2x32x128xf32, #tpu.memory_space<vmem>>, vector<1x32x128xf32>
    %329 = vector.shape_cast %328 : vector<1x32x128xf32> to vector<32x128xf32>
    %cst_126 = arith.constant dense<0.000000e+00> : vector<16x128xf32>
    %330 = tpu.matmul %327, %329, %cst_126 {dimension_numbers = #tpu.dot_dimension_numbers<[1], [0], [0], [1], [0, 0, 1, 1], [], []>} : vector<16x32xf32>, vector<32x128xf32>, vector<16x128xf32> -> vector<16x128xf32>
    %331 = vector.broadcast %192 : vector<1x128xf32> to vector<16x128xf32>
    %332 = arith.addf %330, %331 : vector<16x128xf32>
    %cst_127 = arith.constant 5.000000e-01 : f32
    %333 = vector.broadcast %cst_127 : f32 to vector<16x128xf32>
    %334 = arith.mulf %333, %332 : vector<16x128xf32>
    %cst_128 = arith.constant 4.471500e-02 : f32
    %335 = vector.broadcast %cst_128 : f32 to vector<16x128xf32>
    %336 = arith.mulf %335, %332 : vector<16x128xf32>
    %337 = arith.mulf %336, %332 : vector<16x128xf32>
    %338 = arith.mulf %337, %332 : vector<16x128xf32>
    %339 = arith.addf %332, %338 : vector<16x128xf32>
    %cst_129 = arith.constant 0.797884583 : f32
    %340 = vector.broadcast %cst_129 : f32 to vector<16x128xf32>
    %341 = arith.mulf %340, %339 : vector<16x128xf32>
    %342 = math.tanh %341 : vector<16x128xf32>
    %cst_130 = arith.constant 1.000000e+00 : f32
    %343 = vector.broadcast %cst_130 : f32 to vector<16x128xf32>
    %344 = arith.addf %343, %342 : vector<16x128xf32>
    %345 = arith.mulf %334, %344 : vector<16x128xf32>
    %c1_131 = arith.constant 1 : index
    %c0_132 = arith.constant 0 : index
    %c0_133 = arith.constant 0 : index
    %346 = vector.load %arg8[%c1_131, %c0_132, %c0_133] : memref<2x128x32xf32, #tpu.memory_space<vmem>>, vector<1x128x32xf32>
    %347 = vector.shape_cast %346 : vector<1x128x32xf32> to vector<128x32xf32>
    %cst_134 = arith.constant dense<0.000000e+00> : vector<16x32xf32>
    %348 = tpu.matmul %345, %347, %cst_134 {dimension_numbers = #tpu.dot_dimension_numbers<[1], [0], [0], [1], [0, 0, 1, 1], [], []>} : vector<16x128xf32>, vector<128x32xf32>, vector<16x32xf32> -> vector<16x32xf32>
    %349 = vector.broadcast %193 : vector<1x32xf32> to vector<16x32xf32>
    %350 = arith.addf %348, %349 : vector<16x32xf32>
    %351 = arith.addf %307, %350 : vector<16x32xf32>
    %c0_135 = arith.constant 0 : index
    %c0_136 = arith.constant 0 : index
    %c0_137 = arith.constant 0 : index
    %352 = vector.load %arg9[%c0_135, %c0_136, %c0_137] : memref<2x4x128xf32, #tpu.memory_space<vmem>>, vector<1x4x128xf32>
    %353 = vector.shape_cast %352 : vector<1x4x128xf32> to vector<4x128xf32>
    %354 = vector.extract_strided_slice %353 {offsets = [3, 32], sizes = [1, 32], strides = [1, 1]} : vector<4x128xf32> to vector<1x32xf32>
    %355 = vector.extract_strided_slice %353 {offsets = [3, 64], sizes = [1, 32], strides = [1, 1]} : vector<4x128xf32> to vector<1x32xf32>
    %cst_138 = arith.constant dense<0.000000e+00> : vector<16xf32>
    %356 = vector.multi_reduction <add>, %351, %cst_138 [1] : vector<16x32xf32> to vector<16xf32>
    %357 = vector.shape_cast %356 : vector<16xf32> to vector<16x1xf32>
    %cst_139 = arith.constant 3.200000e+01 : f32
    %358 = vector.broadcast %cst_139 : f32 to vector<16x1xf32>
    %359 = arith.divf %357, %358 : vector<16x1xf32>
    %360 = vector.broadcast %359 : vector<16x1xf32> to vector<16x32xf32>
    %361 = arith.subf %351, %360 : vector<16x32xf32>
    %362 = arith.mulf %361, %361 : vector<16x32xf32>
    %cst_140 = arith.constant dense<0.000000e+00> : vector<16xf32>
    %363 = vector.multi_reduction <add>, %362, %cst_140 [1] : vector<16x32xf32> to vector<16xf32>
    %364 = vector.shape_cast %363 : vector<16xf32> to vector<16x1xf32>
    %cst_141 = arith.constant 3.200000e+01 : f32
    %365 = vector.broadcast %cst_141 : f32 to vector<16x1xf32>
    %366 = arith.divf %364, %365 : vector<16x1xf32>
    %cst_142 = arith.constant 9.99999974E-6 : f32
    %367 = vector.broadcast %cst_142 : f32 to vector<16x1xf32>
    %368 = arith.addf %366, %367 : vector<16x1xf32>
    %369 = math.rsqrt %368 : vector<16x1xf32>
    %370 = vector.broadcast %369 : vector<16x1xf32> to vector<16x32xf32>
    %371 = arith.mulf %361, %370 : vector<16x32xf32>
    %372 = vector.broadcast %354 : vector<1x32xf32> to vector<16x32xf32>
    %373 = arith.mulf %371, %372 : vector<16x32xf32>
    %374 = vector.broadcast %355 : vector<1x32xf32> to vector<16x32xf32>
    %375 = arith.addf %373, %374 : vector<16x32xf32>
    %cst_143 = arith.constant dense<0.000000e+00> : vector<16x128xf32>
    %376 = tpu.matmul %375, %0, %cst_143 {dimension_numbers = #tpu.dot_dimension_numbers<[1], [1], [0], [0], [0, 0, 1, 0], [], []>} : vector<16x32xf32>, vector<128x32xf32>, vector<16x128xf32> -> vector<16x128xf32>
    %c0_144 = arith.constant 0 : index
    %c0_145 = arith.constant 0 : index
    %377 = vector.load %arg10[%c0_144, %c0_145] : memref<16x128xf32, #tpu.memory_space<vmem>>, vector<16x128xf32>
    tpu.vector_store %arg10[%c0_144, %c0_145], %376 {strides = array<i32>} : memref<16x128xf32, #tpu.memory_space<vmem>>, vector<16x128xf32>,
    return
  }
  func.func @transform_0(%arg0: i32) -> (i32, i32) {
    %c0_i32 = arith.constant 0 : i32
    %c0_i32_0 = arith.constant 0 : i32
    %c0_i32_1 = arith.constant 0 : i32
    return %c0_i32, %c0_i32_0 : i32, i32
  }
  func.func @transform_1(%arg0: i32) -> (i32, i32) {
    %c0_i32 = arith.constant 0 : i32
    %c0_i32_0 = arith.constant 0 : i32
    %c0_i32_1 = arith.constant 0 : i32
    return %c0_i32, %c0_i32_0 : i32, i32
  }
  func.func @transform_2(%arg0: i32) -> (i32, i32) {
    %c0_i32 = arith.constant 0 : i32
    %c0_i32_0 = arith.constant 0 : i32
    %c0_i32_1 = arith.constant 0 : i32
    return %c0_i32, %c0_i32_0 : i32, i32
  }
  func.func @transform_3(%arg0: i32) -> (i32, i32) {
    %c0_i32 = arith.constant 0 : i32
    %c0_i32_0 = arith.constant 0 : i32
    %c0_i32_1 = arith.constant 0 : i32
    return %c0_i32, %c0_i32_0 : i32, i32
  }
  func.func @transform_4(%arg0: i32) -> (i32, i32, i32, i32) {
    %c0_i32 = arith.constant 0 : i32
    %c0_i32_0 = arith.constant 0 : i32
    %c0_i32_1 = arith.constant 0 : i32
    %c0_i32_2 = arith.constant 0 : i32
    %c0_i32_3 = arith.constant 0 : i32
    return %c0_i32, %c0_i32_0, %c0_i32_1, %c0_i32_2 : i32, i32, i32, i32
  }
  func.func @transform_5(%arg0: i32) -> (i32, i32, i32) {
    %c0_i32 = arith.constant 0 : i32
    %c0_i32_0 = arith.constant 0 : i32
    %c0_i32_1 = arith.constant 0 : i32
    %c0_i32_2 = arith.constant 0 : i32
    return %c0_i32, %c0_i32_0, %c0_i32_1 : i32, i32, i32
  }
  func.func @transform_6(%arg0: i32) -> (i32, i32, i32) {
    %c0_i32 = arith.constant 0 : i32
    %c0_i32_0 = arith.constant 0 : i32
    %c0_i32_1 = arith.constant 0 : i32
    %c0_i32_2 = arith.constant 0 : i32
    return %c0_i32, %c0_i32_0, %c0_i32_1 : i32, i32, i32
  }
  func.func @transform_7(%arg0: i32) -> (i32, i32, i32) {
    %c0_i32 = arith.constant 0 : i32
    %c0_i32_0 = arith.constant 0 : i32
    %c0_i32_1 = arith.constant 0 : i32
    %c0_i32_2 = arith.constant 0 : i32
    return %c0_i32, %c0_i32_0, %c0_i32_1 : i32, i32, i32
  }
  func.func @transform_8(%arg0: i32) -> (i32, i32, i32) {
    %c0_i32 = arith.constant 0 : i32
    %c0_i32_0 = arith.constant 0 : i32
    %c0_i32_1 = arith.constant 0 : i32
    %c0_i32_2 = arith.constant 0 : i32
    return %c0_i32, %c0_i32_0, %c0_i32_1 : i32, i32, i32
  }
  func.func @transform_9(%arg0: i32) -> (i32, i32) {
    %c0_i32 = arith.constant 0 : i32
    %c0_i32_0 = arith.constant 0 : i32
    %c0_i32_1 = arith.constant 0 : i32
    return %c0_i32, %c0_i32_0 : i32, i32
  }
}

</mosaic_0001>

<llo_original>
// kernel: text_decoder_forward.1
$region0: #{text_decoder_forward.1}
  #allocation0 [shape = 'u32[]', space=smem, size = 0x4, offset = 0x4, fixed_abs, tag = 'smem constant byte address 0x4 - core index']
  #allocation1 [shape = 'u32[144,128]{1,0:T(1,128)}', space=vmem, size = 0x12000, scoped, tag = 'internal scratch']
  %s0 = inlined_call_operand.vmem [shape: s32[16,1], index: 0, kind: input, shape index: {}]
  %s1 = inlined_call_operand.vmem [shape: f32[16,16], index: 1, kind: input, shape index: {}]
  %s2 = inlined_call_operand.vmem [shape: f32[16,32], index: 2, kind: input, shape index: {}]
  %s3 = inlined_call_operand.vmem [shape: f32[128,32], index: 3, kind: input, shape index: {}]
  %s4 = inlined_call_operand.vmem [shape: f32[2,3,32,32], index: 4, kind: input, shape index: {}]
  %s5 = inlined_call_operand.vmem [shape: f32[2,32,32], index: 5, kind: input, shape index: {}]
  %s6 = inlined_call_operand.vmem [shape: f32[2,32,128], index: 6, kind: input, shape index: {}]
  %s7 = inlined_call_operand.vmem [shape: f32[2,128,32], index: 7, kind: input, shape index: {}]
  %s8 = inlined_call_operand.vmem [shape: f32[2,4,128], index: 8, kind: input, shape index: {}]
  %s9 = inlined_call_operand.vmem [shape: f32[16,128], index: 9, kind: output, shape index: {}]
  %s10 = sld [smem:[#allocation0]]
  $region46: #{text_decoder_forward.1} parent=0
    _
  %s12 = ssub.s32 1, %s10
  %s13 = scalar_select 0, %s12, %s10
  // Predicated region
  $region2: #{text_decoder_forward.1} parent=0 // pred_check
    _
  $region3: #{text_decoder_forward.1} parent=0 // pred_check_branch
    %15 = sbr.rel (0) target = $region5
  $region4: #{text_decoder_forward.1} parent=0 // pred_region
    _
  $region5: #{text_decoder_forward.1} parent=0 // pred_fallthru
    _
  // Predicated region
  $region6: #{text_decoder_forward.1} parent=0 // pred_check
    _
  $region7: #{text_decoder_forward.1} parent=0 // pred_check_branch
    %17 = sbr.rel (0) target = $region9
  $region8: #{text_decoder_forward.1} parent=0 // pred_region
    _
  $region9: #{text_decoder_forward.1} parent=0 // pred_fallthru
    _
  // Predicated region
  $region10: #{text_decoder_forward.1} parent=0 // pred_check
    _
  $region11: #{text_decoder_forward.1} parent=0 // pred_check_branch
    %19 = sbr.rel (0) target = $region13
  $region12: #{text_decoder_forward.1} parent=0 // pred_region
    _
  $region13: #{text_decoder_forward.1} parent=0 // pred_fallthru
    _
  // Predicated region
  $region14: #{text_decoder_forward.1} parent=0 // pred_check
    _
  $region15: #{text_decoder_forward.1} parent=0 // pred_check_branch
    %21 = sbr.rel (0) target = $region17
  $region16: #{text_decoder_forward.1} parent=0 // pred_region
    _
  $region17: #{text_decoder_forward.1} parent=0 // pred_fallthru
    _
  // Predicated region
  $region18: #{text_decoder_forward.1} parent=0 // pred_check
    _
  $region19: #{text_decoder_forward.1} parent=0 // pred_check_branch
    %23 = sbr.rel (0) target = $region21
  $region20: #{text_decoder_forward.1} parent=0 // pred_region
    _
  $region21: #{text_decoder_forward.1} parent=0 // pred_fallthru
    _
  // Predicated region
  $region22: #{text_decoder_forward.1} parent=0 // pred_check
    _
  $region23: #{text_decoder_forward.1} parent=0 // pred_check_branch
    %25 = sbr.rel (0) target = $region25
  $region24: #{text_decoder_forward.1} parent=0 // pred_region
    _
  $region25: #{text_decoder_forward.1} parent=0 // pred_fallthru
    _
  // Predicated region
  $region26: #{text_decoder_forward.1} parent=0 // pred_check
    _
  $region27: #{text_decoder_forward.1} parent=0 // pred_check_branch
    %27 = sbr.rel (0) target = $region29
  $region28: #{text_decoder_forward.1} parent=0 // pred_region
    _
  $region29: #{text_decoder_forward.1} parent=0 // pred_fallthru
    _
  // Predicated region
  $region30: #{text_decoder_forward.1} parent=0 // pred_check
    _
  $region31: #{text_decoder_forward.1} parent=0 // pred_check_branch
    %29 = sbr.rel (0) target = $region33
  $region32: #{text_decoder_forward.1} parent=0 // pred_region
    _
  $region33: #{text_decoder_forward.1} parent=0 // pred_fallthru
    _
  // Predicated region
  $region34: #{text_decoder_forward.1} parent=0 // pred_check
    _
  $region35: #{text_decoder_forward.1} parent=0 // pred_check_branch
    %31 = sbr.rel (0) target = $region37
  $region36: #{text_decoder_forward.1} parent=0 // pred_region
    _
  $region37: #{text_decoder_forward.1} parent=0 // pred_fallthru
    _
  %v32 = vld [vmem:[%s3] sm:$0xff]
  %v33 = vld [vmem:[%s3 + $0x8] sm:$0xff]
  %v34 = vld [vmem:[%s3 + $0x10] sm:$0xff]
  %v35 = vld [vmem:[%s3 + $0x18] sm:$0xff]
  %v36 = vld [vmem:[%s3 + $0x20] sm:$0xff]
  %v37 = vld [vmem:[%s3 + $0x28] sm:$0xff]
  %v38 = vld [vmem:[%s3 + $0x30] sm:$0xff]
  %v39 = vld [vmem:[%s3 + $0x38] sm:$0xff]
  %v40 = vld [vmem:[%s3 + $0x40] sm:$0xff]
  %v41 = vld [vmem:[%s3 + $0x48] sm:$0xff]
  %v42 = vld [vmem:[%s3 + $0x50] sm:$0xff]
  %v43 = vld [vmem:[%s3 + $0x58] sm:$0xff]
  %v44 = vld [vmem:[%s3 + $0x60] sm:$0xff]
  %v45 = vld [vmem:[%s3 + $0x68] sm:$0xff]
  %v46 = vld [vmem:[%s3 + $0x70] sm:$0xff]
  %v47 = vld [vmem:[%s3 + $0x78] sm:$0xff]
  %v48 = vld [vmem:[%s0] sm:$0xff]
  %v49 = vld [vmem:[%s0 + $0x8] sm:$0xff]
  %v50 = vlaneseq
  %v51 = vand.u32 %v50, 127
  %52 = vset.pattern.permute.xlu0 0
  %53 = vperm.xlu0 %52, %v48
  %v54 = vpop.permute.xlu0 %53
  %55 = vset.pattern.permute.xlu0 0
  %56 = vperm.xlu0 %55, %v49
  %v57 = vpop.permute.xlu0 %56
  %vm58 = vcmp.eq.s32.totalorder %v51, %v54
  %vm59 = vcmp.eq.s32.totalorder %v51, %v57
  %v60 = vsel %vm58, 1.0, 0.0
  %v61 = vsel %vm59, 1.0, 0.0
  %v62 = vld [vmem:[%s2] sm:$0xff]
  %v63 = vld [vmem:[%s2 + $0x8] sm:$0xff]
  %64 = vmatprep.subr.mxu0 0.0
  %65 = vmatpush1.msra.mxu0 %v32
  %66 = vmatprep.subr.mxu0 0.0
  %67 = vmatpush1.msra.mxu0 %v33
  %68 = vmatprep.subr.mxu0 0.0
  %69 = vmatpush1.msra.mxu0 %v34
  %70 = vmatprep.subr.mxu0 0.0
  %71 = vmatpush1.msra.mxu0 %v35
  %72 = vmatprep.subr.mxu0 0.0
  %73 = vmatpush1.msra.mxu0 %v36
  %74 = vmatprep.subr.mxu0 0.0
  %75 = vmatpush1.msra.mxu0 %v37
  %76 = vmatprep.subr.mxu0 0.0
  %77 = vmatpush1.msra.mxu0 %v38
  %78 = vmatprep.subr.mxu0 0.0
  %79 = vmatpush1.msra.mxu0 %v39
  %80 = vmatprep.subr.mxu0 0.0
  %81 = vmatpush1.msra.mxu0 %v40
  %82 = vmatprep.subr.mxu0 0.0
  %83 = vmatpush1.msra.mxu0 %v41
  %84 = vmatprep.subr.mxu0 0.0
  %85 = vmatpush1.msra.mxu0 %v42
  %86 = vmatprep.subr.mxu0 0.0
  %87 = vmatpush1.msra.mxu0 %v43
  %88 = vmatprep.subr.mxu0 0.0
  %89 = vmatpush1.msra.mxu0 %v44
  %90 = vmatprep.subr.mxu0 0.0
  %91 = vmatpush1.msra.mxu0 %v45
  %92 = vmatprep.subr.mxu0 0.0
  %93 = vmatpush1.msra.mxu0 %v46
  %94 = vmatprep.subr.mxu0 0.0
  %95 = vmatpush1.msra.mxu0 %v47
  %96 = vmatprep.subr.mxu0 0.0
  %97 = vmatpush1.msra.mxu0 0.0
  %98 = vmatprep.subr.mxu0 0.0
  %99 = vmatpush1.msra.mxu0 0.0
  %100 = vmatprep.subr.mxu0 0.0
  %101 = vmatpush1.msra.mxu0 0.0
  %102 = vmatprep.subr.mxu0 0.0
  %103 = vmatpush1.msra.mxu0 0.0
  %104 = vmatprep.subr.mxu0 0.0
  %105 = vmatpush1.msra.mxu0 0.0
  %106 = vmatprep.subr.mxu0 0.0
  %107 = vmatpush1.msra.mxu0 0.0
  %108 = vmatprep.subr.mxu0 0.0
  %109 = vmatpush1.msra.mxu0 0.0
  %110 = vmatprep.subr.mxu0 0.0
  %111 = vmatpush1.msra.mxu0 0.0
  %112 = vmatprep.subr.mxu0 0.0
  %113 = vmatpush1.msra.mxu0 0.0
  %114 = vmatprep.subr.mxu0 0.0
  %115 = vmatpush1.msra.mxu0 0.0
  %116 = vmatprep.subr.mxu0 0.0
  %117 = vmatpush1.msra.mxu0 0.0
  %118 = vmatprep.subr.mxu0 0.0
  %119 = vmatpush1.msra.mxu0 0.0
  %120 = vmatprep.subr.mxu0 0.0
  %121 = vmatpush1.msra.mxu0 0.0
  %122 = vmatprep.subr.mxu0 0.0
  %123 = vmatpush1.msra.mxu0 0.0
  %124 = vmatprep.subr.mxu0 0.0
  %125 = vmatpush1.msra.mxu0 0.0
  %126 = vmatprep.subr.mxu0 0.0
  %127 = vmatpush1.msra.mxu0 0.0
  %128 = vmatprep.mubr.f32.mxu0 0.0
  %129 = vmatmul.mubr.f32.gmra.mrb[0].mxu0 %v60
  %v130 = vpop.f32.mrb[0].mxu0
  %v131 = vadd.f32 %v62, %v130
  %v132 = vpop.f32.mrb[0].mxu0
  %133 = vmatprep.mubr.f32.mxu0 0.0
  %134 = vmatmul.mubr.f32.gmra.mrb[0].mxu0 %v61
  %v135 = vpop.f32.mrb[0].mxu0
  %v136 = vadd.f32 %v63, %v135
  %v137 = vpop.f32.mrb[0].mxu0
  %138 = vdwg.mxu0
  %v139 = vld [vmem:[%s1] sm:$0xff]
  %v140 = vld [vmem:[%s1 + $0x8] sm:$0xff]
  %v141 = vld [vmem:[%s8] sm:$0xf]
  %vm142 = vcmask 261120
  %v143 = vsel %vm142, %v131, 0.0
  %144 = vadd.xlane.f32.xlu0 %v143
  %v145 = vpop.xlane.xlu0 %144
  %v146 = vsel %vm142, %v136, 0.0
  %147 = vadd.xlane.f32.xlu0 %v146
  %v148 = vpop.xlane.xlu0 %147
  %v149 = vrcp.pop 32.0
  %v150 = vmul.f32 %v145, %v149
  %v151 = vmul.f32 %v148, %v149
  %v152 = vsub.f32 %v131, %v150
  %v153 = vsub.f32 %v136, %v151
  %v154 = vmul.f32 %v152, %v152
  %v155 = vmul.f32 %v153, %v153
  %v156 = vsel %vm142, %v154, 0.0
  %157 = vadd.xlane.f32.xlu0 %v156
  %v158 = vpop.xlane.xlu0 %157
  %v159 = vsel %vm142, %v155, 0.0
  %160 = vadd.xlane.f32.xlu0 %v159
  %v161 = vpop.xlane.xlu0 %160
  %v162 = vmul.f32 %v158, %v149
  %v163 = vmul.f32 %v161, %v149
  %v164 = vadd.f32 %v162, 1e-05
  %v165 = vadd.f32 %v163, 1e-05
  %v166 = vrsqrt.pop %v164
  %v167 = vrsqrt.pop %v165
  %v168 = vmul.f32 %v152, %v166
  %v169 = vmul.f32 %v153, %v167
  %v170 = vlaneseq
  %v171 = vshrl.u32 %v170, 7
  %v172 = vsub.s32 0, %v171
  %v173 = vrot.slane %v141, %v172
  %v174 = vmul.f32 %v168, %v173
  %v175 = vmul.f32 %v169, %v173
  %177 = vrot.lane.b32.xlu0 %v173, 96
  %v178 = vpop.permute.xlu0 %177
  %v180 = vadd.f32 %v174, %v178
  %v181 = vadd.f32 %v175, %v178
  %v182 = vld [vmem:[%s4] sm:$0xff]
  %v183 = vld [vmem:[%s4 + $0x8] sm:$0xff]
  %v184 = vld [vmem:[%s4 + $0x10] sm:$0xff]
  %v185 = vld [vmem:[%s4 + $0x18] sm:$0xff]
  %v186 = vlaneseq
  %v187 = vshrl.u32 %v186, 7
  %v188 = vsub.s32 1, %v187
  %v189 = vrot.slane %v141, %v188
  %v191 = vsel %vm142, %v180, 0
  %v194 = vsel %vm142, %v181, 0
  %196 = vmatprep.subr.mxu0 0.0
  %197 = vmatpush1.msra.mxu0 %v182
  %198 = vmatprep.subr.mxu0 0.0
  %199 = vmatpush1.msra.mxu0 %v183
  %200 = vmatprep.subr.mxu0 0.0
  %201 = vmatpush1.msra.mxu0 %v184
  %202 = vmatprep.subr.mxu0 0.0
  %203 = vmatpush1.msra.mxu0 %v185
  %204 = vmatprep.subr.mxu0 0.0
  %205 = vmatpush1.msra.mxu0 0.0
  %206 = vmatprep.subr.mxu0 0.0
  %207 = vmatpush1.msra.mxu0 0.0
  %208 = vmatprep.subr.mxu0 0.0
  %209 = vmatpush1.msra.mxu0 0.0
  %210 = vmatprep.subr.mxu0 0.0
  %211 = vmatpush1.msra.mxu0 0.0
  %212 = vmatprep.subr.mxu0 0.0
  %213 = vmatpush1.msra.mxu0 0.0
  %214 = vmatprep.subr.mxu0 0.0
  %215 = vmatpush1.msra.mxu0 0.0
  %216 = vmatprep.subr.mxu0 0.0
  %217 = vmatpush1.msra.mxu0 0.0
  %218 = vmatprep.subr.mxu0 0.0
  %219 = vmatpush1.msra.mxu0 0.0
  %220 = vmatprep.subr.mxu0 0.0
  %221 = vmatpush1.msra.mxu0 0.0
  %222 = vmatprep.subr.mxu0 0.0
  %223 = vmatpush1.msra.mxu0 0.0
  %224 = vmatprep.subr.mxu0 0.0
  %225 = vmatpush1.msra.mxu0 0.0
  %226 = vmatprep.subr.mxu0 0.0
  %227 = vmatpush1.msra.mxu0 0.0
  %228 = vmatprep.subr.mxu0 0.0
  %229 = vmatpush1.msra.mxu0 0.0
  %230 = vmatprep.subr.mxu0 0.0
  %231 = vmatpush1.msra.mxu0 0.0
  %232 = vmatprep.subr.mxu0 0.0
  %233 = vmatpush1.msra.mxu0 0.0
  %234 = vmatprep.subr.mxu0 0.0
  %235 = vmatpush1.msra.mxu0 0.0
  %236 = vmatprep.subr.mxu0 0.0
  %237 = vmatpush1.msra.mxu0 0.0
  %238 = vmatprep.subr.mxu0 0.0
  %239 = vmatpush1.msra.mxu0 0.0
  %240 = vmatprep.subr.mxu0 0.0
  %241 = vmatpush1.msra.mxu0 0.0
  %242 = vmatprep.subr.mxu0 0.0
  %243 = vmatpush1.msra.mxu0 0.0
  %244 = vmatprep.subr.mxu0 0.0
  %245 = vmatpush1.msra.mxu0 0.0
  %246 = vmatprep.subr.mxu0 0.0
  %247 = vmatpush1.msra.mxu0 0.0
  %248 = vmatprep.subr.mxu0 0.0
  %249 = vmatpush1.msra.mxu0 0.0
  %250 = vmatprep.subr.mxu0 0.0
  %251 = vmatpush1.msra.mxu0 0.0
  %252 = vmatprep.subr.mxu0 0.0
  %253 = vmatpush1.msra.mxu0 0.0
  %254 = vmatprep.subr.mxu0 0.0
  %255 = vmatpush1.msra.mxu0 0.0
  %256 = vmatprep.subr.mxu0 0.0
  %257 = vmatpush1.msra.mxu0 0.0
  %258 = vmatprep.subr.mxu0 0.0
  %259 = vmatpush1.msra.mxu0 0.0
  %260 = vmatprep.mubr.f32.mxu0 0.0
  %261 = vmatmul.mubr.f32.gmra.mrb[0].mxu0 %v191
  %v262 = vpop.f32.mrb[0].mxu0
  %v263 = vadd.f32 %v189, %v262
  %v264 = vpop.f32.mrb[0].mxu0
  %265 = vmatprep.mubr.f32.mxu0 0.0
  %266 = vmatmul.mubr.f32.gmra.mrb[0].mxu0 %v194
  %v267 = vpop.f32.mrb[0].mxu0
  %v268 = vadd.f32 %v189, %v267
  %v269 = vpop.f32.mrb[0].mxu0
  %270 = vdwg.mxu0
  %s271 = scalar_lea.vmem %s4, 32
  %v272 = vld [vmem:[%s271] sm:$0xff]
  %v273 = vld [vmem:[%s271 + $0x8] sm:$0xff]
  %v274 = vld [vmem:[%s271 + $0x10] sm:$0xff]
  %v275 = vld [vmem:[%s271 + $0x18] sm:$0xff]
  %277 = vrot.lane.b32.xlu0 %v189, 96
  %v278 = vpop.permute.xlu0 %277
  %280 = vmatprep.subr.mxu0 0.0
  %281 = vmatpush1.msra.mxu0 %v272
  %282 = vmatprep.subr.mxu0 0.0
  %283 = vmatpush1.msra.mxu0 %v273
  %284 = vmatprep.subr.mxu0 0.0
  %285 = vmatpush1.msra.mxu0 %v274
  %286 = vmatprep.subr.mxu0 0.0
  %287 = vmatpush1.msra.mxu0 %v275
  %288 = vmatprep.subr.mxu0 0.0
  %289 = vmatpush1.msra.mxu0 0.0
  %290 = vmatprep.subr.mxu0 0.0
  %291 = vmatpush1.msra.mxu0 0.0
  %292 = vmatprep.subr.mxu0 0.0
  %293 = vmatpush1.msra.mxu0 0.0
  %294 = vmatprep.subr.mxu0 0.0
  %295 = vmatpush1.msra.mxu0 0.0
  %296 = vmatprep.subr.mxu0 0.0
  %297 = vmatpush1.msra.mxu0 0.0
  %298 = vmatprep.subr.mxu0 0.0
  %299 = vmatpush1.msra.mxu0 0.0
  %300 = vmatprep.subr.mxu0 0.0
  %301 = vmatpush1.msra.mxu0 0.0
  %302 = vmatprep.subr.mxu0 0.0
  %303 = vmatpush1.msra.mxu0 0.0
  %304 = vmatprep.subr.mxu0 0.0
  %305 = vmatpush1.msra.mxu0 0.0
  %306 = vmatprep.subr.mxu0 0.0
  %307 = vmatpush1.msra.mxu0 0.0
  %308 = vmatprep.subr.mxu0 0.0
  %309 = vmatpush1.msra.mxu0 0.0
  %310 = vmatprep.subr.mxu0 0.0
  %311 = vmatpush1.msra.mxu0 0.0
  %312 = vmatprep.subr.mxu0 0.0
  %313 = vmatpush1.msra.mxu0 0.0
  %314 = vmatprep.subr.mxu0 0.0
  %315 = vmatpush1.msra.mxu0 0.0
  %316 = vmatprep.subr.mxu0 0.0
  %317 = vmatpush1.msra.mxu0 0.0
  %318 = vmatprep.subr.mxu0 0.0
  %319 = vmatpush1.msra.mxu0 0.0
  %320 = vmatprep.subr.mxu0 0.0
  %321 = vmatpush1.msra.mxu0 0.0
  %322 = vmatprep.subr.mxu0 0.0
  %323 = vmatpush1.msra.mxu0 0.0
  %324 = vmatprep.subr.mxu0 0.0
  %325 = vmatpush1.msra.mxu0 0.0
  %326 = vmatprep.subr.mxu0 0.0
  %327 = vmatpush1.msra.mxu0 0.0
  %328 = vmatprep.subr.mxu0 0.0
  %329 = vmatpush1.msra.mxu0 0.0
  %330 = vmatprep.subr.mxu0 0.0
  %331 = vmatpush1.msra.mxu0 0.0
  %332 = vmatprep.subr.mxu0 0.0
  %333 = vmatpush1.msra.mxu0 0.0
  %334 = vmatprep.subr.mxu0 0.0
  %335 = vmatpush1.msra.mxu0 0.0
  %336 = vmatprep.subr.mxu0 0.0
  %337 = vmatpush1.msra.mxu0 0.0
  %338 = vmatprep.subr.mxu0 0.0
  %339 = vmatpush1.msra.mxu0 0.0
  %340 = vmatprep.subr.mxu0 0.0
  %341 = vmatpush1.msra.mxu0 0.0
  %342 = vmatprep.subr.mxu0 0.0
  %343 = vmatpush1.msra.mxu0 0.0
  %344 = vmatprep.mubr.f32.mxu0 0.0
  %345 = vmatmul.mubr.f32.gmra.mrb[0].mxu0 %v191
  %v346 = vpop.f32.mrb[0].mxu0
  %v347 = vadd.f32 %v278, %v346
  %v348 = vpop.f32.mrb[0].mxu0
  %349 = vmatprep.mubr.f32.mxu0 0.0
  %350 = vmatmul.mubr.f32.gmra.mrb[0].mxu0 %v194
  %v351 = vpop.f32.mrb[0].mxu0
  %v352 = vadd.f32 %v278, %v351
  %v353 = vpop.f32.mrb[0].mxu0
  %354 = vdwg.mxu0
  %s355 = scalar_lea.vmem %s4, 64
  %v356 = vld [vmem:[%s355] sm:$0xff]
  %v357 = vld [vmem:[%s355 + $0x8] sm:$0xff]
  %v358 = vld [vmem:[%s355 + $0x10] sm:$0xff]
  %v359 = vld [vmem:[%s355 + $0x18] sm:$0xff]
  %360 = vrot.lane.b32.xlu0 %v189, 64
  %v361 = vpop.permute.xlu0 %360
  %363 = vmatprep.subr.mxu0 0.0
  %364 = vmatpush1.msra.mxu0 %v356
  %365 = vmatprep.subr.mxu0 0.0
  %366 = vmatpush1.msra.mxu0 %v357
  %367 = vmatprep.subr.mxu0 0.0
  %368 = vmatpush1.msra.mxu0 %v358
  %369 = vmatprep.subr.mxu0 0.0
  %370 = vmatpush1.msra.mxu0 %v359
  %371 = vmatprep.subr.mxu0 0.0
  %372 = vmatpush1.msra.mxu0 0.0
  %373 = vmatprep.subr.mxu0 0.0
  %374 = vmatpush1.msra.mxu0 0.0
  %375 = vmatprep.subr.mxu0 0.0
  %376 = vmatpush1.msra.mxu0 0.0
  %377 = vmatprep.subr.mxu0 0.0
  %378 = vmatpush1.msra.mxu0 0.0
  %379 = vmatprep.subr.mxu0 0.0
  %380 = vmatpush1.msra.mxu0 0.0
  %381 = vmatprep.subr.mxu0 0.0
  %382 = vmatpush1.msra.mxu0 0.0
  %383 = vmatprep.subr.mxu0 0.0
  %384 = vmatpush1.msra.mxu0 0.0
  %385 = vmatprep.subr.mxu0 0.0
  %386 = vmatpush1.msra.mxu0 0.0
  %387 = vmatprep.subr.mxu0 0.0
  %388 = vmatpush1.msra.mxu0 0.0
  %389 = vmatprep.subr.mxu0 0.0
  %390 = vmatpush1.msra.mxu0 0.0
  %391 = vmatprep.subr.mxu0 0.0
  %392 = vmatpush1.msra.mxu0 0.0
  %393 = vmatprep.subr.mxu0 0.0
  %394 = vmatpush1.msra.mxu0 0.0
  %395 = vmatprep.subr.mxu0 0.0
  %396 = vmatpush1.msra.mxu0 0.0
  %397 = vmatprep.subr.mxu0 0.0
  %398 = vmatpush1.msra.mxu0 0.0
  %399 = vmatprep.subr.mxu0 0.0
  %400 = vmatpush1.msra.mxu0 0.0
  %401 = vmatprep.subr.mxu0 0.0
  %402 = vmatpush1.msra.mxu0 0.0
  %403 = vmatprep.subr.mxu0 0.0
  %404 = vmatpush1.msra.mxu0 0.0
  %405 = vmatprep.subr.mxu0 0.0
  %406 = vmatpush1.msra.mxu0 0.0
  %407 = vmatprep.subr.mxu0 0.0
  %408 = vmatpush1.msra.mxu0 0.0
  %409 = vmatprep.subr.mxu0 0.0
  %410 = vmatpush1.msra.mxu0 0.0
  %411 = vmatprep.subr.mxu0 0.0
  %412 = vmatpush1.msra.mxu0 0.0
  %413 = vmatprep.subr.mxu0 0.0
  %414 = vmatpush1.msra.mxu0 0.0
  %415 = vmatprep.subr.mxu0 0.0
  %416 = vmatpush1.msra.mxu0 0.0
  %417 = vmatprep.subr.mxu0 0.0
  %418 = vmatpush1.msra.mxu0 0.0
  %419 = vmatprep.subr.mxu0 0.0
  %420 = vmatpush1.msra.mxu0 0.0
  %421 = vmatprep.subr.mxu0 0.0
  %422 = vmatpush1.msra.mxu0 0.0
  %423 = vmatprep.subr.mxu0 0.0
  %424 = vmatpush1.msra.mxu0 0.0
  %425 = vmatprep.subr.mxu0 0.0
  %426 = vmatpush1.msra.mxu0 0.0
  %427 = vmatprep.mubr.f32.mxu0 0.0
  %428 = vmatmul.mubr.f32.gmra.mrb[0].mxu0 %v191
  %v429 = vpop.f32.mrb[0].mxu0
  %v430 = vadd.f32 %v361, %v429
  %v431 = vpop.f32.mrb[0].mxu0
  %432 = vmatprep.mubr.f32.mxu0 0.0
  %433 = vmatmul.mubr.f32.gmra.mrb[0].mxu0 %v194
  %v434 = vpop.f32.mrb[0].mxu0
  %v435 = vadd.f32 %v361, %v434
  %v436 = vpop.f32.mrb[0].mxu0
  %437 = vdwg.mxu0
  %vm438 = vcmask 64512
  %v440 = vsel %vm438, %v263, 0
  %v443 = vsel %vm438, %v268, 0
  %v446 = vsel %vm438, %v347, 0
  %v449 = vsel %vm438, %v352, 0
  %451 = vmatprep.subr.mxu0 0.0
  %452 = vmatpush1.xpose.msra.mxu0 %v446
  %453 = vmatprep.subr.mxu0 0.0
  %454 = vmatpush1.xpose.msra.mxu0 %v449
  %455 = vmatprep.subr.mxu0 0.0
  %456 = vmatpush1.xpose.msra.mxu0 0.0
  %457 = vmatprep.subr.mxu0 0.0
  %458 = vmatpush1.xpose.msra.mxu0 0.0
  %459 = vmatprep.subr.mxu0 0.0
  %460 = vmatpush1.xpose.msra.mxu0 0.0
  %461 = vmatprep.subr.mxu0 0.0
  %462 = vmatpush1.xpose.msra.mxu0 0.0
  %463 = vmatprep.subr.mxu0 0.0
  %464 = vmatpush1.xpose.msra.mxu0 0.0
  %465 = vmatprep.subr.mxu0 0.0
  %466 = vmatpush1.xpose.msra.mxu0 0.0
  %467 = vmatprep.subr.mxu0 0.0
  %468 = vmatpush1.xpose.msra.mxu0 0.0
  %469 = vmatprep.subr.mxu0 0.0
  %470 = vmatpush1.xpose.msra.mxu0 0.0
  %471 = vmatprep.subr.mxu0 0.0
  %472 = vmatpush1.xpose.msra.mxu0 0.0
  %473 = vmatprep.subr.mxu0 0.0
  %474 = vmatpush1.xpose.msra.mxu0 0.0
  %475 = vmatprep.subr.mxu0 0.0
  %476 = vmatpush1.xpose.msra.mxu0 0.0
  %477 = vmatprep.subr.mxu0 0.0
  %478 = vmatpush1.xpose.msra.mxu0 0.0
  %479 = vmatprep.subr.mxu0 0.0
  %480 = vmatpush1.xpose.msra.mxu0 0.0
  %481 = vmatprep.subr.mxu0 0.0
  %482 = vmatpush1.xpose.msra.mxu0 0.0
  %483 = vmatprep.subr.mxu0 0.0
  %484 = vmatpush1.xpose.msra.mxu0 0.0
  %485 = vmatprep.subr.mxu0 0.0
  %486 = vmatpush1.xpose.msra.mxu0 0.0
  %487 = vmatprep.subr.mxu0 0.0
  %488 = vmatpush1.xpose.msra.mxu0 0.0
  %489 = vmatprep.subr.mxu0 0.0
  %490 = vmatpush1.xpose.msra.mxu0 0.0
  %491 = vmatprep.subr.mxu0 0.0
  %492 = vmatpush1.xpose.msra.mxu0 0.0
  %493 = vmatprep.subr.mxu0 0.0
  %494 = vmatpush1.xpose.msra.mxu0 0.0
  %495 = vmatprep.subr.mxu0 0.0
  %496 = vmatpush1.xpose.msra.mxu0 0.0
  %497 = vmatprep.subr.mxu0 0.0
  %498 = vmatpush1.xpose.msra.mxu0 0.0
  %499 = vmatprep.subr.mxu0 0.0
  %500 = vmatpush1.xpose.msra.mxu0 0.0
  %501 = vmatprep.subr.mxu0 0.0
  %502 = vmatpush1.xpose.msra.mxu0 0.0
  %503 = vmatprep.subr.mxu0 0.0
  %504 = vmatpush1.xpose.msra.mxu0 0.0
  %505 = vmatprep.subr.mxu0 0.0
  %506 = vmatpush1.xpose.msra.mxu0 0.0
  %507 = vmatprep.subr.mxu0 0.0
  %508 = vmatpush1.xpose.msra.mxu0 0.0
  %509 = vmatprep.subr.mxu0 0.0
  %510 = vmatpush1.xpose.msra.mxu0 0.0
  %511 = vmatprep.subr.mxu0 0.0
  %512 = vmatpush1.xpose.msra.mxu0 0.0
  %513 = vmatprep.subr.mxu0 0.0
  %514 = vmatpush1.xpose.msra.mxu0 0.0
  %515 = vmatprep.mubr.f32.mxu0 0.0
  %516 = vmatmul.mubr.f32.gmra.mrb[0].mxu0 %v440
  %v517 = vpop.f32.mrb[0].mxu0
  %v518 = vadd.f32 0.0, %v517
  %v519 = vpop.f32.mrb[0].mxu0
  %520 = vmatprep.mubr.f32.mxu0 0.0
  %521 = vmatmul.mubr.f32.gmra.mrb[0].mxu0 %v443
  %v522 = vpop.f32.mrb[0].mxu0
  %v523 = vadd.f32 0.0, %v522
  %v524 = vpop.f32.mrb[0].mxu0
  %525 = vdwg.mxu0
  %v526 = vmul.f32 %v518, 0.35355338
  %v527 = vmul.f32 %v523, 0.35355338
  %v528 = vadd.f32 %v526, %v139
  %v529 = vadd.f32 %v527, %v140
  %vm530 = vcmask 130048
  %v531 = vsel %vm530, %v528, -inf
  %532 = vmax.xlane.f32.xlu0 %v531
  %v533 = vpop.xlane.xlu0 %532
  %v534 = vsel %vm530, %v529, -inf
  %535 = vmax.xlane.f32.xlu0 %v534
  %v536 = vpop.xlane.xlu0 %535
  %v537 = vsub.f32 %v528, %v533
  %v538 = vsub.f32 %v529, %v536
  %v539 = vmul.f32 %v537, 1.442695
  %v540 = vpow.pop %v539
  %v541 = vmul.f32 %v538, 1.442695
  %v542 = vpow.pop %v541
  %v543 = vsel %vm530, %v540, 0.0
  %544 = vadd.xlane.f32.xlu0 %v543
  %v545 = vpop.xlane.xlu0 %544
  %v546 = vsel %vm530, %v542, 0.0
  %547 = vadd.xlane.f32.xlu0 %v546
  %v548 = vpop.xlane.xlu0 %547
  %v549 = vrcp.pop %v545
  %v550 = vrcp.pop %v548
  %v551 = vmul.f32 %v540, %v549
  %v552 = vmul.f32 %v542, %v550
  %v554 = vsel %vm530, %v551, 0
  %v557 = vsel %vm530, %v552, 0
  %559 = vmatprep.subr.mxu0 0.0
  %560 = vmatpush1.msra.mxu0 %v430
  %561 = vmatprep.subr.mxu0 0.0
  %562 = vmatpush1.msra.mxu0 %v435
  %563 = vmatprep.subr.mxu0 0.0
  %564 = vmatpush1.msra.mxu0 0.0
  %565 = vmatprep.subr.mxu0 0.0
  %566 = vmatpush1.msra.mxu0 0.0
  %567 = vmatprep.subr.mxu0 0.0
  %568 = vmatpush1.msra.mxu0 0.0
  %569 = vmatprep.subr.mxu0 0.0
  %570 = vmatpush1.msra.mxu0 0.0
  %571 = vmatprep.subr.mxu0 0.0
  %572 = vmatpush1.msra.mxu0 0.0
  %573 = vmatprep.subr.mxu0 0.0
  %574 = vmatpush1.msra.mxu0 0.0
  %575 = vmatprep.subr.mxu0 0.0
  %576 = vmatpush1.msra.mxu0 0.0
  %577 = vmatprep.subr.mxu0 0.0
  %578 = vmatpush1.msra.mxu0 0.0
  %579 = vmatprep.subr.mxu0 0.0
  %580 = vmatpush1.msra.mxu0 0.0
  %581 = vmatprep.subr.mxu0 0.0
  %582 = vmatpush1.msra.mxu0 0.0
  %583 = vmatprep.subr.mxu0 0.0
  %584 = vmatpush1.msra.mxu0 0.0
  %585 = vmatprep.subr.mxu0 0.0
  %586 = vmatpush1.msra.mxu0 0.0
  %587 = vmatprep.subr.mxu0 0.0
  %588 = vmatpush1.msra.mxu0 0.0
  %589 = vmatprep.subr.mxu0 0.0
  %590 = vmatpush1.msra.mxu0 0.0
  %591 = vmatprep.subr.mxu0 0.0
  %592 = vmatpush1.msra.mxu0 0.0
  %593 = vmatprep.subr.mxu0 0.0
  %594 = vmatpush1.msra.mxu0 0.0
  %595 = vmatprep.subr.mxu0 0.0
  %596 = vmatpush1.msra.mxu0 0.0
  %597 = vmatprep.subr.mxu0 0.0
  %598 = vmatpush1.msra.mxu0 0.0
  %599 = vmatprep.subr.mxu0 0.0
  %600 = vmatpush1.msra.mxu0 0.0
  %601 = vmatprep.subr.mxu0 0.0
  %602 = vmatpush1.msra.mxu0 0.0
  %603 = vmatprep.subr.mxu0 0.0
  %604 = vmatpush1.msra.mxu0 0.0
  %605 = vmatprep.subr.mxu0 0.0
  %606 = vmatpush1.msra.mxu0 0.0
  %607 = vmatprep.subr.mxu0 0.0
  %608 = vmatpush1.msra.mxu0 0.0
  %609 = vmatprep.subr.mxu0 0.0
  %610 = vmatpush1.msra.mxu0 0.0
  %611 = vmatprep.subr.mxu0 0.0
  %612 = vmatpush1.msra.mxu0 0.0
  %613 = vmatprep.subr.mxu0 0.0
  %614 = vmatpush1.msra.mxu0 0.0
  %615 = vmatprep.subr.mxu0 0.0
  %616 = vmatpush1.msra.mxu0 0.0
  %617 = vmatprep.subr.mxu0 0.0
  %618 = vmatpush1.msra.mxu0 0.0
  %619 = vmatprep.subr.mxu0 0.0
  %620 = vmatpush1.msra.mxu0 0.0
  %621 = vmatprep.subr.mxu0 0.0
  %622 = vmatpush1.msra.mxu0 0.0
  %623 = vmatprep.mubr.f32.mxu0 0.0
  %624 = vmatmul.mubr.f32.gmra.mrb[0].mxu0 %v554
  %v625 = vpop.f32.mrb[0].mxu0
  %v626 = vadd.f32 0.0, %v625
  %v627 = vpop.f32.mrb[0].mxu0
  %628 = vmatprep.mubr.f32.mxu0 0.0
  %629 = vmatmul.mubr.f32.gmra.mrb[0].mxu0 %v557
  %v630 = vpop.f32.mrb[0].mxu0
  %v631 = vadd.f32 0.0, %v630
  %v632 = vpop.f32.mrb[0].mxu0
  %633 = vdwg.mxu0
  %634 = vrot.lane.b32.xlu0 %v263, 120
  %v635 = vpop.permute.xlu0 %634
  %636 = vrot.lane.b32.xlu0 %v268, 120
  %v637 = vpop.permute.xlu0 %636
  %638 = vrot.lane.b32.xlu0 %v347, 120
  %v639 = vpop.permute.xlu0 %638
  %640 = vrot.lane.b32.xlu0 %v352, 120
  %v641 = vpop.permute.xlu0 %640
  %v642 = vsel %vm438, %v635, 0
  %v644 = vsel %vm438, %v637, 0
  %v646 = vsel %vm438, %v639, 0
  %v648 = vsel %vm438, %v641, 0
  %650 = vmatprep.subr.mxu0 0.0
  %651 = vmatpush1.xpose.msra.mxu0 %v646
  %652 = vmatprep.subr.mxu0 0.0
  %653 = vmatpush1.xpose.msra.mxu0 %v648
  %654 = vmatprep.subr.mxu0 0.0
  %655 = vmatpush1.xpose.msra.mxu0 0.0
  %656 = vmatprep.subr.mxu0 0.0
  %657 = vmatpush1.xpose.msra.mxu0 0.0
  %658 = vmatprep.subr.mxu0 0.0
  %659 = vmatpush1.xpose.msra.mxu0 0.0
  %660 = vmatprep.subr.mxu0 0.0
  %661 = vmatpush1.xpose.msra.mxu0 0.0
  %662 = vmatprep.subr.mxu0 0.0
  %663 = vmatpush1.xpose.msra.mxu0 0.0
  %664 = vmatprep.subr.mxu0 0.0
  %665 = vmatpush1.xpose.msra.mxu0 0.0
  %666 = vmatprep.subr.mxu0 0.0
  %667 = vmatpush1.xpose.msra.mxu0 0.0
  %668 = vmatprep.subr.mxu0 0.0
  %669 = vmatpush1.xpose.msra.mxu0 0.0
  %670 = vmatprep.subr.mxu0 0.0
  %671 = vmatpush1.xpose.msra.mxu0 0.0
  %672 = vmatprep.subr.mxu0 0.0
  %673 = vmatpush1.xpose.msra.mxu0 0.0
  %674 = vmatprep.subr.mxu0 0.0
  %675 = vmatpush1.xpose.msra.mxu0 0.0
  %676 = vmatprep.subr.mxu0 0.0
  %677 = vmatpush1.xpose.msra.mxu0 0.0
  %678 = vmatprep.subr.mxu0 0.0
  %679 = vmatpush1.xpose.msra.mxu0 0.0
  %680 = vmatprep.subr.mxu0 0.0
  %681 = vmatpush1.xpose.msra.mxu0 0.0
  %682 = vmatprep.subr.mxu0 0.0
  %683 = vmatpush1.xpose.msra.mxu0 0.0
  %684 = vmatprep.subr.mxu0 0.0
  %685 = vmatpush1.xpose.msra.mxu0 0.0
  %686 = vmatprep.subr.mxu0 0.0
  %687 = vmatpush1.xpose.msra.mxu0 0.0
  %688 = vmatprep.subr.mxu0 0.0
  %689 = vmatpush1.xpose.msra.mxu0 0.0
  %690 = vmatprep.subr.mxu0 0.0
  %691 = vmatpush1.xpose.msra.mxu0 0.0
  %692 = vmatprep.subr.mxu0 0.0
  %693 = vmatpush1.xpose.msra.mxu0 0.0
  %694 = vmatprep.subr.mxu0 0.0
  %695 = vmatpush1.xpose.msra.mxu0 0.0
  %696 = vmatprep.subr.mxu0 0.0
  %697 = vmatpush1.xpose.msra.mxu0 0.0
  %698 = vmatprep.subr.mxu0 0.0
  %699 = vmatpush1.xpose.msra.mxu0 0.0
  %700 = vmatprep.subr.mxu0 0.0
  %701 = vmatpush1.xpose.msra.mxu0 0.0
  %702 = vmatprep.subr.mxu0 0.0
  %703 = vmatpush1.xpose.msra.mxu0 0.0
  %704 = vmatprep.subr.mxu0 0.0
  %705 = vmatpush1.xpose.msra.mxu0 0.0
  %706 = vmatprep.subr.mxu0 0.0
  %707 = vmatpush1.xpose.msra.mxu0 0.0
  %708 = vmatprep.subr.mxu0 0.0
  %709 = vmatpush1.xpose.msra.mxu0 0.0
  %710 = vmatprep.subr.mxu0 0.0
  %711 = vmatpush1.xpose.msra.mxu0 0.0
  %712 = vmatprep.subr.mxu0 0.0
  %713 = vmatpush1.xpose.msra.mxu0 0.0
  %714 = vmatprep.mubr.f32.mxu0 0.0
  %715 = vmatmul.mubr.f32.gmra.mrb[0].mxu0 %v642
  %v716 = vpop.f32.mrb[0].mxu0
  %v717 = vadd.f32 0.0, %v716
  %v718 = vpop.f32.mrb[0].mxu0
  %719 = vmatprep.mubr.f32.mxu0 0.0
  %720 = vmatmul.mubr.f32.gmra.mrb[0].mxu0 %v644
  %v721 = vpop.f32.mrb[0].mxu0
  %v722 = vadd.f32 0.0, %v721
  %v723 = vpop.f32.mrb[0].mxu0
  %724 = vdwg.mxu0
  %v725 = vmul.f32 %v717, 0.35355338
  %v726 = vmul.f32 %v722, 0.35355338
  %v727 = vadd.f32 %v725, %v139
  %v728 = vadd.f32 %v726, %v140
  %v729 = vsel %vm530, %v727, -inf
  %730 = vmax.xlane.f32.xlu0 %v729
  %v731 = vpop.xlane.xlu0 %730
  %v732 = vsel %vm530, %v728, -inf
  %733 = vmax.xlane.f32.xlu0 %v732
  %v734 = vpop.xlane.xlu0 %733
  %v735 = vsub.f32 %v727, %v731
  %v736 = vsub.f32 %v728, %v734
  %v737 = vmul.f32 %v735, 1.442695
  %v738 = vpow.pop %v737
  %v739 = vmul.f32 %v736, 1.442695
  %v740 = vpow.pop %v739
  %v741 = vsel %vm530, %v738, 0.0
  %742 = vadd.xlane.f32.xlu0 %v741
  %v743 = vpop.xlane.xlu0 %742
  %v744 = vsel %vm530, %v740, 0.0
  %745 = vadd.xlane.f32.xlu0 %v744
  %v746 = vpop.xlane.xlu0 %745
  %v747 = vrcp.pop %v743
  %v748 = vrcp.pop %v746
  %v749 = vmul.f32 %v738, %v747
  %v750 = vmul.f32 %v740, %v748
  %753 = vrot.lane.b32.xlu0 %v430, 120
  %v754 = vpop.permute.xlu0 %753
  %755 = vrot.lane.b32.xlu0 %v435, 120
  %v756 = vpop.permute.xlu0 %755
  %v760 = vsel %vm530, %v749, 0
  %v763 = vsel %vm530, %v750, 0
  %765 = vmatprep.subr.mxu0 0.0
  %766 = vmatpush1.msra.mxu0 %v754
  %767 = vmatprep.subr.mxu0 0.0
  %768 = vmatpush1.msra.mxu0 %v756
  %769 = vmatprep.subr.mxu0 0.0
  %770 = vmatpush1.msra.mxu0 0.0
  %771 = vmatprep.subr.mxu0 0.0
  %772 = vmatpush1.msra.mxu0 0.0
  %773 = vmatprep.subr.mxu0 0.0
  %774 = vmatpush1.msra.mxu0 0.0
  %775 = vmatprep.subr.mxu0 0.0
  %776 = vmatpush1.msra.mxu0 0.0
  %777 = vmatprep.subr.mxu0 0.0
  %778 = vmatpush1.msra.mxu0 0.0
  %779 = vmatprep.subr.mxu0 0.0
  %780 = vmatpush1.msra.mxu0 0.0
  %781 = vmatprep.subr.mxu0 0.0
  %782 = vmatpush1.msra.mxu0 0.0
  %783 = vmatprep.subr.mxu0 0.0
  %784 = vmatpush1.msra.mxu0 0.0
  %785 = vmatprep.subr.mxu0 0.0
  %786 = vmatpush1.msra.mxu0 0.0
  %787 = vmatprep.subr.mxu0 0.0
  %788 = vmatpush1.msra.mxu0 0.0
  %789 = vmatprep.subr.mxu0 0.0
  %790 = vmatpush1.msra.mxu0 0.0
  %791 = vmatprep.subr.mxu0 0.0
  %792 = vmatpush1.msra.mxu0 0.0
  %793 = vmatprep.subr.mxu0 0.0
  %794 = vmatpush1.msra.mxu0 0.0
  %795 = vmatprep.subr.mxu0 0.0
  %796 = vmatpush1.msra.mxu0 0.0
  %797 = vmatprep.subr.mxu0 0.0
  %798 = vmatpush1.msra.mxu0 0.0
  %799 = vmatprep.subr.mxu0 0.0
  %800 = vmatpush1.msra.mxu0 0.0
  %801 = vmatprep.subr.mxu0 0.0
  %802 = vmatpush1.msra.mxu0 0.0
  %803 = vmatprep.subr.mxu0 0.0
  %804 = vmatpush1.msra.mxu0 0.0
  %805 = vmatprep.subr.mxu0 0.0
  %806 = vmatpush1.msra.mxu0 0.0
  %807 = vmatprep.subr.mxu0 0.0
  %808 = vmatpush1.msra.mxu0 0.0
  %809 = vmatprep.subr.mxu0 0.0
  %810 = vmatpush1.msra.mxu0 0.0
  %811 = vmatprep.subr.mxu0 0.0
  %812 = vmatpush1.msra.mxu0 0.0
  %813 = vmatprep.subr.mxu0 0.0
  %814 = vmatpush1.msra.mxu0 0.0
  %815 = vmatprep.subr.mxu0 0.0
  %816 = vmatpush1.msra.mxu0 0.0
  %817 = vmatprep.subr.mxu0 0.0
  %818 = vmatpush1.msra.mxu0 0.0
  %819 = vmatprep.subr.mxu0 0.0
  %820 = vmatpush1.msra.mxu0 0.0
  %821 = vmatprep.subr.mxu0 0.0
  %822 = vmatpush1.msra.mxu0 0.0
  %823 = vmatprep.subr.mxu0 0.0
  %824 = vmatpush1.msra.mxu0 0.0
  %825 = vmatprep.subr.mxu0 0.0
  %826 = vmatpush1.msra.mxu0 0.0
  %827 = vmatprep.subr.mxu0 0.0
  %828 = vmatpush1.msra.mxu0 0.0
  %829 = vmatprep.mubr.f32.mxu0 0.0
  %830 = vmatmul.mubr.f32.gmra.mrb[0].mxu0 %v760
  %v831 = vpop.f32.mrb[0].mxu0
  %v832 = vadd.f32 0.0, %v831
  %v833 = vpop.f32.mrb[0].mxu0
  %834 = vmatprep.mubr.f32.mxu0 0.0
  %835 = vmatmul.mubr.f32.gmra.mrb[0].mxu0 %v763
  %v836 = vpop.f32.mrb[0].mxu0
  %v837 = vadd.f32 0.0, %v836
  %v838 = vpop.f32.mrb[0].mxu0
  %839 = vdwg.mxu0
  %840 = vrot.lane.b32.xlu0 %v263, 112
  %v841 = vpop.permute.xlu0 %840
  %842 = vrot.lane.b32.xlu0 %v268, 112
  %v843 = vpop.permute.xlu0 %842
  %844 = vrot.lane.b32.xlu0 %v347, 112
  %v845 = vpop.permute.xlu0 %844
  %846 = vrot.lane.b32.xlu0 %v352, 112
  %v847 = vpop.permute.xlu0 %846
  %v848 = vsel %vm438, %v841, 0
  %v850 = vsel %vm438, %v843, 0
  %v852 = vsel %vm438, %v845, 0
  %v854 = vsel %vm438, %v847, 0
  %856 = vmatprep.subr.mxu0 0.0
  %857 = vmatpush1.xpose.msra.mxu0 %v852
  %858 = vmatprep.subr.mxu0 0.0
  %859 = vmatpush1.xpose.msra.mxu0 %v854
  %860 = vmatprep.subr.mxu0 0.0
  %861 = vmatpush1.xpose.msra.mxu0 0.0
  %862 = vmatprep.subr.mxu0 0.0
  %863 = vmatpush1.xpose.msra.mxu0 0.0
  %864 = vmatprep.subr.mxu0 0.0
  %865 = vmatpush1.xpose.msra.mxu0 0.0
  %866 = vmatprep.subr.mxu0 0.0
  %867 = vmatpush1.xpose.msra.mxu0 0.0
  %868 = vmatprep.subr.mxu0 0.0
  %869 = vmatpush1.xpose.msra.mxu0 0.0
  %870 = vmatprep.subr.mxu0 0.0
  %871 = vmatpush1.xpose.msra.mxu0 0.0
  %872 = vmatprep.subr.mxu0 0.0
  %873 = vmatpush1.xpose.msra.mxu0 0.0
  %874 = vmatprep.subr.mxu0 0.0
  %875 = vmatpush1.xpose.msra.mxu0 0.0
  %876 = vmatprep.subr.mxu0 0.0
  %877 = vmatpush1.xpose.msra.mxu0 0.0
  %878 = vmatprep.subr.mxu0 0.0
  %879 = vmatpush1.xpose.msra.mxu0 0.0
  %880 = vmatprep.subr.mxu0 0.0
  %881 = vmatpush1.xpose.msra.mxu0 0.0
  %882 = vmatprep.subr.mxu0 0.0
  %883 = vmatpush1.xpose.msra.mxu0 0.0
  %884 = vmatprep.subr.mxu0 0.0
  %885 = vmatpush1.xpose.msra.mxu0 0.0
  %886 = vmatprep.subr.mxu0 0.0
  %887 = vmatpush1.xpose.msra.mxu0 0.0
  %888 = vmatprep.subr.mxu0 0.0
  %889 = vmatpush1.xpose.msra.mxu0 0.0
  %890 = vmatprep.subr.mxu0 0.0
  %891 = vmatpush1.xpose.msra.mxu0 0.0
  %892 = vmatprep.subr.mxu0 0.0
  %893 = vmatpush1.xpose.msra.mxu0 0.0
  %894 = vmatprep.subr.mxu0 0.0
  %895 = vmatpush1.xpose.msra.mxu0 0.0
  %896 = vmatprep.subr.mxu0 0.0
  %897 = vmatpush1.xpose.msra.mxu0 0.0
  %898 = vmatprep.subr.mxu0 0.0
  %899 = vmatpush1.xpose.msra.mxu0 0.0
  %900 = vmatprep.subr.mxu0 0.0
  %901 = vmatpush1.xpose.msra.mxu0 0.0
  %902 = vmatprep.subr.mxu0 0.0
  %903 = vmatpush1.xpose.msra.mxu0 0.0
  %904 = vmatprep.subr.mxu0 0.0
  %905 = vmatpush1.xpose.msra.mxu0 0.0
  %906 = vmatprep.subr.mxu0 0.0
  %907 = vmatpush1.xpose.msra.mxu0 0.0
  %908 = vmatprep.subr.mxu0 0.0
  %909 = vmatpush1.xpose.msra.mxu0 0.0
  %910 = vmatprep.subr.mxu0 0.0
  %911 = vmatpush1.xpose.msra.mxu0 0.0
  %912 = vmatprep.subr.mxu0 0.0
  %913 = vmatpush1.xpose.msra.mxu0 0.0
  %914 = vmatprep.subr.mxu0 0.0
  %915 = vmatpush1.xpose.msra.mxu0 0.0
  %916 = vmatprep.subr.mxu0 0.0
  %917 = vmatpush1.xpose.msra.mxu0 0.0
  %918 = vmatprep.subr.mxu0 0.0
  %919 = vmatpush1.xpose.msra.mxu0 0.0
  %920 = vmatprep.mubr.f32.mxu0 0.0
  %921 = vmatmul.mubr.f32.gmra.mrb[0].mxu0 %v848
  %v922 = vpop.f32.mrb[0].mxu0
  %v923 = vadd.f32 0.0, %v922
  %v924 = vpop.f32.mrb[0].mxu0
  %925 = vmatprep.mubr.f32.mxu0 0.0
  %926 = vmatmul.mubr.f32.gmra.mrb[0].mxu0 %v850
  %v927 = vpop.f32.mrb[0].mxu0
  %v928 = vadd.f32 0.0, %v927
  %v929 = vpop.f32.mrb[0].mxu0
  %930 = vdwg.mxu0
  %v931 = vmul.f32 %v923, 0.35355338
  %v932 = vmul.f32 %v928, 0.35355338
  %v933 = vadd.f32 %v931, %v139
  %v934 = vadd.f32 %v932, %v140
  %v935 = vsel %vm530, %v933, -inf
  %936 = vmax.xlane.f32.xlu0 %v935
  %v937 = vpop.xlane.xlu0 %936
  %v938 = vsel %vm530, %v934, -inf
  %939 = vmax.xlane.f32.xlu0 %v938
  %v940 = vpop.xlane.xlu0 %939
  %v941 = vsub.f32 %v933, %v937
  %v942 = vsub.f32 %v934, %v940
  %v943 = vmul.f32 %v941, 1.442695
  %v944 = vpow.pop %v943
  %v945 = vmul.f32 %v942, 1.442695
  %v946 = vpow.pop %v945
  %v947 = vsel %vm530, %v944, 0.0
  %948 = vadd.xlane.f32.xlu0 %v947
  %v949 = vpop.xlane.xlu0 %948
  %v950 = vsel %vm530, %v946, 0.0
  %951 = vadd.xlane.f32.xlu0 %v950
  %v952 = vpop.xlane.xlu0 %951
  %v953 = vrcp.pop %v949
  %v954 = vrcp.pop %v952
  %v955 = vmul.f32 %v944, %v953
  %v956 = vmul.f32 %v946, %v954
  %957 = vrot.lane.b32.xlu0 %v430, 112
  %v958 = vpop.permute.xlu0 %957
  %959 = vrot.lane.b32.xlu0 %v435, 112
  %v960 = vpop.permute.xlu0 %959
  %v964 = vsel %vm530, %v955, 0
  %v967 = vsel %vm530, %v956, 0
  %969 = vmatprep.subr.mxu0 0.0
  %970 = vmatpush1.msra.mxu0 %v958
  %971 = vmatprep.subr.mxu0 0.0
  %972 = vmatpush1.msra.mxu0 %v960
  %973 = vmatprep.subr.mxu0 0.0
  %974 = vmatpush1.msra.mxu0 0.0
  %975 = vmatprep.subr.mxu0 0.0
  %976 = vmatpush1.msra.mxu0 0.0
  %977 = vmatprep.subr.mxu0 0.0
  %978 = vmatpush1.msra.mxu0 0.0
  %979 = vmatprep.subr.mxu0 0.0
  %980 = vmatpush1.msra.mxu0 0.0
  %981 = vmatprep.subr.mxu0 0.0
  %982 = vmatpush1.msra.mxu0 0.0
  %983 = vmatprep.subr.mxu0 0.0
  %984 = vmatpush1.msra.mxu0 0.0
  %985 = vmatprep.subr.mxu0 0.0
  %986 = vmatpush1.msra.mxu0 0.0
  %987 = vmatprep.subr.mxu0 0.0
  %988 = vmatpush1.msra.mxu0 0.0
  %989 = vmatprep.subr.mxu0 0.0
  %990 = vmatpush1.msra.mxu0 0.0
  %991 = vmatprep.subr.mxu0 0.0
  %992 = vmatpush1.msra.mxu0 0.0
  %993 = vmatprep.subr.mxu0 0.0
  %994 = vmatpush1.msra.mxu0 0.0
  %995 = vmatprep.subr.mxu0 0.0
  %996 = vmatpush1.msra.mxu0 0.0
  %997 = vmatprep.subr.mxu0 0.0
  %998 = vmatpush1.msra.mxu0 0.0
  %999 = vmatprep.subr.mxu0 0.0
  %1000 = vmatpush1.msra.mxu0 0.0
  %1001 = vmatprep.subr.mxu0 0.0
  %1002 = vmatpush1.msra.mxu0 0.0
  %1003 = vmatprep.subr.mxu0 0.0
  %1004 = vmatpush1.msra.mxu0 0.0
  %1005 = vmatprep.subr.mxu0 0.0
  %1006 = vmatpush1.msra.mxu0 0.0
  %1007 = vmatprep.subr.mxu0 0.0
  %1008 = vmatpush1.msra.mxu0 0.0
  %1009 = vmatprep.subr.mxu0 0.0
  %1010 = vmatpush1.msra.mxu0 0.0
  %1011 = vmatprep.subr.mxu0 0.0
  %1012 = vmatpush1.msra.mxu0 0.0
  %1013 = vmatprep.subr.mxu0 0.0
  %1014 = vmatpush1.msra.mxu0 0.0
  %1015 = vmatprep.subr.mxu0 0.0
  %1016 = vmatpush1.msra.mxu0 0.0
  %1017 = vmatprep.subr.mxu0 0.0
  %1018 = vmatpush1.msra.mxu0 0.0
  %1019 = vmatprep.subr.mxu0 0.0
  %1020 = vmatpush1.msra.mxu0 0.0
  %1021 = vmatprep.subr.mxu0 0.0
  %1022 = vmatpush1.msra.mxu0 0.0
  %1023 = vmatprep.subr.mxu0 0.0
  %1024 = vmatpush1.msra.mxu0 0.0
  %1025 = vmatprep.subr.mxu0 0.0
  %1026 = vmatpush1.msra.mxu0 0.0
  %1027 = vmatprep.subr.mxu0 0.0
  %1028 = vmatpush1.msra.mxu0 0.0
  %1029 = vmatprep.subr.mxu0 0.0
  %1030 = vmatpush1.msra.mxu0 0.0
  %1031 = vmatprep.subr.mxu0 0.0
  %1032 = vmatpush1.msra.mxu0 0.0
  %1033 = vmatprep.mubr.f32.mxu0 0.0
  %1034 = vmatmul.mubr.f32.gmra.mrb[0].mxu0 %v964
  %v1035 = vpop.f32.mrb[0].mxu0
  %v1036 = vadd.f32 0.0, %v1035
  %v1037 = vpop.f32.mrb[0].mxu0
  %1038 = vmatprep.mubr.f32.mxu0 0.0
  %1039 = vmatmul.mubr.f32.gmra.mrb[0].mxu0 %v967
  %v1040 = vpop.f32.mrb[0].mxu0
  %v1041 = vadd.f32 0.0, %v1040
  %v1042 = vpop.f32.mrb[0].mxu0
  %1043 = vdwg.mxu0
  %1044 = vrot.lane.b32.xlu0 %v263, 104
  %v1045 = vpop.permute.xlu0 %1044
  %1046 = vrot.lane.b32.xlu0 %v268, 104
  %v1047 = vpop.permute.xlu0 %1046
  %1048 = vrot.lane.b32.xlu0 %v347, 104
  %v1049 = vpop.permute.xlu0 %1048
  %1050 = vrot.lane.b32.xlu0 %v352, 104
  %v1051 = vpop.permute.xlu0 %1050
  %v1052 = vsel %vm438, %v1045, 0
  %v1054 = vsel %vm438, %v1047, 0
  %v1056 = vsel %vm438, %v1049, 0
  %v1058 = vsel %vm438, %v1051, 0
  %1060 = vmatprep.subr.mxu0 0.0
  %1061 = vmatpush1.xpose.msra.mxu0 %v1056
  %1062 = vmatprep.subr.mxu0 0.0
  %1063 = vmatpush1.xpose.msra.mxu0 %v1058
  %1064 = vmatprep.subr.mxu0 0.0
  %1065 = vmatpush1.xpose.msra.mxu0 0.0
  %1066 = vmatprep.subr.mxu0 0.0
  %1067 = vmatpush1.xpose.msra.mxu0 0.0
  %1068 = vmatprep.subr.mxu0 0.0
  %1069 = vmatpush1.xpose.msra.mxu0 0.0
  %1070 = vmatprep.subr.mxu0 0.0
  %1071 = vmatpush1.xpose.msra.mxu0 0.0
  %1072 = vmatprep.subr.mxu0 0.0
  %1073 = vmatpush1.xpose.msra.mxu0 0.0
  %1074 = vmatprep.subr.mxu0 0.0
  %1075 = vmatpush1.xpose.msra.mxu0 0.0
  %1076 = vmatprep.subr.mxu0 0.0
  %1077 = vmatpush1.xpose.msra.mxu0 0.0
  %1078 = vmatprep.subr.mxu0 0.0
  %1079 = vmatpush1.xpose.msra.mxu0 0.0
  %1080 = vmatprep.subr.mxu0 0.0
  %1081 = vmatpush1.xpose.msra.mxu0 0.0
  %1082 = vmatprep.subr.mxu0 0.0
  %1083 = vmatpush1.xpose.msra.mxu0 0.0
  %1084 = vmatprep.subr.mxu0 0.0
  %1085 = vmatpush1.xpose.msra.mxu0 0.0
  %1086 = vmatprep.subr.mxu0 0.0
  %1087 = vmatpush1.xpose.msra.mxu0 0.0
  %1088 = vmatprep.subr.mxu0 0.0
  %1089 = vmatpush1.xpose.msra.mxu0 0.0
  %1090 = vmatprep.subr.mxu0 0.0
  %1091 = vmatpush1.xpose.msra.mxu0 0.0
  %1092 = vmatprep.subr.mxu0 0.0
  %1093 = vmatpush1.xpose.msra.mxu0 0.0
  %1094 = vmatprep.subr.mxu0 0.0
  %1095 = vmatpush1.xpose.msra.mxu0 0.0
  %1096 = vmatprep.subr.mxu0 0.0
  %1097 = vmatpush1.xpose.msra.mxu0 0.0
  %1098 = vmatprep.subr.mxu0 0.0
  %1099 = vmatpush1.xpose.msra.mxu0 0.0
  %1100 = vmatprep.subr.mxu0 0.0
  %1101 = vmatpush1.xpose.msra.mxu0 0.0
  %1102 = vmatprep.subr.mxu0 0.0
  %1103 = vmatpush1.xpose.msra.mxu0 0.0
  %1104 = vmatprep.subr.mxu0 0.0
  %1105 = vmatpush1.xpose.msra.mxu0 0.0
  %1106 = vmatprep.subr.mxu0 0.0
  %1107 = vmatpush1.xpose.msra.mxu0 0.0
  %1108 = vmatprep.subr.mxu0 0.0
  %1109 = vmatpush1.xpose.msra.mxu0 0.0
  %1110 = vmatprep.subr.mxu0 0.0
  %1111 = vmatpush1.xpose.msra.mxu0 0.0
  %1112 = vmatprep.subr.mxu0 0.0
  %1113 = vmatpush1.xpose.msra.mxu0 0.0
  %1114 = vmatprep.subr.mxu0 0.0
  %1115 = vmatpush1.xpose.msra.mxu0 0.0
  %1116 = vmatprep.subr.mxu0 0.0
  %1117 = vmatpush1.xpose.msra.mxu0 0.0
  %1118 = vmatprep.subr.mxu0 0.0
  %1119 = vmatpush1.xpose.msra.mxu0 0.0
  %1120 = vmatprep.subr.mxu0 0.0
  %1121 = vmatpush1.xpose.msra.mxu0 0.0
  %1122 = vmatprep.subr.mxu0 0.0
  %1123 = vmatpush1.xpose.msra.mxu0 0.0
  %1124 = vmatprep.mubr.f32.mxu0 0.0
  %1125 = vmatmul.mubr.f32.gmra.mrb[0].mxu0 %v1052
  %v1126 = vpop.f32.mrb[0].mxu0
  %v1127 = vadd.f32 0.0, %v1126
  %v1128 = vpop.f32.mrb[0].mxu0
  %1129 = vmatprep.mubr.f32.mxu0 0.0
  %1130 = vmatmul.mubr.f32.gmra.mrb[0].mxu0 %v1054
  %v1131 = vpop.f32.mrb[0].mxu0
  %v1132 = vadd.f32 0.0, %v1131
  %v1133 = vpop.f32.mrb[0].mxu0
  %1134 = vdwg.mxu0
  %v1135 = vmul.f32 %v1127, 0.35355338
  %v1136 = vmul.f32 %v1132, 0.35355338
  %v1137 = vadd.f32 %v1135, %v139
  %v1138 = vadd.f32 %v1136, %v140
  %v1139 = vsel %vm530, %v1137, -inf
  %1140 = vmax.xlane.f32.xlu0 %v1139
  %v1141 = vpop.xlane.xlu0 %1140
  %v1142 = vsel %vm530, %v1138, -inf
  %1143 = vmax.xlane.f32.xlu0 %v1142
  %v1144 = vpop.xlane.xlu0 %1143
  %v1145 = vsub.f32 %v1137, %v1141
  %v1146 = vsub.f32 %v1138, %v1144
  %v1147 = vmul.f32 %v1145, 1.442695
  %v1148 = vpow.pop %v1147
  %v1149 = vmul.f32 %v1146, 1.442695
  %v1150 = vpow.pop %v1149
  %v1151 = vsel %vm530, %v1148, 0.0
  %1152 = vadd.xlane.f32.xlu0 %v1151
  %v1153 = vpop.xlane.xlu0 %1152
  %v1154 = vsel %vm530, %v1150, 0.0
  %1155 = vadd.xlane.f32.xlu0 %v1154
  %v1156 = vpop.xlane.xlu0 %1155
  %v1157 = vrcp.pop %v1153
  %v1158 = vrcp.pop %v1156
  %v1159 = vmul.f32 %v1148, %v1157
  %v1160 = vmul.f32 %v1150, %v1158
  %1161 = vrot.lane.b32.xlu0 %v430, 104
  %v1162 = vpop.permute.xlu0 %1161
  %1163 = vrot.lane.b32.xlu0 %v435, 104
  %v1164 = vpop.permute.xlu0 %1163
  %v1168 = vsel %vm530, %v1159, 0
  %v1171 = vsel %vm530, %v1160, 0
  %1173 = vmatprep.subr.mxu0 0.0
  %1174 = vmatpush1.msra.mxu0 %v1162
  %1175 = vmatprep.subr.mxu0 0.0
  %1176 = vmatpush1.msra.mxu0 %v1164
  %1177 = vmatprep.subr.mxu0 0.0
  %1178 = vmatpush1.msra.mxu0 0.0
  %1179 = vmatprep.subr.mxu0 0.0
  %1180 = vmatpush1.msra.mxu0 0.0
  %1181 = vmatprep.subr.mxu0 0.0
  %1182 = vmatpush1.msra.mxu0 0.0
  %1183 = vmatprep.subr.mxu0 0.0
  %1184 = vmatpush1.msra.mxu0 0.0
  %1185 = vmatprep.subr.mxu0 0.0
  %1186 = vmatpush1.msra.mxu0 0.0
  %1187 = vmatprep.subr.mxu0 0.0
  %1188 = vmatpush1.msra.mxu0 0.0
  %1189 = vmatprep.subr.mxu0 0.0
  %1190 = vmatpush1.msra.mxu0 0.0
  %1191 = vmatprep.subr.mxu0 0.0
  %1192 = vmatpush1.msra.mxu0 0.0
  %1193 = vmatprep.subr.mxu0 0.0
  %1194 = vmatpush1.msra.mxu0 0.0
  %1195 = vmatprep.subr.mxu0 0.0
  %1196 = vmatpush1.msra.mxu0 0.0
  %1197 = vmatprep.subr.mxu0 0.0
  %1198 = vmatpush1.msra.mxu0 0.0
  %1199 = vmatprep.subr.mxu0 0.0
  %1200 = vmatpush1.msra.mxu0 0.0
  %1201 = vmatprep.subr.mxu0 0.0
  %1202 = vmatpush1.msra.mxu0 0.0
  %1203 = vmatprep.subr.mxu0 0.0
  %1204 = vmatpush1.msra.mxu0 0.0
  %1205 = vmatprep.subr.mxu0 0.0
  %1206 = vmatpush1.msra.mxu0 0.0
  %1207 = vmatprep.subr.mxu0 0.0
  %1208 = vmatpush1.msra.mxu0 0.0
  %1209 = vmatprep.subr.mxu0 0.0
  %1210 = vmatpush1.msra.mxu0 0.0
  %1211 = vmatprep.subr.mxu0 0.0
  %1212 = vmatpush1.msra.mxu0 0.0
  %1213 = vmatprep.subr.mxu0 0.0
  %1214 = vmatpush1.msra.mxu0 0.0
  %1215 = vmatprep.subr.mxu0 0.0
  %1216 = vmatpush1.msra.mxu0 0.0
  %1217 = vmatprep.subr.mxu0 0.0
  %1218 = vmatpush1.msra.mxu0 0.0
  %1219 = vmatprep.subr.mxu0 0.0
  %1220 = vmatpush1.msra.mxu0 0.0
  %1221 = vmatprep.subr.mxu0 0.0
  %1222 = vmatpush1.msra.mxu0 0.0
  %1223 = vmatprep.subr.mxu0 0.0
  %1224 = vmatpush1.msra.mxu0 0.0
  %1225 = vmatprep.subr.mxu0 0.0
  %1226 = vmatpush1.msra.mxu0 0.0
  %1227 = vmatprep.subr.mxu0 0.0
  %1228 = vmatpush1.msra.mxu0 0.0
  %1229 = vmatprep.subr.mxu0 0.0
  %1230 = vmatpush1.msra.mxu0 0.0
  %1231 = vmatprep.subr.mxu0 0.0
  %1232 = vmatpush1.msra.mxu0 0.0
  %1233 = vmatprep.subr.mxu0 0.0
  %1234 = vmatpush1.msra.mxu0 0.0
  %1235 = vmatprep.subr.mxu0 0.0
  %1236 = vmatpush1.msra.mxu0 0.0
  %1237 = vmatprep.mubr.f32.mxu0 0.0
  %1238 = vmatmul.mubr.f32.gmra.mrb[0].mxu0 %v1168
  %v1239 = vpop.f32.mrb[0].mxu0
  %v1240 = vadd.f32 0.0, %v1239
  %v1241 = vpop.f32.mrb[0].mxu0
  %1242 = vmatprep.mubr.f32.mxu0 0.0
  %1243 = vmatmul.mubr.f32.gmra.mrb[0].mxu0 %v1171
  %v1244 = vpop.f32.mrb[0].mxu0
  %v1245 = vadd.f32 0.0, %v1244
  %v1246 = vpop.f32.mrb[0].mxu0
  %1247 = vdwg.mxu0
  %1250 = vrot.lane.b32.xlu0 %v832, 8
  %v1251 = vpop.permute.xlu0 %1250
  %1252 = vrot.lane.b32.xlu0 %v837, 8
  %v1253 = vpop.permute.xlu0 %1252
  %1258 = vrot.lane.b32.xlu0 %v1036, 16
  %v1259 = vpop.permute.xlu0 %1258
  %1260 = vrot.lane.b32.xlu0 %v1041, 16
  %v1261 = vpop.permute.xlu0 %1260
  %1266 = vrot.lane.b32.xlu0 %v1240, 24
  %v1267 = vpop.permute.xlu0 %1266
  %1268 = vrot.lane.b32.xlu0 %v1245, 24
  %v1269 = vpop.permute.xlu0 %1268
  %v1272 = vsel %vm438, %v626, %v1251
  %v1273 = vsel %vm438, %v631, %v1253
  %v1274 = vsel %vm530, %v1272, %v1259
  %v1275 = vsel %vm530, %v1273, %v1261
  %vm1276 = vcmask 195584
  %v1277 = vsel %vm1276, %v1274, %v1267
  %v1278 = vsel %vm1276, %v1275, %v1269
  %v1279 = vld [vmem:[%s5] sm:$0xff]
  %v1280 = vld [vmem:[%s5 + $0x8] sm:$0xff]
  %v1281 = vld [vmem:[%s5 + $0x10] sm:$0xff]
  %v1282 = vld [vmem:[%s5 + $0x18] sm:$0xff]
  %1283 = vrot.lane.b32.xlu0 %v189, 32
  %v1284 = vpop.permute.xlu0 %1283
  %v1287 = vsel %vm142, %v1277, 0
  %v1290 = vsel %vm142, %v1278, 0
  %1292 = vmatprep.subr.mxu0 0.0
  %1293 = vmatpush1.msra.mxu0 %v1279
  %1294 = vmatprep.subr.mxu0 0.0
  %1295 = vmatpush1.msra.mxu0 %v1280
  %1296 = vmatprep.subr.mxu0 0.0
  %1297 = vmatpush1.msra.mxu0 %v1281
  %1298 = vmatprep.subr.mxu0 0.0
  %1299 = vmatpush1.msra.mxu0 %v1282
  %1300 = vmatprep.subr.mxu0 0.0
  %1301 = vmatpush1.msra.mxu0 0.0
  %1302 = vmatprep.subr.mxu0 0.0
  %1303 = vmatpush1.msra.mxu0 0.0
  %1304 = vmatprep.subr.mxu0 0.0
  %1305 = vmatpush1.msra.mxu0 0.0
  %1306 = vmatprep.subr.mxu0 0.0
  %1307 = vmatpush1.msra.mxu0 0.0
  %1308 = vmatprep.subr.mxu0 0.0
  %1309 = vmatpush1.msra.mxu0 0.0
  %1310 = vmatprep.subr.mxu0 0.0
  %1311 = vmatpush1.msra.mxu0 0.0
  %1312 = vmatprep.subr.mxu0 0.0
  %1313 = vmatpush1.msra.mxu0 0.0
  %1314 = vmatprep.subr.mxu0 0.0
  %1315 = vmatpush1.msra.mxu0 0.0
  %1316 = vmatprep.subr.mxu0 0.0
  %1317 = vmatpush1.msra.mxu0 0.0
  %1318 = vmatprep.subr.mxu0 0.0
  %1319 = vmatpush1.msra.mxu0 0.0
  %1320 = vmatprep.subr.mxu0 0.0
  %1321 = vmatpush1.msra.mxu0 0.0
  %1322 = vmatprep.subr.mxu0 0.0
  %1323 = vmatpush1.msra.mxu0 0.0
  %1324 = vmatprep.subr.mxu0 0.0
  %1325 = vmatpush1.msra.mxu0 0.0
  %1326 = vmatprep.subr.mxu0 0.0
  %1327 = vmatpush1.msra.mxu0 0.0
  %1328 = vmatprep.subr.mxu0 0.0
  %1329 = vmatpush1.msra.mxu0 0.0
  %1330 = vmatprep.subr.mxu0 0.0
  %1331 = vmatpush1.msra.mxu0 0.0
  %1332 = vmatprep.subr.mxu0 0.0
  %1333 = vmatpush1.msra.mxu0 0.0
  %1334 = vmatprep.subr.mxu0 0.0
  %1335 = vmatpush1.msra.mxu0 0.0
  %1336 = vmatprep.subr.mxu0 0.0
  %1337 = vmatpush1.msra.mxu0 0.0
  %1338 = vmatprep.subr.mxu0 0.0
  %1339 = vmatpush1.msra.mxu0 0.0
  %1340 = vmatprep.subr.mxu0 0.0
  %1341 = vmatpush1.msra.mxu0 0.0
  %1342 = vmatprep.subr.mxu0 0.0
  %1343 = vmatpush1.msra.mxu0 0.0
  %1344 = vmatprep.subr.mxu0 0.0
  %1345 = vmatpush1.msra.mxu0 0.0
  %1346 = vmatprep.subr.mxu0 0.0
  %1347 = vmatpush1.msra.mxu0 0.0
  %1348 = vmatprep.subr.mxu0 0.0
  %1349 = vmatpush1.msra.mxu0 0.0
  %1350 = vmatprep.subr.mxu0 0.0
  %1351 = vmatpush1.msra.mxu0 0.0
  %1352 = vmatprep.subr.mxu0 0.0
  %1353 = vmatpush1.msra.mxu0 0.0
  %1354 = vmatprep.subr.mxu0 0.0
  %1355 = vmatpush1.msra.mxu0 0.0
  %1356 = vmatprep.mubr.f32.mxu0 0.0
  %1357 = vmatmul.mubr.f32.gmra.mrb[0].mxu0 %v1287
  %v1358 = vpop.f32.mrb[0].mxu0
  %v1359 = vadd.f32 %v1284, %v1358
  %v1360 = vpop.f32.mrb[0].mxu0
  %1361 = vmatprep.mubr.f32.mxu0 0.0
  %1362 = vmatmul.mubr.f32.gmra.mrb[0].mxu0 %v1290
  %v1363 = vpop.f32.mrb[0].mxu0
  %v1364 = vadd.f32 %v1284, %v1363
  %v1365 = vpop.f32.mrb[0].mxu0
  %1366 = vdwg.mxu0
  %v1367 = vadd.f32 %v131, %v1359
  %v1368 = vadd.f32 %v136, %v1364
  %v1369 = vsel %vm142, %v1367, 0.0
  %1370 = vadd.xlane.f32.xlu0 %v1369
  %v1371 = vpop.xlane.xlu0 %1370
  %v1372 = vsel %vm142, %v1368, 0.0
  %1373 = vadd.xlane.f32.xlu0 %v1372
  %v1374 = vpop.xlane.xlu0 %1373
  %v1375 = vmul.f32 %v1371, %v149
  %v1376 = vmul.f32 %v1374, %v149
  %v1377 = vsub.f32 %v1367, %v1375
  %v1378 = vsub.f32 %v1368, %v1376
  %v1379 = vmul.f32 %v1377, %v1377
  %v1380 = vmul.f32 %v1378, %v1378
  %v1381 = vsel %vm142, %v1379, 0.0
  %1382 = vadd.xlane.f32.xlu0 %v1381
  %v1383 = vpop.xlane.xlu0 %1382
  %v1384 = vsel %vm142, %v1380, 0.0
  %1385 = vadd.xlane.f32.xlu0 %v1384
  %v1386 = vpop.xlane.xlu0 %1385
  %v1387 = vmul.f32 %v1383, %v149
  %v1388 = vmul.f32 %v1386, %v149
  %v1389 = vadd.f32 %v1387, 1e-05
  %v1390 = vadd.f32 %v1388, 1e-05
  %v1391 = vrsqrt.pop %v1389
  %v1392 = vrsqrt.pop %v1390
  %v1393 = vmul.f32 %v1377, %v1391
  %v1394 = vmul.f32 %v1378, %v1392
  %1395 = vrot.lane.b32.xlu0 %v173, 64
  %v1396 = vpop.permute.xlu0 %1395
  %v1398 = vmul.f32 %v1393, %v1396
  %v1399 = vmul.f32 %v1394, %v1396
  %1400 = vrot.lane.b32.xlu0 %v173, 32
  %v1401 = vpop.permute.xlu0 %1400
  %v1403 = vadd.f32 %v1398, %v1401
  %v1404 = vadd.f32 %v1399, %v1401
  %v1405 = vld [vmem:[%s6] sm:$0xff]
  %v1406 = vld [vmem:[%s6 + $0x8] sm:$0xff]
  %v1407 = vld [vmem:[%s6 + $0x10] sm:$0xff]
  %v1408 = vld [vmem:[%s6 + $0x18] sm:$0xff]
  %v1409 = vlaneseq
  %v1410 = vshrl.u32 %v1409, 7
  %v1411 = vsub.s32 2, %v1410
  %v1412 = vrot.slane %v141, %v1411
  %v1414 = vsel %vm142, %v1403, 0
  %v1417 = vsel %vm142, %v1404, 0
  %1419 = vmatprep.subr.mxu0 0.0
  %1420 = vmatpush1.msra.mxu0 %v1405
  %1421 = vmatprep.subr.mxu0 0.0
  %1422 = vmatpush1.msra.mxu0 %v1406
  %1423 = vmatprep.subr.mxu0 0.0
  %1424 = vmatpush1.msra.mxu0 %v1407
  %1425 = vmatprep.subr.mxu0 0.0
  %1426 = vmatpush1.msra.mxu0 %v1408
  %1427 = vmatprep.subr.mxu0 0.0
  %1428 = vmatpush1.msra.mxu0 0.0
  %1429 = vmatprep.subr.mxu0 0.0
  %1430 = vmatpush1.msra.mxu0 0.0
  %1431 = vmatprep.subr.mxu0 0.0
  %1432 = vmatpush1.msra.mxu0 0.0
  %1433 = vmatprep.subr.mxu0 0.0
  %1434 = vmatpush1.msra.mxu0 0.0
  %1435 = vmatprep.subr.mxu0 0.0
  %1436 = vmatpush1.msra.mxu0 0.0
  %1437 = vmatprep.subr.mxu0 0.0
  %1438 = vmatpush1.msra.mxu0 0.0
  %1439 = vmatprep.subr.mxu0 0.0
  %1440 = vmatpush1.msra.mxu0 0.0
  %1441 = vmatprep.subr.mxu0 0.0
  %1442 = vmatpush1.msra.mxu0 0.0
  %1443 = vmatprep.subr.mxu0 0.0
  %1444 = vmatpush1.msra.mxu0 0.0
  %1445 = vmatprep.subr.mxu0 0.0
  %1446 = vmatpush1.msra.mxu0 0.0
  %1447 = vmatprep.subr.mxu0 0.0
  %1448 = vmatpush1.msra.mxu0 0.0
  %1449 = vmatprep.subr.mxu0 0.0
  %1450 = vmatpush1.msra.mxu0 0.0
  %1451 = vmatprep.subr.mxu0 0.0
  %1452 = vmatpush1.msra.mxu0 0.0
  %1453 = vmatprep.subr.mxu0 0.0
  %1454 = vmatpush1.msra.mxu0 0.0
  %1455 = vmatprep.subr.mxu0 0.0
  %1456 = vmatpush1.msra.mxu0 0.0
  %1457 = vmatprep.subr.mxu0 0.0
  %1458 = vmatpush1.msra.mxu0 0.0
  %1459 = vmatprep.subr.mxu0 0.0
  %1460 = vmatpush1.msra.mxu0 0.0
  %1461 = vmatprep.subr.mxu0 0.0
  %1462 = vmatpush1.msra.mxu0 0.0
  %1463 = vmatprep.subr.mxu0 0.0
  %1464 = vmatpush1.msra.mxu0 0.0
  %1465 = vmatprep.subr.mxu0 0.0
  %1466 = vmatpush1.msra.mxu0 0.0
  %1467 = vmatprep.subr.mxu0 0.0
  %1468 = vmatpush1.msra.mxu0 0.0
  %1469 = vmatprep.subr.mxu0 0.0
  %1470 = vmatpush1.msra.mxu0 0.0
  %1471 = vmatprep.subr.mxu0 0.0
  %1472 = vmatpush1.msra.mxu0 0.0
  %1473 = vmatprep.subr.mxu0 0.0
  %1474 = vmatpush1.msra.mxu0 0.0
  %1475 = vmatprep.subr.mxu0 0.0
  %1476 = vmatpush1.msra.mxu0 0.0
  %1477 = vmatprep.subr.mxu0 0.0
  %1478 = vmatpush1.msra.mxu0 0.0
  %1479 = vmatprep.subr.mxu0 0.0
  %1480 = vmatpush1.msra.mxu0 0.0
  %1481 = vmatprep.subr.mxu0 0.0
  %1482 = vmatpush1.msra.mxu0 0.0
  %1483 = vmatprep.mubr.f32.mxu0 0.0
  %1484 = vmatmul.mubr.f32.gmra.mrb[0].mxu0 %v1414
  %v1485 = vpop.f32.mrb[0].mxu0
  %v1486 = vadd.f32 %v1412, %v1485
  %v1487 = vpop.f32.mrb[0].mxu0
  %1488 = vmatprep.mubr.f32.mxu0 0.0
  %1489 = vmatmul.mubr.f32.gmra.mrb[0].mxu0 %v1417
  %v1490 = vpop.f32.mrb[0].mxu0
  %v1491 = vadd.f32 %v1412, %v1490
  %v1492 = vpop.f32.mrb[0].mxu0
  %1493 = vdwg.mxu0
  %v1494 = vmul.f32 %v1486, 0.5
  %v1495 = vmul.f32 %v1491, 0.5
  %v1496 = vmul.f32 %v1486, 0.044715
  %v1497 = vmul.f32 %v1491, 0.044715
  %v1498 = vmul.f32 %v1496, %v1486
  %v1499 = vmul.f32 %v1497, %v1491
  %v1500 = vmul.f32 %v1498, %v1486
  %v1501 = vmul.f32 %v1499, %v1491
  %v1502 = vadd.f32 %v1486, %v1500
  %v1503 = vadd.f32 %v1491, %v1501
  %v1504 = vmul.f32 %v1502, 0.7978846
  %v1505 = vmul.f32 %v1503, 0.7978846
  %v1506 = vtanh.pop %v1504
  %v1507 = vtanh.pop %v1505
  %v1508 = vadd.f32 %v1506, 1.0
  %v1509 = vadd.f32 %v1507, 1.0
  %v1510 = vmul.f32 %v1494, %v1508
  %v1511 = vmul.f32 %v1495, %v1509
  %v1512 = vld [vmem:[%s7] sm:$0xff]
  %v1513 = vld [vmem:[%s7 + $0x8] sm:$0xff]
  %v1514 = vld [vmem:[%s7 + $0x10] sm:$0xff]
  %v1515 = vld [vmem:[%s7 + $0x18] sm:$0xff]
  %v1516 = vld [vmem:[%s7 + $0x20] sm:$0xff]
  %v1517 = vld [vmem:[%s7 + $0x28] sm:$0xff]
  %v1518 = vld [vmem:[%s7 + $0x30] sm:$0xff]
  %v1519 = vld [vmem:[%s7 + $0x38] sm:$0xff]
  %v1520 = vld [vmem:[%s7 + $0x40] sm:$0xff]
  %v1521 = vld [vmem:[%s7 + $0x48] sm:$0xff]
  %v1522 = vld [vmem:[%s7 + $0x50] sm:$0xff]
  %v1523 = vld [vmem:[%s7 + $0x58] sm:$0xff]
  %v1524 = vld [vmem:[%s7 + $0x60] sm:$0xff]
  %v1525 = vld [vmem:[%s7 + $0x68] sm:$0xff]
  %v1526 = vld [vmem:[%s7 + $0x70] sm:$0xff]
  %v1527 = vld [vmem:[%s7 + $0x78] sm:$0xff]
  %v1528 = vlaneseq
  %v1529 = vshrl.u32 %v1528, 7
  %v1530 = vsub.s32 3, %v1529
  %v1531 = vrot.slane %v141, %v1530
  %1532 = vmatprep.subr.mxu0 0.0
  %1533 = vmatpush1.msra.mxu0 %v1512
  %1534 = vmatprep.subr.mxu0 0.0
  %1535 = vmatpush1.msra.mxu0 %v1513
  %1536 = vmatprep.subr.mxu0 0.0
  %1537 = vmatpush1.msra.mxu0 %v1514
  %1538 = vmatprep.subr.mxu0 0.0
  %1539 = vmatpush1.msra.mxu0 %v1515
  %1540 = vmatprep.subr.mxu0 0.0
  %1541 = vmatpush1.msra.mxu0 %v1516
  %1542 = vmatprep.subr.mxu0 0.0
  %1543 = vmatpush1.msra.mxu0 %v1517
  %1544 = vmatprep.subr.mxu0 0.0
  %1545 = vmatpush1.msra.mxu0 %v1518
  %1546 = vmatprep.subr.mxu0 0.0
  %1547 = vmatpush1.msra.mxu0 %v1519
  %1548 = vmatprep.subr.mxu0 0.0
  %1549 = vmatpush1.msra.mxu0 %v1520
  %1550 = vmatprep.subr.mxu0 0.0
  %1551 = vmatpush1.msra.mxu0 %v1521
  %1552 = vmatprep.subr.mxu0 0.0
  %1553 = vmatpush1.msra.mxu0 %v1522
  %1554 = vmatprep.subr.mxu0 0.0
  %1555 = vmatpush1.msra.mxu0 %v1523
  %1556 = vmatprep.subr.mxu0 0.0
  %1557 = vmatpush1.msra.mxu0 %v1524
  %1558 = vmatprep.subr.mxu0 0.0
  %1559 = vmatpush1.msra.mxu0 %v1525
  %1560 = vmatprep.subr.mxu0 0.0
  %1561 = vmatpush1.msra.mxu0 %v1526
  %1562 = vmatprep.subr.mxu0 0.0
  %1563 = vmatpush1.msra.mxu0 %v1527
  %1564 = vmatprep.subr.mxu0 0.0
  %1565 = vmatpush1.msra.mxu0 0.0
  %1566 = vmatprep.subr.mxu0 0.0
  %1567 = vmatpush1.msra.mxu0 0.0
  %1568 = vmatprep.subr.mxu0 0.0
  %1569 = vmatpush1.msra.mxu0 0.0
  %1570 = vmatprep.subr.mxu0 0.0
  %1571 = vmatpush1.msra.mxu0 0.0
  %1572 = vmatprep.subr.mxu0 0.0
  %1573 = vmatpush1.msra.mxu0 0.0
  %1574 = vmatprep.subr.mxu0 0.0
  %1575 = vmatpush1.msra.mxu0 0.0
  %1576 = vmatprep.subr.mxu0 0.0
  %1577 = vmatpush1.msra.mxu0 0.0
  %1578 = vmatprep.subr.mxu0 0.0
  %1579 = vmatpush1.msra.mxu0 0.0
  %1580 = vmatprep.subr.mxu0 0.0
  %1581 = vmatpush1.msra.mxu0 0.0
  %1582 = vmatprep.subr.mxu0 0.0
  %1583 = vmatpush1.msra.mxu0 0.0
  %1584 = vmatprep.subr.mxu0 0.0
  %1585 = vmatpush1.msra.mxu0 0.0
  %1586 = vmatprep.subr.mxu0 0.0
  %1587 = vmatpush1.msra.mxu0 0.0
  %1588 = vmatprep.subr.mxu0 0.0
  %1589 = vmatpush1.msra.mxu0 0.0
  %1590 = vmatprep.subr.mxu0 0.0
  %1591 = vmatpush1.msra.mxu0 0.0
  %1592 = vmatprep.subr.mxu0 0.0
  %1593 = vmatpush1.msra.mxu0 0.0
  %1594 = vmatprep.subr.mxu0 0.0
  %1595 = vmatpush1.msra.mxu0 0.0
  %1596 = vmatprep.mubr.f32.mxu0 0.0
  %1597 = vmatmul.mubr.f32.gmra.mrb[0].mxu0 %v1510
  %v1598 = vpop.f32.mrb[0].mxu0
  %v1599 = vadd.f32 %v1531, %v1598
  %v1600 = vpop.f32.mrb[0].mxu0
  %1601 = vmatprep.mubr.f32.mxu0 0.0
  %1602 = vmatmul.mubr.f32.gmra.mrb[0].mxu0 %v1511
  %v1603 = vpop.f32.mrb[0].mxu0
  %v1604 = vadd.f32 %v1531, %v1603
  %v1605 = vpop.f32.mrb[0].mxu0
  %1606 = vdwg.mxu0
  %v1607 = vadd.f32 %v1367, %v1599
  %v1608 = vadd.f32 %v1368, %v1604
  %s1609 = scalar_lea.vmem %s8, 4
  %v1610 = vld [vmem:[%s1609] sm:$0xf]
  %v1611 = vsel %vm142, %v1607, 0.0
  %1612 = vadd.xlane.f32.xlu0 %v1611
  %v1613 = vpop.xlane.xlu0 %1612
  %v1614 = vsel %vm142, %v1608, 0.0
  %1615 = vadd.xlane.f32.xlu0 %v1614
  %v1616 = vpop.xlane.xlu0 %1615
  %v1617 = vmul.f32 %v1613, %v149
  %v1618 = vmul.f32 %v1616, %v149
  %v1619 = vsub.f32 %v1607, %v1617
  %v1620 = vsub.f32 %v1608, %v1618
  %v1621 = vmul.f32 %v1619, %v1619
  %v1622 = vmul.f32 %v1620, %v1620
  %v1623 = vsel %vm142, %v1621, 0.0
  %1624 = vadd.xlane.f32.xlu0 %v1623
  %v1625 = vpop.xlane.xlu0 %1624
  %v1626 = vsel %vm142, %v1622, 0.0
  %1627 = vadd.xlane.f32.xlu0 %v1626
  %v1628 = vpop.xlane.xlu0 %1627
  %v1629 = vmul.f32 %v1625, %v149
  %v1630 = vmul.f32 %v1628, %v149
  %v1631 = vadd.f32 %v1629, 1e-05
  %v1632 = vadd.f32 %v1630, 1e-05
  %v1633 = vrsqrt.pop %v1631
  %v1634 = vrsqrt.pop %v1632
  %v1635 = vmul.f32 %v1619, %v1633
  %v1636 = vmul.f32 %v1620, %v1634
  %v1637 = vlaneseq
  %v1638 = vshrl.u32 %v1637, 7
  %v1639 = vsub.s32 0, %v1638
  %v1640 = vrot.slane %v1610, %v1639
  %v1641 = vmul.f32 %v1635, %v1640
  %v1642 = vmul.f32 %v1636, %v1640
  %1644 = vrot.lane.b32.xlu0 %v1640, 96
  %v1645 = vpop.permute.xlu0 %1644
  %v1647 = vadd.f32 %v1641, %v1645
  %v1648 = vadd.f32 %v1642, %v1645
  %s1649 = scalar_lea.vmem %s4, 96
  %v1650 = vld [vmem:[%s1649] sm:$0xff]
  %v1651 = vld [vmem:[%s1649 + $0x8] sm:$0xff]
  %v1652 = vld [vmem:[%s1649 + $0x10] sm:$0xff]
  %v1653 = vld [vmem:[%s1649 + $0x18] sm:$0xff]
  %v1654 = vlaneseq
  %v1655 = vshrl.u32 %v1654, 7
  %v1656 = vsub.s32 1, %v1655
  %v1657 = vrot.slane %v1610, %v1656
  %v1659 = vsel %vm142, %v1647, 0
  %v1662 = vsel %vm142, %v1648, 0
  %1664 = vmatprep.subr.mxu0 0.0
  %1665 = vmatpush1.msra.mxu0 %v1650
  %1666 = vmatprep.subr.mxu0 0.0
  %1667 = vmatpush1.msra.mxu0 %v1651
  %1668 = vmatprep.subr.mxu0 0.0
  %1669 = vmatpush1.msra.mxu0 %v1652
  %1670 = vmatprep.subr.mxu0 0.0
  %1671 = vmatpush1.msra.mxu0 %v1653
  %1672 = vmatprep.subr.mxu0 0.0
  %1673 = vmatpush1.msra.mxu0 0.0
  %1674 = vmatprep.subr.mxu0 0.0
  %1675 = vmatpush1.msra.mxu0 0.0
  %1676 = vmatprep.subr.mxu0 0.0
  %1677 = vmatpush1.msra.mxu0 0.0
  %1678 = vmatprep.subr.mxu0 0.0
  %1679 = vmatpush1.msra.mxu0 0.0
  %1680 = vmatprep.subr.mxu0 0.0
  %1681 = vmatpush1.msra.mxu0 0.0
  %1682 = vmatprep.subr.mxu0 0.0
  %1683 = vmatpush1.msra.mxu0 0.0
  %1684 = vmatprep.subr.mxu0 0.0
  %1685 = vmatpush1.msra.mxu0 0.0
  %1686 = vmatprep.subr.mxu0 0.0
  %1687 = vmatpush1.msra.mxu0 0.0
  %1688 = vmatprep.subr.mxu0 0.0
  %1689 = vmatpush1.msra.mxu0 0.0
  %1690 = vmatprep.subr.mxu0 0.0
  %1691 = vmatpush1.msra.mxu0 0.0
  %1692 = vmatprep.subr.mxu0 0.0
  %1693 = vmatpush1.msra.mxu0 0.0
  %1694 = vmatprep.subr.mxu0 0.0
  %1695 = vmatpush1.msra.mxu0 0.0
  %1696 = vmatprep.subr.mxu0 0.0
  %1697 = vmatpush1.msra.mxu0 0.0
  %1698 = vmatprep.subr.mxu0 0.0
  %1699 = vmatpush1.msra.mxu0 0.0
  %1700 = vmatprep.subr.mxu0 0.0
  %1701 = vmatpush1.msra.mxu0 0.0
  %1702 = vmatprep.subr.mxu0 0.0
  %1703 = vmatpush1.msra.mxu0 0.0
  %1704 = vmatprep.subr.mxu0 0.0
  %1705 = vmatpush1.msra.mxu0 0.0
  %1706 = vmatprep.subr.mxu0 0.0
  %1707 = vmatpush1.msra.mxu0 0.0
  %1708 = vmatprep.subr.mxu0 0.0
  %1709 = vmatpush1.msra.mxu0 0.0
  %1710 = vmatprep.subr.mxu0 0.0
  %1711 = vmatpush1.msra.mxu0 0.0
  %1712 = vmatprep.subr.mxu0 0.0
  %1713 = vmatpush1.msra.mxu0 0.0
  %1714 = vmatprep.subr.mxu0 0.0
  %1715 = vmatpush1.msra.mxu0 0.0
  %1716 = vmatprep.subr.mxu0 0.0
  %1717 = vmatpush1.msra.mxu0 0.0
  %1718 = vmatprep.subr.mxu0 0.0
  %1719 = vmatpush1.msra.mxu0 0.0
  %1720 = vmatprep.subr.mxu0 0.0
  %1721 = vmatpush1.msra.mxu0 0.0
  %1722 = vmatprep.subr.mxu0 0.0
  %1723 = vmatpush1.msra.mxu0 0.0
  %1724 = vmatprep.subr.mxu0 0.0
  %1725 = vmatpush1.msra.mxu0 0.0
  %1726 = vmatprep.subr.mxu0 0.0
  %1727 = vmatpush1.msra.mxu0 0.0
  %1728 = vmatprep.mubr.f32.mxu0 0.0
  %1729 = vmatmul.mubr.f32.gmra.mrb[0].mxu0 %v1659
  %v1730 = vpop.f32.mrb[0].mxu0
  %v1731 = vadd.f32 %v1657, %v1730
  %v1732 = vpop.f32.mrb[0].mxu0
  %1733 = vmatprep.mubr.f32.mxu0 0.0
  %1734 = vmatmul.mubr.f32.gmra.mrb[0].mxu0 %v1662
  %v1735 = vpop.f32.mrb[0].mxu0
  %v1736 = vadd.f32 %v1657, %v1735
  %v1737 = vpop.f32.mrb[0].mxu0
  %1738 = vdwg.mxu0
  %s1739 = scalar_lea.vmem %s4, 128
  %v1740 = vld [vmem:[%s1739] sm:$0xff]
  %v1741 = vld [vmem:[%s1739 + $0x8] sm:$0xff]
  %v1742 = vld [vmem:[%s1739 + $0x10] sm:$0xff]
  %v1743 = vld [vmem:[%s1739 + $0x18] sm:$0xff]
  %1745 = vrot.lane.b32.xlu0 %v1657, 96
  %v1746 = vpop.permute.xlu0 %1745
  %1748 = vmatprep.subr.mxu0 0.0
  %1749 = vmatpush1.msra.mxu0 %v1740
  %1750 = vmatprep.subr.mxu0 0.0
  %1751 = vmatpush1.msra.mxu0 %v1741
  %1752 = vmatprep.subr.mxu0 0.0
  %1753 = vmatpush1.msra.mxu0 %v1742
  %1754 = vmatprep.subr.mxu0 0.0
  %1755 = vmatpush1.msra.mxu0 %v1743
  %1756 = vmatprep.subr.mxu0 0.0
  %1757 = vmatpush1.msra.mxu0 0.0
  %1758 = vmatprep.subr.mxu0 0.0
  %1759 = vmatpush1.msra.mxu0 0.0
  %1760 = vmatprep.subr.mxu0 0.0
  %1761 = vmatpush1.msra.mxu0 0.0
  %1762 = vmatprep.subr.mxu0 0.0
  %1763 = vmatpush1.msra.mxu0 0.0
  %1764 = vmatprep.subr.mxu0 0.0
  %1765 = vmatpush1.msra.mxu0 0.0
  %1766 = vmatprep.subr.mxu0 0.0
  %1767 = vmatpush1.msra.mxu0 0.0
  %1768 = vmatprep.subr.mxu0 0.0
  %1769 = vmatpush1.msra.mxu0 0.0
  %1770 = vmatprep.subr.mxu0 0.0
  %1771 = vmatpush1.msra.mxu0 0.0
  %1772 = vmatprep.subr.mxu0 0.0
  %1773 = vmatpush1.msra.mxu0 0.0
  %1774 = vmatprep.subr.mxu0 0.0
  %1775 = vmatpush1.msra.mxu0 0.0
  %1776 = vmatprep.subr.mxu0 0.0
  %1777 = vmatpush1.msra.mxu0 0.0
  %1778 = vmatprep.subr.mxu0 0.0
  %1779 = vmatpush1.msra.mxu0 0.0
  %1780 = vmatprep.subr.mxu0 0.0
  %1781 = vmatpush1.msra.mxu0 0.0
  %1782 = vmatprep.subr.mxu0 0.0
  %1783 = vmatpush1.msra.mxu0 0.0
  %1784 = vmatprep.subr.mxu0 0.0
  %1785 = vmatpush1.msra.mxu0 0.0
  %1786 = vmatprep.subr.mxu0 0.0
  %1787 = vmatpush1.msra.mxu0 0.0
  %1788 = vmatprep.subr.mxu0 0.0
  %1789 = vmatpush1.msra.mxu0 0.0
  %1790 = vmatprep.subr.mxu0 0.0
  %1791 = vmatpush1.msra.mxu0 0.0
  %1792 = vmatprep.subr.mxu0 0.0
  %1793 = vmatpush1.msra.mxu0 0.0
  %1794 = vmatprep.subr.mxu0 0.0
  %1795 = vmatpush1.msra.mxu0 0.0
  %1796 = vmatprep.subr.mxu0 0.0
  %1797 = vmatpush1.msra.mxu0 0.0
  %1798 = vmatprep.subr.mxu0 0.0
  %1799 = vmatpush1.msra.mxu0 0.0
  %1800 = vmatprep.subr.mxu0 0.0
  %1801 = vmatpush1.msra.mxu0 0.0
  %1802 = vmatprep.subr.mxu0 0.0
  %1803 = vmatpush1.msra.mxu0 0.0
  %1804 = vmatprep.subr.mxu0 0.0
  %1805 = vmatpush1.msra.mxu0 0.0
  %1806 = vmatprep.subr.mxu0 0.0
  %1807 = vmatpush1.msra.mxu0 0.0
  %1808 = vmatprep.subr.mxu0 0.0
  %1809 = vmatpush1.msra.mxu0 0.0
  %1810 = vmatprep.subr.mxu0 0.0
  %1811 = vmatpush1.msra.mxu0 0.0
  %1812 = vmatprep.mubr.f32.mxu0 0.0
  %1813 = vmatmul.mubr.f32.gmra.mrb[0].mxu0 %v1659
  %v1814 = vpop.f32.mrb[0].mxu0
  %v1815 = vadd.f32 %v1746, %v1814
  %v1816 = vpop.f32.mrb[0].mxu0
  %1817 = vmatprep.mubr.f32.mxu0 0.0
  %1818 = vmatmul.mubr.f32.gmra.mrb[0].mxu0 %v1662
  %v1819 = vpop.f32.mrb[0].mxu0
  %v1820 = vadd.f32 %v1746, %v1819
  %v1821 = vpop.f32.mrb[0].mxu0
  %1822 = vdwg.mxu0
  %s1823 = scalar_lea.vmem %s4, 160
  %v1824 = vld [vmem:[%s1823] sm:$0xff]
  %v1825 = vld [vmem:[%s1823 + $0x8] sm:$0xff]
  %v1826 = vld [vmem:[%s1823 + $0x10] sm:$0xff]
  %v1827 = vld [vmem:[%s1823 + $0x18] sm:$0xff]
  %1828 = vrot.lane.b32.xlu0 %v1657, 64
  %v1829 = vpop.permute.xlu0 %1828
  %1831 = vmatprep.subr.mxu0 0.0
  %1832 = vmatpush1.msra.mxu0 %v1824
  %1833 = vmatprep.subr.mxu0 0.0
  %1834 = vmatpush1.msra.mxu0 %v1825
  %1835 = vmatprep.subr.mxu0 0.0
  %1836 = vmatpush1.msra.mxu0 %v1826
  %1837 = vmatprep.subr.mxu0 0.0
  %1838 = vmatpush1.msra.mxu0 %v1827
  %1839 = vmatprep.subr.mxu0 0.0
  %1840 = vmatpush1.msra.mxu0 0.0
  %1841 = vmatprep.subr.mxu0 0.0
  %1842 = vmatpush1.msra.mxu0 0.0
  %1843 = vmatprep.subr.mxu0 0.0
  %1844 = vmatpush1.msra.mxu0 0.0
  %1845 = vmatprep.subr.mxu0 0.0
  %1846 = vmatpush1.msra.mxu0 0.0
  %1847 = vmatprep.subr.mxu0 0.0
  %1848 = vmatpush1.msra.mxu0 0.0
  %1849 = vmatprep.subr.mxu0 0.0
  %1850 = vmatpush1.msra.mxu0 0.0
  %1851 = vmatprep.subr.mxu0 0.0
  %1852 = vmatpush1.msra.mxu0 0.0
  %1853 = vmatprep.subr.mxu0 0.0
  %1854 = vmatpush1.msra.mxu0 0.0
  %1855 = vmatprep.subr.mxu0 0.0
  %1856 = vmatpush1.msra.mxu0 0.0
  %1857 = vmatprep.subr.mxu0 0.0
  %1858 = vmatpush1.msra.mxu0 0.0
  %1859 = vmatprep.subr.mxu0 0.0
  %1860 = vmatpush1.msra.mxu0 0.0
  %1861 = vmatprep.subr.mxu0 0.0
  %1862 = vmatpush1.msra.mxu0 0.0
  %1863 = vmatprep.subr.mxu0 0.0
  %1864 = vmatpush1.msra.mxu0 0.0
  %1865 = vmatprep.subr.mxu0 0.0
  %1866 = vmatpush1.msra.mxu0 0.0
  %1867 = vmatprep.subr.mxu0 0.0
  %1868 = vmatpush1.msra.mxu0 0.0
  %1869 = vmatprep.subr.mxu0 0.0
  %1870 = vmatpush1.msra.mxu0 0.0
  %1871 = vmatprep.subr.mxu0 0.0
  %1872 = vmatpush1.msra.mxu0 0.0
  %1873 = vmatprep.subr.mxu0 0.0
  %1874 = vmatpush1.msra.mxu0 0.0
  %1875 = vmatprep.subr.mxu0 0.0
  %1876 = vmatpush1.msra.mxu0 0.0
  %1877 = vmatprep.subr.mxu0 0.0
  %1878 = vmatpush1.msra.mxu0 0.0
  %1879 = vmatprep.subr.mxu0 0.0
  %1880 = vmatpush1.msra.mxu0 0.0
  %1881 = vmatprep.subr.mxu0 0.0
  %1882 = vmatpush1.msra.mxu0 0.0
  %1883 = vmatprep.subr.mxu0 0.0
  %1884 = vmatpush1.msra.mxu0 0.0
  %1885 = vmatprep.subr.mxu0 0.0
  %1886 = vmatpush1.msra.mxu0 0.0
  %1887 = vmatprep.subr.mxu0 0.0
  %1888 = vmatpush1.msra.mxu0 0.0
  %1889 = vmatprep.subr.mxu0 0.0
  %1890 = vmatpush1.msra.mxu0 0.0
  %1891 = vmatprep.subr.mxu0 0.0
  %1892 = vmatpush1.msra.mxu0 0.0
  %1893 = vmatprep.subr.mxu0 0.0
  %1894 = vmatpush1.msra.mxu0 0.0
  %1895 = vmatprep.mubr.f32.mxu0 0.0
  %1896 = vmatmul.mubr.f32.gmra.mrb[0].mxu0 %v1659
  %v1897 = vpop.f32.mrb[0].mxu0
  %v1898 = vadd.f32 %v1829, %v1897
  %v1899 = vpop.f32.mrb[0].mxu0
  %1900 = vmatprep.mubr.f32.mxu0 0.0
  %1901 = vmatmul.mubr.f32.gmra.mrb[0].mxu0 %v1662
  %v1902 = vpop.f32.mrb[0].mxu0
  %v1903 = vadd.f32 %v1829, %v1902
  %v1904 = vpop.f32.mrb[0].mxu0
  %1905 = vdwg.mxu0
  %v1907 = vsel %vm438, %v1731, 0
  %v1910 = vsel %vm438, %v1736, 0
  %v1913 = vsel %vm438, %v1815, 0
  %v1916 = vsel %vm438, %v1820, 0
  %1918 = vmatprep.subr.mxu0 0.0
  %1919 = vmatpush1.xpose.msra.mxu0 %v1913
  %1920 = vmatprep.subr.mxu0 0.0
  %1921 = vmatpush1.xpose.msra.mxu0 %v1916
  %1922 = vmatprep.subr.mxu0 0.0
  %1923 = vmatpush1.xpose.msra.mxu0 0.0
  %1924 = vmatprep.subr.mxu0 0.0
  %1925 = vmatpush1.xpose.msra.mxu0 0.0
  %1926 = vmatprep.subr.mxu0 0.0
  %1927 = vmatpush1.xpose.msra.mxu0 0.0
  %1928 = vmatprep.subr.mxu0 0.0
  %1929 = vmatpush1.xpose.msra.mxu0 0.0
  %1930 = vmatprep.subr.mxu0 0.0
  %1931 = vmatpush1.xpose.msra.mxu0 0.0
  %1932 = vmatprep.subr.mxu0 0.0
  %1933 = vmatpush1.xpose.msra.mxu0 0.0
  %1934 = vmatprep.subr.mxu0 0.0
  %1935 = vmatpush1.xpose.msra.mxu0 0.0
  %1936 = vmatprep.subr.mxu0 0.0
  %1937 = vmatpush1.xpose.msra.mxu0 0.0
  %1938 = vmatprep.subr.mxu0 0.0
  %1939 = vmatpush1.xpose.msra.mxu0 0.0
  %1940 = vmatprep.subr.mxu0 0.0
  %1941 = vmatpush1.xpose.msra.mxu0 0.0
  %1942 = vmatprep.subr.mxu0 0.0
  %1943 = vmatpush1.xpose.msra.mxu0 0.0
  %1944 = vmatprep.subr.mxu0 0.0
  %1945 = vmatpush1.xpose.msra.mxu0 0.0
  %1946 = vmatprep.subr.mxu0 0.0
  %1947 = vmatpush1.xpose.msra.mxu0 0.0
  %1948 = vmatprep.subr.mxu0 0.0
  %1949 = vmatpush1.xpose.msra.mxu0 0.0
  %1950 = vmatprep.subr.mxu0 0.0
  %1951 = vmatpush1.xpose.msra.mxu0 0.0
  %1952 = vmatprep.subr.mxu0 0.0
  %1953 = vmatpush1.xpose.msra.mxu0 0.0
  %1954 = vmatprep.subr.mxu0 0.0
  %1955 = vmatpush1.xpose.msra.mxu0 0.0
  %1956 = vmatprep.subr.mxu0 0.0
  %1957 = vmatpush1.xpose.msra.mxu0 0.0
  %1958 = vmatprep.subr.mxu0 0.0
  %1959 = vmatpush1.xpose.msra.mxu0 0.0
  %1960 = vmatprep.subr.mxu0 0.0
  %1961 = vmatpush1.xpose.msra.mxu0 0.0
  %1962 = vmatprep.subr.mxu0 0.0
  %1963 = vmatpush1.xpose.msra.mxu0 0.0
  %1964 = vmatprep.subr.mxu0 0.0
  %1965 = vmatpush1.xpose.msra.mxu0 0.0
  %1966 = vmatprep.subr.mxu0 0.0
  %1967 = vmatpush1.xpose.msra.mxu0 0.0
  %1968 = vmatprep.subr.mxu0 0.0
  %1969 = vmatpush1.xpose.msra.mxu0 0.0
  %1970 = vmatprep.subr.mxu0 0.0
  %1971 = vmatpush1.xpose.msra.mxu0 0.0
  %1972 = vmatprep.subr.mxu0 0.0
  %1973 = vmatpush1.xpose.msra.mxu0 0.0
  %1974 = vmatprep.subr.mxu0 0.0
  %1975 = vmatpush1.xpose.msra.mxu0 0.0
  %1976 = vmatprep.subr.mxu0 0.0
  %1977 = vmatpush1.xpose.msra.mxu0 0.0
  %1978 = vmatprep.subr.mxu0 0.0
  %1979 = vmatpush1.xpose.msra.mxu0 0.0
  %1980 = vmatprep.subr.mxu0 0.0
  %1981 = vmatpush1.xpose.msra.mxu0 0.0
  %1982 = vmatprep.mubr.f32.mxu0 0.0
  %1983 = vmatmul.mubr.f32.gmra.mrb[0].mxu0 %v1907
  %v1984 = vpop.f32.mrb[0].mxu0
  %v1985 = vadd.f32 0.0, %v1984
  %v1986 = vpop.f32.mrb[0].mxu0
  %1987 = vmatprep.mubr.f32.mxu0 0.0
  %1988 = vmatmul.mubr.f32.gmra.mrb[0].mxu0 %v1910
  %v1989 = vpop.f32.mrb[0].mxu0
  %v1990 = vadd.f32 0.0, %v1989
  %v1991 = vpop.f32.mrb[0].mxu0
  %1992 = vdwg.mxu0
  %v1993 = vmul.f32 %v1985, 0.35355338
  %v1994 = vmul.f32 %v1990, 0.35355338
  %v1995 = vadd.f32 %v1993, %v139
  %v1996 = vadd.f32 %v1994, %v140
  %v1997 = vsel %vm530, %v1995, -inf
  %1998 = vmax.xlane.f32.xlu0 %v1997
  %v1999 = vpop.xlane.xlu0 %1998
  %v2000 = vsel %vm530, %v1996, -inf
  %2001 = vmax.xlane.f32.xlu0 %v2000
  %v2002 = vpop.xlane.xlu0 %2001
  %v2003 = vsub.f32 %v1995, %v1999
  %v2004 = vsub.f32 %v1996, %v2002
  %v2005 = vmul.f32 %v2003, 1.442695
  %v2006 = vpow.pop %v2005
  %v2007 = vmul.f32 %v2004, 1.442695
  %v2008 = vpow.pop %v2007
  %v2009 = vsel %vm530, %v2006, 0.0
  %2010 = vadd.xlane.f32.xlu0 %v2009
  %v2011 = vpop.xlane.xlu0 %2010
  %v2012 = vsel %vm530, %v2008, 0.0
  %2013 = vadd.xlane.f32.xlu0 %v2012
  %v2014 = vpop.xlane.xlu0 %2013
  %v2015 = vrcp.pop %v2011
  %v2016 = vrcp.pop %v2014
  %v2017 = vmul.f32 %v2006, %v2015
  %v2018 = vmul.f32 %v2008, %v2016
  %v2020 = vsel %vm530, %v2017, 0
  %v2023 = vsel %vm530, %v2018, 0
  %2025 = vmatprep.subr.mxu0 0.0
  %2026 = vmatpush1.msra.mxu0 %v1898
  %2027 = vmatprep.subr.mxu0 0.0
  %2028 = vmatpush1.msra.mxu0 %v1903
  %2029 = vmatprep.subr.mxu0 0.0
  %2030 = vmatpush1.msra.mxu0 0.0
  %2031 = vmatprep.subr.mxu0 0.0
  %2032 = vmatpush1.msra.mxu0 0.0
  %2033 = vmatprep.subr.mxu0 0.0
  %2034 = vmatpush1.msra.mxu0 0.0
  %2035 = vmatprep.subr.mxu0 0.0
  %2036 = vmatpush1.msra.mxu0 0.0
  %2037 = vmatprep.subr.mxu0 0.0
  %2038 = vmatpush1.msra.mxu0 0.0
  %2039 = vmatprep.subr.mxu0 0.0
  %2040 = vmatpush1.msra.mxu0 0.0
  %2041 = vmatprep.subr.mxu0 0.0
  %2042 = vmatpush1.msra.mxu0 0.0
  %2043 = vmatprep.subr.mxu0 0.0
  %2044 = vmatpush1.msra.mxu0 0.0
  %2045 = vmatprep.subr.mxu0 0.0
  %2046 = vmatpush1.msra.mxu0 0.0
  %2047 = vmatprep.subr.mxu0 0.0
  %2048 = vmatpush1.msra.mxu0 0.0
  %2049 = vmatprep.subr.mxu0 0.0
  %2050 = vmatpush1.msra.mxu0 0.0
  %2051 = vmatprep.subr.mxu0 0.0
  %2052 = vmatpush1.msra.mxu0 0.0
  %2053 = vmatprep.subr.mxu0 0.0
  %2054 = vmatpush1.msra.mxu0 0.0
  %2055 = vmatprep.subr.mxu0 0.0
  %2056 = vmatpush1.msra.mxu0 0.0
  %2057 = vmatprep.subr.mxu0 0.0
  %2058 = vmatpush1.msra.mxu0 0.0
  %2059 = vmatprep.subr.mxu0 0.0
  %2060 = vmatpush1.msra.mxu0 0.0
  %2061 = vmatprep.subr.mxu0 0.0
  %2062 = vmatpush1.msra.mxu0 0.0
  %2063 = vmatprep.subr.mxu0 0.0
  %2064 = vmatpush1.msra.mxu0 0.0
  %2065 = vmatprep.subr.mxu0 0.0
  %2066 = vmatpush1.msra.mxu0 0.0
  %2067 = vmatprep.subr.mxu0 0.0
  %2068 = vmatpush1.msra.mxu0 0.0
  %2069 = vmatprep.subr.mxu0 0.0
  %2070 = vmatpush1.msra.mxu0 0.0
  %2071 = vmatprep.subr.mxu0 0.0
  %2072 = vmatpush1.msra.mxu0 0.0
  %2073 = vmatprep.subr.mxu0 0.0
  %2074 = vmatpush1.msra.mxu0 0.0
  %2075 = vmatprep.subr.mxu0 0.0
  %2076 = vmatpush1.msra.mxu0 0.0
  %2077 = vmatprep.subr.mxu0 0.0
  %2078 = vmatpush1.msra.mxu0 0.0
  %2079 = vmatprep.subr.mxu0 0.0
  %2080 = vmatpush1.msra.mxu0 0.0
  %2081 = vmatprep.subr.mxu0 0.0
  %2082 = vmatpush1.msra.mxu0 0.0
  %2083 = vmatprep.subr.mxu0 0.0
  %2084 = vmatpush1.msra.mxu0 0.0
  %2085 = vmatprep.subr.mxu0 0.0
  %2086 = vmatpush1.msra.mxu0 0.0
  %2087 = vmatprep.subr.mxu0 0.0
  %2088 = vmatpush1.msra.mxu0 0.0
  %2089 = vmatprep.mubr.f32.mxu0 0.0
  %2090 = vmatmul.mubr.f32.gmra.mrb[0].mxu0 %v2020
  %v2091 = vpop.f32.mrb[0].mxu0
  %v2092 = vadd.f32 0.0, %v2091
  %v2093 = vpop.f32.mrb[0].mxu0
  %2094 = vmatprep.mubr.f32.mxu0 0.0
  %2095 = vmatmul.mubr.f32.gmra.mrb[0].mxu0 %v2023
  %v2096 = vpop.f32.mrb[0].mxu0
  %v2097 = vadd.f32 0.0, %v2096
  %v2098 = vpop.f32.mrb[0].mxu0
  %2099 = vdwg.mxu0
  %2100 = vrot.lane.b32.xlu0 %v1731, 120
  %v2101 = vpop.permute.xlu0 %2100
  %2102 = vrot.lane.b32.xlu0 %v1736, 120
  %v2103 = vpop.permute.xlu0 %2102
  %2104 = vrot.lane.b32.xlu0 %v1815, 120
  %v2105 = vpop.permute.xlu0 %2104
  %2106 = vrot.lane.b32.xlu0 %v1820, 120
  %v2107 = vpop.permute.xlu0 %2106
  %v2108 = vsel %vm438, %v2101, 0
  %v2110 = vsel %vm438, %v2103, 0
  %v2112 = vsel %vm438, %v2105, 0
  %v2114 = vsel %vm438, %v2107, 0
  %2116 = vmatprep.subr.mxu0 0.0
  %2117 = vmatpush1.xpose.msra.mxu0 %v2112
  %2118 = vmatprep.subr.mxu0 0.0
  %2119 = vmatpush1.xpose.msra.mxu0 %v2114
  %2120 = vmatprep.subr.mxu0 0.0
  %2121 = vmatpush1.xpose.msra.mxu0 0.0
  %2122 = vmatprep.subr.mxu0 0.0
  %2123 = vmatpush1.xpose.msra.mxu0 0.0
  %2124 = vmatprep.subr.mxu0 0.0
  %2125 = vmatpush1.xpose.msra.mxu0 0.0
  %2126 = vmatprep.subr.mxu0 0.0
  %2127 = vmatpush1.xpose.msra.mxu0 0.0
  %2128 = vmatprep.subr.mxu0 0.0
  %2129 = vmatpush1.xpose.msra.mxu0 0.0
  %2130 = vmatprep.subr.mxu0 0.0
  %2131 = vmatpush1.xpose.msra.mxu0 0.0
  %2132 = vmatprep.subr.mxu0 0.0
  %2133 = vmatpush1.xpose.msra.mxu0 0.0
  %2134 = vmatprep.subr.mxu0 0.0
  %2135 = vmatpush1.xpose.msra.mxu0 0.0
  %2136 = vmatprep.subr.mxu0 0.0
  %2137 = vmatpush1.xpose.msra.mxu0 0.0
  %2138 = vmatprep.subr.mxu0 0.0
  %2139 = vmatpush1.xpose.msra.mxu0 0.0
  %2140 = vmatprep.subr.mxu0 0.0
  %2141 = vmatpush1.xpose.msra.mxu0 0.0
  %2142 = vmatprep.subr.mxu0 0.0
  %2143 = vmatpush1.xpose.msra.mxu0 0.0
  %2144 = vmatprep.subr.mxu0 0.0
  %2145 = vmatpush1.xpose.msra.mxu0 0.0
  %2146 = vmatprep.subr.mxu0 0.0
  %2147 = vmatpush1.xpose.msra.mxu0 0.0
  %2148 = vmatprep.subr.mxu0 0.0
  %2149 = vmatpush1.xpose.msra.mxu0 0.0
  %2150 = vmatprep.subr.mxu0 0.0
  %2151 = vmatpush1.xpose.msra.mxu0 0.0
  %2152 = vmatprep.subr.mxu0 0.0
  %2153 = vmatpush1.xpose.msra.mxu0 0.0
  %2154 = vmatprep.subr.mxu0 0.0
  %2155 = vmatpush1.xpose.msra.mxu0 0.0
  %2156 = vmatprep.subr.mxu0 0.0
  %2157 = vmatpush1.xpose.msra.mxu0 0.0
  %2158 = vmatprep.subr.mxu0 0.0
  %2159 = vmatpush1.xpose.msra.mxu0 0.0
  %2160 = vmatprep.subr.mxu0 0.0
  %2161 = vmatpush1.xpose.msra.mxu0 0.0
  %2162 = vmatprep.subr.mxu0 0.0
  %2163 = vmatpush1.xpose.msra.mxu0 0.0
  %2164 = vmatprep.subr.mxu0 0.0
  %2165 = vmatpush1.xpose.msra.mxu0 0.0
  %2166 = vmatprep.subr.mxu0 0.0
  %2167 = vmatpush1.xpose.msra.mxu0 0.0
  %2168 = vmatprep.subr.mxu0 0.0
  %2169 = vmatpush1.xpose.msra.mxu0 0.0
  %2170 = vmatprep.subr.mxu0 0.0
  %2171 = vmatpush1.xpose.msra.mxu0 0.0
  %2172 = vmatprep.subr.mxu0 0.0
  %2173 = vmatpush1.xpose.msra.mxu0 0.0
  %2174 = vmatprep.subr.mxu0 0.0
  %2175 = vmatpush1.xpose.msra.mxu0 0.0
  %2176 = vmatprep.subr.mxu0 0.0
  %2177 = vmatpush1.xpose.msra.mxu0 0.0
  %2178 = vmatprep.subr.mxu0 0.0
  %2179 = vmatpush1.xpose.msra.mxu0 0.0
  %2180 = vmatprep.mubr.f32.mxu0 0.0
  %2181 = vmatmul.mubr.f32.gmra.mrb[0].mxu0 %v2108
  %v2182 = vpop.f32.mrb[0].mxu0
  %v2183 = vadd.f32 0.0, %v2182
  %v2184 = vpop.f32.mrb[0].mxu0
  %2185 = vmatprep.mubr.f32.mxu0 0.0
  %2186 = vmatmul.mubr.f32.gmra.mrb[0].mxu0 %v2110
  %v2187 = vpop.f32.mrb[0].mxu0
  %v2188 = vadd.f32 0.0, %v2187
  %v2189 = vpop.f32.mrb[0].mxu0
  %2190 = vdwg.mxu0
  %v2191 = vmul.f32 %v2183, 0.35355338
  %v2192 = vmul.f32 %v2188, 0.35355338
  %v2193 = vadd.f32 %v2191, %v139
  %v2194 = vadd.f32 %v2192, %v140
  %v2195 = vsel %vm530, %v2193, -inf
  %2196 = vmax.xlane.f32.xlu0 %v2195
  %v2197 = vpop.xlane.xlu0 %2196
  %v2198 = vsel %vm530, %v2194, -inf
  %2199 = vmax.xlane.f32.xlu0 %v2198
  %v2200 = vpop.xlane.xlu0 %2199
  %v2201 = vsub.f32 %v2193, %v2197
  %v2202 = vsub.f32 %v2194, %v2200
  %v2203 = vmul.f32 %v2201, 1.442695
  %v2204 = vpow.pop %v2203
  %v2205 = vmul.f32 %v2202, 1.442695
  %v2206 = vpow.pop %v2205
  %v2207 = vsel %vm530, %v2204, 0.0
  %2208 = vadd.xlane.f32.xlu0 %v2207
  %v2209 = vpop.xlane.xlu0 %2208
  %v2210 = vsel %vm530, %v2206, 0.0
  %2211 = vadd.xlane.f32.xlu0 %v2210
  %v2212 = vpop.xlane.xlu0 %2211
  %v2213 = vrcp.pop %v2209
  %v2214 = vrcp.pop %v2212
  %v2215 = vmul.f32 %v2204, %v2213
  %v2216 = vmul.f32 %v2206, %v2214
  %2219 = vrot.lane.b32.xlu0 %v1898, 120
  %v2220 = vpop.permute.xlu0 %2219
  %2221 = vrot.lane.b32.xlu0 %v1903, 120
  %v2222 = vpop.permute.xlu0 %2221
  %v2226 = vsel %vm530, %v2215, 0
  %v2229 = vsel %vm530, %v2216, 0
  %2231 = vmatprep.subr.mxu0 0.0
  %2232 = vmatpush1.msra.mxu0 %v2220
  %2233 = vmatprep.subr.mxu0 0.0
  %2234 = vmatpush1.msra.mxu0 %v2222
  %2235 = vmatprep.subr.mxu0 0.0
  %2236 = vmatpush1.msra.mxu0 0.0
  %2237 = vmatprep.subr.mxu0 0.0
  %2238 = vmatpush1.msra.mxu0 0.0
  %2239 = vmatprep.subr.mxu0 0.0
  %2240 = vmatpush1.msra.mxu0 0.0
  %2241 = vmatprep.subr.mxu0 0.0
  %2242 = vmatpush1.msra.mxu0 0.0
  %2243 = vmatprep.subr.mxu0 0.0
  %2244 = vmatpush1.msra.mxu0 0.0
  %2245 = vmatprep.subr.mxu0 0.0
  %2246 = vmatpush1.msra.mxu0 0.0
  %2247 = vmatprep.subr.mxu0 0.0
  %2248 = vmatpush1.msra.mxu0 0.0
  %2249 = vmatprep.subr.mxu0 0.0
  %2250 = vmatpush1.msra.mxu0 0.0
  %2251 = vmatprep.subr.mxu0 0.0
  %2252 = vmatpush1.msra.mxu0 0.0
  %2253 = vmatprep.subr.mxu0 0.0
  %2254 = vmatpush1.msra.mxu0 0.0
  %2255 = vmatprep.subr.mxu0 0.0
  %2256 = vmatpush1.msra.mxu0 0.0
  %2257 = vmatprep.subr.mxu0 0.0
  %2258 = vmatpush1.msra.mxu0 0.0
  %2259 = vmatprep.subr.mxu0 0.0
  %2260 = vmatpush1.msra.mxu0 0.0
  %2261 = vmatprep.subr.mxu0 0.0
  %2262 = vmatpush1.msra.mxu0 0.0
  %2263 = vmatprep.subr.mxu0 0.0
  %2264 = vmatpush1.msra.mxu0 0.0
  %2265 = vmatprep.subr.mxu0 0.0
  %2266 = vmatpush1.msra.mxu0 0.0
  %2267 = vmatprep.subr.mxu0 0.0
  %2268 = vmatpush1.msra.mxu0 0.0
  %2269 = vmatprep.subr.mxu0 0.0
  %2270 = vmatpush1.msra.mxu0 0.0
  %2271 = vmatprep.subr.mxu0 0.0
  %2272 = vmatpush1.msra.mxu0 0.0
  %2273 = vmatprep.subr.mxu0 0.0
  %2274 = vmatpush1.msra.mxu0 0.0
  %2275 = vmatprep.subr.mxu0 0.0
  %2276 = vmatpush1.msra.mxu0 0.0
  %2277 = vmatprep.subr.mxu0 0.0
  %2278 = vmatpush1.msra.mxu0 0.0
  %2279 = vmatprep.subr.mxu0 0.0
  %2280 = vmatpush1.msra.mxu0 0.0
  %2281 = vmatprep.subr.mxu0 0.0
  %2282 = vmatpush1.msra.mxu0 0.0
  %2283 = vmatprep.subr.mxu0 0.0
  %2284 = vmatpush1.msra.mxu0 0.0
  %2285 = vmatprep.subr.mxu0 0.0
  %2286 = vmatpush1.msra.mxu0 0.0
  %2287 = vmatprep.subr.mxu0 0.0
  %2288 = vmatpush1.msra.mxu0 0.0
  %2289 = vmatprep.subr.mxu0 0.0
  %2290 = vmatpush1.msra.mxu0 0.0
  %2291 = vmatprep.subr.mxu0 0.0
  %2292 = vmatpush1.msra.mxu0 0.0
  %2293 = vmatprep.subr.mxu0 0.0
  %2294 = vmatpush1.msra.mxu0 0.0
  %2295 = vmatprep.mubr.f32.mxu0 0.0
  %2296 = vmatmul.mubr.f32.gmra.mrb[0].mxu0 %v2226
  %v2297 = vpop.f32.mrb[0].mxu0
  %v2298 = vadd.f32 0.0, %v2297
  %v2299 = vpop.f32.mrb[0].mxu0
  %2300 = vmatprep.mubr.f32.mxu0 0.0
  %2301 = vmatmul.mubr.f32.gmra.mrb[0].mxu0 %v2229
  %v2302 = vpop.f32.mrb[0].mxu0
  %v2303 = vadd.f32 0.0, %v2302
  %v2304 = vpop.f32.mrb[0].mxu0
  %2305 = vdwg.mxu0
  %2306 = vrot.lane.b32.xlu0 %v1731, 112
  %v2307 = vpop.permute.xlu0 %2306
  %2308 = vrot.lane.b32.xlu0 %v1736, 112
  %v2309 = vpop.permute.xlu0 %2308
  %2310 = vrot.lane.b32.xlu0 %v1815, 112
  %v2311 = vpop.permute.xlu0 %2310
  %2312 = vrot.lane.b32.xlu0 %v1820, 112
  %v2313 = vpop.permute.xlu0 %2312
  %v2314 = vsel %vm438, %v2307, 0
  %v2316 = vsel %vm438, %v2309, 0
  %v2318 = vsel %vm438, %v2311, 0
  %v2320 = vsel %vm438, %v2313, 0
  %2322 = vmatprep.subr.mxu0 0.0
  %2323 = vmatpush1.xpose.msra.mxu0 %v2318
  %2324 = vmatprep.subr.mxu0 0.0
  %2325 = vmatpush1.xpose.msra.mxu0 %v2320
  %2326 = vmatprep.subr.mxu0 0.0
  %2327 = vmatpush1.xpose.msra.mxu0 0.0
  %2328 = vmatprep.subr.mxu0 0.0
  %2329 = vmatpush1.xpose.msra.mxu0 0.0
  %2330 = vmatprep.subr.mxu0 0.0
  %2331 = vmatpush1.xpose.msra.mxu0 0.0
  %2332 = vmatprep.subr.mxu0 0.0
  %2333 = vmatpush1.xpose.msra.mxu0 0.0
  %2334 = vmatprep.subr.mxu0 0.0
  %2335 = vmatpush1.xpose.msra.mxu0 0.0
  %2336 = vmatprep.subr.mxu0 0.0
  %2337 = vmatpush1.xpose.msra.mxu0 0.0
  %2338 = vmatprep.subr.mxu0 0.0
  %2339 = vmatpush1.xpose.msra.mxu0 0.0
  %2340 = vmatprep.subr.mxu0 0.0
  %2341 = vmatpush1.xpose.msra.mxu0 0.0
  %2342 = vmatprep.subr.mxu0 0.0
  %2343 = vmatpush1.xpose.msra.mxu0 0.0
  %2344 = vmatprep.subr.mxu0 0.0
  %2345 = vmatpush1.xpose.msra.mxu0 0.0
  %2346 = vmatprep.subr.mxu0 0.0
  %2347 = vmatpush1.xpose.msra.mxu0 0.0
  %2348 = vmatprep.subr.mxu0 0.0
  %2349 = vmatpush1.xpose.msra.mxu0 0.0
  %2350 = vmatprep.subr.mxu0 0.0
  %2351 = vmatpush1.xpose.msra.mxu0 0.0
  %2352 = vmatprep.subr.mxu0 0.0
  %2353 = vmatpush1.xpose.msra.mxu0 0.0
  %2354 = vmatprep.subr.mxu0 0.0
  %2355 = vmatpush1.xpose.msra.mxu0 0.0
  %2356 = vmatprep.subr.mxu0 0.0
  %2357 = vmatpush1.xpose.msra.mxu0 0.0
  %2358 = vmatprep.subr.mxu0 0.0
  %2359 = vmatpush1.xpose.msra.mxu0 0.0
  %2360 = vmatprep.subr.mxu0 0.0
  %2361 = vmatpush1.xpose.msra.mxu0 0.0
  %2362 = vmatprep.subr.mxu0 0.0
  %2363 = vmatpush1.xpose.msra.mxu0 0.0
  %2364 = vmatprep.subr.mxu0 0.0
  %2365 = vmatpush1.xpose.msra.mxu0 0.0
  %2366 = vmatprep.subr.mxu0 0.0
  %2367 = vmatpush1.xpose.msra.mxu0 0.0
  %2368 = vmatprep.subr.mxu0 0.0
  %2369 = vmatpush1.xpose.msra.mxu0 0.0
  %2370 = vmatprep.subr.mxu0 0.0
  %2371 = vmatpush1.xpose.msra.mxu0 0.0
  %2372 = vmatprep.subr.mxu0 0.0
  %2373 = vmatpush1.xpose.msra.mxu0 0.0
  %2374 = vmatprep.subr.mxu0 0.0
  %2375 = vmatpush1.xpose.msra.mxu0 0.0
  %2376 = vmatprep.subr.mxu0 0.0
  %2377 = vmatpush1.xpose.msra.mxu0 0.0
  %2378 = vmatprep.subr.mxu0 0.0
  %2379 = vmatpush1.xpose.msra.mxu0 0.0
  %2380 = vmatprep.subr.mxu0 0.0
  %2381 = vmatpush1.xpose.msra.mxu0 0.0
  %2382 = vmatprep.subr.mxu0 0.0
  %2383 = vmatpush1.xpose.msra.mxu0 0.0
  %2384 = vmatprep.subr.mxu0 0.0
  %2385 = vmatpush1.xpose.msra.mxu0 0.0
  %2386 = vmatprep.mubr.f32.mxu0 0.0
  %2387 = vmatmul.mubr.f32.gmra.mrb[0].mxu0 %v2314
  %v2388 = vpop.f32.mrb[0].mxu0
  %v2389 = vadd.f32 0.0, %v2388
  %v2390 = vpop.f32.mrb[0].mxu0
  %2391 = vmatprep.mubr.f32.mxu0 0.0
  %2392 = vmatmul.mubr.f32.gmra.mrb[0].mxu0 %v2316
  %v2393 = vpop.f32.mrb[0].mxu0
  %v2394 = vadd.f32 0.0, %v2393
  %v2395 = vpop.f32.mrb[0].mxu0
  %2396 = vdwg.mxu0
  %v2397 = vmul.f32 %v2389, 0.35355338
  %v2398 = vmul.f32 %v2394, 0.35355338
  %v2399 = vadd.f32 %v2397, %v139
  %v2400 = vadd.f32 %v2398, %v140
  %v2401 = vsel %vm530, %v2399, -inf
  %2402 = vmax.xlane.f32.xlu0 %v2401
  %v2403 = vpop.xlane.xlu0 %2402
  %v2404 = vsel %vm530, %v2400, -inf
  %2405 = vmax.xlane.f32.xlu0 %v2404
  %v2406 = vpop.xlane.xlu0 %2405
  %v2407 = vsub.f32 %v2399, %v2403
  %v2408 = vsub.f32 %v2400, %v2406
  %v2409 = vmul.f32 %v2407, 1.442695
  %v2410 = vpow.pop %v2409
  %v2411 = vmul.f32 %v2408, 1.442695
  %v2412 = vpow.pop %v2411
  %v2413 = vsel %vm530, %v2410, 0.0
  %2414 = vadd.xlane.f32.xlu0 %v2413
  %v2415 = vpop.xlane.xlu0 %2414
  %v2416 = vsel %vm530, %v2412, 0.0
  %2417 = vadd.xlane.f32.xlu0 %v2416
  %v2418 = vpop.xlane.xlu0 %2417
  %v2419 = vrcp.pop %v2415
  %v2420 = vrcp.pop %v2418
  %v2421 = vmul.f32 %v2410, %v2419
  %v2422 = vmul.f32 %v2412, %v2420
  %2423 = vrot.lane.b32.xlu0 %v1898, 112
  %v2424 = vpop.permute.xlu0 %2423
  %2425 = vrot.lane.b32.xlu0 %v1903, 112
  %v2426 = vpop.permute.xlu0 %2425
  %v2430 = vsel %vm530, %v2421, 0
  %v2433 = vsel %vm530, %v2422, 0
  %2435 = vmatprep.subr.mxu0 0.0
  %2436 = vmatpush1.msra.mxu0 %v2424
  %2437 = vmatprep.subr.mxu0 0.0
  %2438 = vmatpush1.msra.mxu0 %v2426
  %2439 = vmatprep.subr.mxu0 0.0
  %2440 = vmatpush1.msra.mxu0 0.0
  %2441 = vmatprep.subr.mxu0 0.0
  %2442 = vmatpush1.msra.mxu0 0.0
  %2443 = vmatprep.subr.mxu0 0.0
  %2444 = vmatpush1.msra.mxu0 0.0
  %2445 = vmatprep.subr.mxu0 0.0
  %2446 = vmatpush1.msra.mxu0 0.0
  %2447 = vmatprep.subr.mxu0 0.0
  %2448 = vmatpush1.msra.mxu0 0.0
  %2449 = vmatprep.subr.mxu0 0.0
  %2450 = vmatpush1.msra.mxu0 0.0
  %2451 = vmatprep.subr.mxu0 0.0
  %2452 = vmatpush1.msra.mxu0 0.0
  %2453 = vmatprep.subr.mxu0 0.0
  %2454 = vmatpush1.msra.mxu0 0.0
  %2455 = vmatprep.subr.mxu0 0.0
  %2456 = vmatpush1.msra.mxu0 0.0
  %2457 = vmatprep.subr.mxu0 0.0
  %2458 = vmatpush1.msra.mxu0 0.0
  %2459 = vmatprep.subr.mxu0 0.0
  %2460 = vmatpush1.msra.mxu0 0.0
  %2461 = vmatprep.subr.mxu0 0.0
  %2462 = vmatpush1.msra.mxu0 0.0
  %2463 = vmatprep.subr.mxu0 0.0
  %2464 = vmatpush1.msra.mxu0 0.0
  %2465 = vmatprep.subr.mxu0 0.0
  %2466 = vmatpush1.msra.mxu0 0.0
  %2467 = vmatprep.subr.mxu0 0.0
  %2468 = vmatpush1.msra.mxu0 0.0
  %2469 = vmatprep.subr.mxu0 0.0
  %2470 = vmatpush1.msra.mxu0 0.0
  %2471 = vmatprep.subr.mxu0 0.0
  %2472 = vmatpush1.msra.mxu0 0.0
  %2473 = vmatprep.subr.mxu0 0.0
  %2474 = vmatpush1.msra.mxu0 0.0
  %2475 = vmatprep.subr.mxu0 0.0
  %2476 = vmatpush1.msra.mxu0 0.0
  %2477 = vmatprep.subr.mxu0 0.0
  %2478 = vmatpush1.msra.mxu0 0.0
  %2479 = vmatprep.subr.mxu0 0.0
  %2480 = vmatpush1.msra.mxu0 0.0
  %2481 = vmatprep.subr.mxu0 0.0
  %2482 = vmatpush1.msra.mxu0 0.0
  %2483 = vmatprep.subr.mxu0 0.0
  %2484 = vmatpush1.msra.mxu0 0.0
  %2485 = vmatprep.subr.mxu0 0.0
  %2486 = vmatpush1.msra.mxu0 0.0
  %2487 = vmatprep.subr.mxu0 0.0
  %2488 = vmatpush1.msra.mxu0 0.0
  %2489 = vmatprep.subr.mxu0 0.0
  %2490 = vmatpush1.msra.mxu0 0.0
  %2491 = vmatprep.subr.mxu0 0.0
  %2492 = vmatpush1.msra.mxu0 0.0
  %2493 = vmatprep.subr.mxu0 0.0
  %2494 = vmatpush1.msra.mxu0 0.0
  %2495 = vmatprep.subr.mxu0 0.0
  %2496 = vmatpush1.msra.mxu0 0.0
  %2497 = vmatprep.subr.mxu0 0.0
  %2498 = vmatpush1.msra.mxu0 0.0
  %2499 = vmatprep.mubr.f32.mxu0 0.0
  %2500 = vmatmul.mubr.f32.gmra.mrb[0].mxu0 %v2430
  %v2501 = vpop.f32.mrb[0].mxu0
  %v2502 = vadd.f32 0.0, %v2501
  %v2503 = vpop.f32.mrb[0].mxu0
  %2504 = vmatprep.mubr.f32.mxu0 0.0
  %2505 = vmatmul.mubr.f32.gmra.mrb[0].mxu0 %v2433
  %v2506 = vpop.f32.mrb[0].mxu0
  %v2507 = vadd.f32 0.0, %v2506
  %v2508 = vpop.f32.mrb[0].mxu0
  %2509 = vdwg.mxu0
  %2510 = vrot.lane.b32.xlu0 %v1731, 104
  %v2511 = vpop.permute.xlu0 %2510
  %2512 = vrot.lane.b32.xlu0 %v1736, 104
  %v2513 = vpop.permute.xlu0 %2512
  %2514 = vrot.lane.b32.xlu0 %v1815, 104
  %v2515 = vpop.permute.xlu0 %2514
  %2516 = vrot.lane.b32.xlu0 %v1820, 104
  %v2517 = vpop.permute.xlu0 %2516
  %v2518 = vsel %vm438, %v2511, 0
  %v2520 = vsel %vm438, %v2513, 0
  %v2522 = vsel %vm438, %v2515, 0
  %v2524 = vsel %vm438, %v2517, 0
  %2526 = vmatprep.subr.mxu0 0.0
  %2527 = vmatpush1.xpose.msra.mxu0 %v2522
  %2528 = vmatprep.subr.mxu0 0.0
  %2529 = vmatpush1.xpose.msra.mxu0 %v2524
  %2530 = vmatprep.subr.mxu0 0.0
  %2531 = vmatpush1.xpose.msra.mxu0 0.0
  %2532 = vmatprep.subr.mxu0 0.0
  %2533 = vmatpush1.xpose.msra.mxu0 0.0
  %2534 = vmatprep.subr.mxu0 0.0
  %2535 = vmatpush1.xpose.msra.mxu0 0.0
  %2536 = vmatprep.subr.mxu0 0.0
  %2537 = vmatpush1.xpose.msra.mxu0 0.0
  %2538 = vmatprep.subr.mxu0 0.0
  %2539 = vmatpush1.xpose.msra.mxu0 0.0
  %2540 = vmatprep.subr.mxu0 0.0
  %2541 = vmatpush1.xpose.msra.mxu0 0.0
  %2542 = vmatprep.subr.mxu0 0.0
  %2543 = vmatpush1.xpose.msra.mxu0 0.0
  %2544 = vmatprep.subr.mxu0 0.0
  %2545 = vmatpush1.xpose.msra.mxu0 0.0
  %2546 = vmatprep.subr.mxu0 0.0
  %2547 = vmatpush1.xpose.msra.mxu0 0.0
  %2548 = vmatprep.subr.mxu0 0.0
  %2549 = vmatpush1.xpose.msra.mxu0 0.0
  %2550 = vmatprep.subr.mxu0 0.0
  %2551 = vmatpush1.xpose.msra.mxu0 0.0
  %2552 = vmatprep.subr.mxu0 0.0
  %2553 = vmatpush1.xpose.msra.mxu0 0.0
  %2554 = vmatprep.subr.mxu0 0.0
  %2555 = vmatpush1.xpose.msra.mxu0 0.0
  %2556 = vmatprep.subr.mxu0 0.0
  %2557 = vmatpush1.xpose.msra.mxu0 0.0
  %2558 = vmatprep.subr.mxu0 0.0
  %2559 = vmatpush1.xpose.msra.mxu0 0.0
  %2560 = vmatprep.subr.mxu0 0.0
  %2561 = vmatpush1.xpose.msra.mxu0 0.0
  %2562 = vmatprep.subr.mxu0 0.0
  %2563 = vmatpush1.xpose.msra.mxu0 0.0
  %2564 = vmatprep.subr.mxu0 0.0
  %2565 = vmatpush1.xpose.msra.mxu0 0.0
  %2566 = vmatprep.subr.mxu0 0.0
  %2567 = vmatpush1.xpose.msra.mxu0 0.0
  %2568 = vmatprep.subr.mxu0 0.0
  %2569 = vmatpush1.xpose.msra.mxu0 0.0
  %2570 = vmatprep.subr.mxu0 0.0
  %2571 = vmatpush1.xpose.msra.mxu0 0.0
  %2572 = vmatprep.subr.mxu0 0.0
  %2573 = vmatpush1.xpose.msra.mxu0 0.0
  %2574 = vmatprep.subr.mxu0 0.0
  %2575 = vmatpush1.xpose.msra.mxu0 0.0
  %2576 = vmatprep.subr.mxu0 0.0
  %2577 = vmatpush1.xpose.msra.mxu0 0.0
  %2578 = vmatprep.subr.mxu0 0.0
  %2579 = vmatpush1.xpose.msra.mxu0 0.0
  %2580 = vmatprep.subr.mxu0 0.0
  %2581 = vmatpush1.xpose.msra.mxu0 0.0
  %2582 = vmatprep.subr.mxu0 0.0
  %2583 = vmatpush1.xpose.msra.mxu0 0.0
  %2584 = vmatprep.subr.mxu0 0.0
  %2585 = vmatpush1.xpose.msra.mxu0 0.0
  %2586 = vmatprep.subr.mxu0 0.0
  %2587 = vmatpush1.xpose.msra.mxu0 0.0
  %2588 = vmatprep.subr.mxu0 0.0
  %2589 = vmatpush1.xpose.msra.mxu0 0.0
  %2590 = vmatprep.mubr.f32.mxu0 0.0
  %2591 = vmatmul.mubr.f32.gmra.mrb[0].mxu0 %v2518
  %v2592 = vpop.f32.mrb[0].mxu0
  %v2593 = vadd.f32 0.0, %v2592
  %v2594 = vpop.f32.mrb[0].mxu0
  %2595 = vmatprep.mubr.f32.mxu0 0.0
  %2596 = vmatmul.mubr.f32.gmra.mrb[0].mxu0 %v2520
  %v2597 = vpop.f32.mrb[0].mxu0
  %v2598 = vadd.f32 0.0, %v2597
  %v2599 = vpop.f32.mrb[0].mxu0
  %2600 = vdwg.mxu0
  %v2601 = vmul.f32 %v2593, 0.35355338
  %v2602 = vmul.f32 %v2598, 0.35355338
  %v2603 = vadd.f32 %v2601, %v139
  %v2604 = vadd.f32 %v2602, %v140
  %v2605 = vsel %vm530, %v2603, -inf
  %2606 = vmax.xlane.f32.xlu0 %v2605
  %v2607 = vpop.xlane.xlu0 %2606
  %v2608 = vsel %vm530, %v2604, -inf
  %2609 = vmax.xlane.f32.xlu0 %v2608
  %v2610 = vpop.xlane.xlu0 %2609
  %v2611 = vsub.f32 %v2603, %v2607
  %v2612 = vsub.f32 %v2604, %v2610
  %v2613 = vmul.f32 %v2611, 1.442695
  %v2614 = vpow.pop %v2613
  %v2615 = vmul.f32 %v2612, 1.442695
  %v2616 = vpow.pop %v2615
  %v2617 = vsel %vm530, %v2614, 0.0
  %2618 = vadd.xlane.f32.xlu0 %v2617
  %v2619 = vpop.xlane.xlu0 %2618
  %v2620 = vsel %vm530, %v2616, 0.0
  %2621 = vadd.xlane.f32.xlu0 %v2620
  %v2622 = vpop.xlane.xlu0 %2621
  %v2623 = vrcp.pop %v2619
  %v2624 = vrcp.pop %v2622
  %v2625 = vmul.f32 %v2614, %v2623
  %v2626 = vmul.f32 %v2616, %v2624
  %2627 = vrot.lane.b32.xlu0 %v1898, 104
  %v2628 = vpop.permute.xlu0 %2627
  %2629 = vrot.lane.b32.xlu0 %v1903, 104
  %v2630 = vpop.permute.xlu0 %2629
  %v2634 = vsel %vm530, %v2625, 0
  %v2637 = vsel %vm530, %v2626, 0
  %2639 = vmatprep.subr.mxu0 0.0
  %2640 = vmatpush1.msra.mxu0 %v2628
  %2641 = vmatprep.subr.mxu0 0.0
  %2642 = vmatpush1.msra.mxu0 %v2630
  %2643 = vmatprep.subr.mxu0 0.0
  %2644 = vmatpush1.msra.mxu0 0.0
  %2645 = vmatprep.subr.mxu0 0.0
  %2646 = vmatpush1.msra.mxu0 0.0
  %2647 = vmatprep.subr.mxu0 0.0
  %2648 = vmatpush1.msra.mxu0 0.0
  %2649 = vmatprep.subr.mxu0 0.0
  %2650 = vmatpush1.msra.mxu0 0.0
  %2651 = vmatprep.subr.mxu0 0.0
  %2652 = vmatpush1.msra.mxu0 0.0
  %2653 = vmatprep.subr.mxu0 0.0
  %2654 = vmatpush1.msra.mxu0 0.0
  %2655 = vmatprep.subr.mxu0 0.0
  %2656 = vmatpush1.msra.mxu0 0.0
  %2657 = vmatprep.subr.mxu0 0.0
  %2658 = vmatpush1.msra.mxu0 0.0
  %2659 = vmatprep.subr.mxu0 0.0
  %2660 = vmatpush1.msra.mxu0 0.0
  %2661 = vmatprep.subr.mxu0 0.0
  %2662 = vmatpush1.msra.mxu0 0.0
  %2663 = vmatprep.subr.mxu0 0.0
  %2664 = vmatpush1.msra.mxu0 0.0
  %2665 = vmatprep.subr.mxu0 0.0
  %2666 = vmatpush1.msra.mxu0 0.0
  %2667 = vmatprep.subr.mxu0 0.0
  %2668 = vmatpush1.msra.mxu0 0.0
  %2669 = vmatprep.subr.mxu0 0.0
  %2670 = vmatpush1.msra.mxu0 0.0
  %2671 = vmatprep.subr.mxu0 0.0
  %2672 = vmatpush1.msra.mxu0 0.0
  %2673 = vmatprep.subr.mxu0 0.0
  %2674 = vmatpush1.msra.mxu0 0.0
  %2675 = vmatprep.subr.mxu0 0.0
  %2676 = vmatpush1.msra.mxu0 0.0
  %2677 = vmatprep.subr.mxu0 0.0
  %2678 = vmatpush1.msra.mxu0 0.0
  %2679 = vmatprep.subr.mxu0 0.0
  %2680 = vmatpush1.msra.mxu0 0.0
  %2681 = vmatprep.subr.mxu0 0.0
  %2682 = vmatpush1.msra.mxu0 0.0
  %2683 = vmatprep.subr.mxu0 0.0
  %2684 = vmatpush1.msra.mxu0 0.0
  %2685 = vmatprep.subr.mxu0 0.0
  %2686 = vmatpush1.msra.mxu0 0.0
  %2687 = vmatprep.subr.mxu0 0.0
  %2688 = vmatpush1.msra.mxu0 0.0
  %2689 = vmatprep.subr.mxu0 0.0
  %2690 = vmatpush1.msra.mxu0 0.0
  %2691 = vmatprep.subr.mxu0 0.0
  %2692 = vmatpush1.msra.mxu0 0.0
  %2693 = vmatprep.subr.mxu0 0.0
  %2694 = vmatpush1.msra.mxu0 0.0
  %2695 = vmatprep.subr.mxu0 0.0
  %2696 = vmatpush1.msra.mxu0 0.0
  %2697 = vmatprep.subr.mxu0 0.0
  %2698 = vmatpush1.msra.mxu0 0.0
  %2699 = vmatprep.subr.mxu0 0.0
  %2700 = vmatpush1.msra.mxu0 0.0
  %2701 = vmatprep.subr.mxu0 0.0
  %2702 = vmatpush1.msra.mxu0 0.0
  %2703 = vmatprep.mubr.f32.mxu0 0.0
  %2704 = vmatmul.mubr.f32.gmra.mrb[0].mxu0 %v2634
  %v2705 = vpop.f32.mrb[0].mxu0
  %v2706 = vadd.f32 0.0, %v2705
  %v2707 = vpop.f32.mrb[0].mxu0
  %2708 = vmatprep.mubr.f32.mxu0 0.0
  %2709 = vmatmul.mubr.f32.gmra.mrb[0].mxu0 %v2637
  %v2710 = vpop.f32.mrb[0].mxu0
  %v2711 = vadd.f32 0.0, %v2710
  %v2712 = vpop.f32.mrb[0].mxu0
  %2713 = vdwg.mxu0
  %2716 = vrot.lane.b32.xlu0 %v2298, 8
  %v2717 = vpop.permute.xlu0 %2716
  %2718 = vrot.lane.b32.xlu0 %v2303, 8
  %v2719 = vpop.permute.xlu0 %2718
  %2724 = vrot.lane.b32.xlu0 %v2502, 16
  %v2725 = vpop.permute.xlu0 %2724
  %2726 = vrot.lane.b32.xlu0 %v2507, 16
  %v2727 = vpop.permute.xlu0 %2726
  %2732 = vrot.lane.b32.xlu0 %v2706, 24
  %v2733 = vpop.permute.xlu0 %2732
  %2734 = vrot.lane.b32.xlu0 %v2711, 24
  %v2735 = vpop.permute.xlu0 %2734
  %v2738 = vsel %vm438, %v2092, %v2717
  %v2739 = vsel %vm438, %v2097, %v2719
  %v2740 = vsel %vm530, %v2738, %v2725
  %v2741 = vsel %vm530, %v2739, %v2727
  %v2742 = vsel %vm1276, %v2740, %v2733
  %v2743 = vsel %vm1276, %v2741, %v2735
  %s2744 = scalar_lea.vmem %s5, 32
  %v2745 = vld [vmem:[%s2744] sm:$0xff]
  %v2746 = vld [vmem:[%s2744 + $0x8] sm:$0xff]
  %v2747 = vld [vmem:[%s2744 + $0x10] sm:$0xff]
  %v2748 = vld [vmem:[%s2744 + $0x18] sm:$0xff]
  %2749 = vrot.lane.b32.xlu0 %v1657, 32
  %v2750 = vpop.permute.xlu0 %2749
  %v2753 = vsel %vm142, %v2742, 0
  %v2756 = vsel %vm142, %v2743, 0
  %2758 = vmatprep.subr.mxu0 0.0
  %2759 = vmatpush1.msra.mxu0 %v2745
  %2760 = vmatprep.subr.mxu0 0.0
  %2761 = vmatpush1.msra.mxu0 %v2746
  %2762 = vmatprep.subr.mxu0 0.0
  %2763 = vmatpush1.msra.mxu0 %v2747
  %2764 = vmatprep.subr.mxu0 0.0
  %2765 = vmatpush1.msra.mxu0 %v2748
  %2766 = vmatprep.subr.mxu0 0.0
  %2767 = vmatpush1.msra.mxu0 0.0
  %2768 = vmatprep.subr.mxu0 0.0
  %2769 = vmatpush1.msra.mxu0 0.0
  %2770 = vmatprep.subr.mxu0 0.0
  %2771 = vmatpush1.msra.mxu0 0.0
  %2772 = vmatprep.subr.mxu0 0.0
  %2773 = vmatpush1.msra.mxu0 0.0
  %2774 = vmatprep.subr.mxu0 0.0
  %2775 = vmatpush1.msra.mxu0 0.0
  %2776 = vmatprep.subr.mxu0 0.0
  %2777 = vmatpush1.msra.mxu0 0.0
  %2778 = vmatprep.subr.mxu0 0.0
  %2779 = vmatpush1.msra.mxu0 0.0
  %2780 = vmatprep.subr.mxu0 0.0
  %2781 = vmatpush1.msra.mxu0 0.0
  %2782 = vmatprep.subr.mxu0 0.0
  %2783 = vmatpush1.msra.mxu0 0.0
  %2784 = vmatprep.subr.mxu0 0.0
  %2785 = vmatpush1.msra.mxu0 0.0
  %2786 = vmatprep.subr.mxu0 0.0
  %2787 = vmatpush1.msra.mxu0 0.0
  %2788 = vmatprep.subr.mxu0 0.0
  %2789 = vmatpush1.msra.mxu0 0.0
  %2790 = vmatprep.subr.mxu0 0.0
  %2791 = vmatpush1.msra.mxu0 0.0
  %2792 = vmatprep.subr.mxu0 0.0
  %2793 = vmatpush1.msra.mxu0 0.0
  %2794 = vmatprep.subr.mxu0 0.0
  %2795 = vmatpush1.msra.mxu0 0.0
  %2796 = vmatprep.subr.mxu0 0.0
  %2797 = vmatpush1.msra.mxu0 0.0
  %2798 = vmatprep.subr.mxu0 0.0
  %2799 = vmatpush1.msra.mxu0 0.0
  %2800 = vmatprep.subr.mxu0 0.0
  %2801 = vmatpush1.msra.mxu0 0.0
  %2802 = vmatprep.subr.mxu0 0.0
  %2803 = vmatpush1.msra.mxu0 0.0
  %2804 = vmatprep.subr.mxu0 0.0
  %2805 = vmatpush1.msra.mxu0 0.0
  %2806 = vmatprep.subr.mxu0 0.0
  %2807 = vmatpush1.msra.mxu0 0.0
  %2808 = vmatprep.subr.mxu0 0.0
  %2809 = vmatpush1.msra.mxu0 0.0
  %2810 = vmatprep.subr.mxu0 0.0
  %2811 = vmatpush1.msra.mxu0 0.0
  %2812 = vmatprep.subr.mxu0 0.0
  %2813 = vmatpush1.msra.mxu0 0.0
  %2814 = vmatprep.subr.mxu0 0.0
  %2815 = vmatpush1.msra.mxu0 0.0
  %2816 = vmatprep.subr.mxu0 0.0
  %2817 = vmatpush1.msra.mxu0 0.0
  %2818 = vmatprep.subr.mxu0 0.0
  %2819 = vmatpush1.msra.mxu0 0.0
  %2820 = vmatprep.subr.mxu0 0.0
  %2821 = vmatpush1.msra.mxu0 0.0
  %2822 = vmatprep.mubr.f32.mxu0 0.0
  %2823 = vmatmul.mubr.f32.gmra.mrb[0].mxu0 %v2753
  %v2824 = vpop.f32.mrb[0].mxu0
  %v2825 = vadd.f32 %v2750, %v2824
  %v2826 = vpop.f32.mrb[0].mxu0
  %2827 = vmatprep.mubr.f32.mxu0 0.0
  %2828 = vmatmul.mubr.f32.gmra.mrb[0].mxu0 %v2756
  %v2829 = vpop.f32.mrb[0].mxu0
  %v2830 = vadd.f32 %v2750, %v2829
  %v2831 = vpop.f32.mrb[0].mxu0
  %2832 = vdwg.mxu0
  %v2833 = vadd.f32 %v1607, %v2825
  %v2834 = vadd.f32 %v1608, %v2830
  %v2835 = vsel %vm142, %v2833, 0.0
  %2836 = vadd.xlane.f32.xlu0 %v2835
  %v2837 = vpop.xlane.xlu0 %2836
  %v2838 = vsel %vm142, %v2834, 0.0
  %2839 = vadd.xlane.f32.xlu0 %v2838
  %v2840 = vpop.xlane.xlu0 %2839
  %v2841 = vmul.f32 %v2837, %v149
  %v2842 = vmul.f32 %v2840, %v149
  %v2843 = vsub.f32 %v2833, %v2841
  %v2844 = vsub.f32 %v2834, %v2842
  %v2845 = vmul.f32 %v2843, %v2843
  %v2846 = vmul.f32 %v2844, %v2844
  %v2847 = vsel %vm142, %v2845, 0.0
  %2848 = vadd.xlane.f32.xlu0 %v2847
  %v2849 = vpop.xlane.xlu0 %2848
  %v2850 = vsel %vm142, %v2846, 0.0
  %2851 = vadd.xlane.f32.xlu0 %v2850
  %v2852 = vpop.xlane.xlu0 %2851
  %v2853 = vmul.f32 %v2849, %v149
  %v2854 = vmul.f32 %v2852, %v149
  %v2855 = vadd.f32 %v2853, 1e-05
  %v2856 = vadd.f32 %v2854, 1e-05
  %v2857 = vrsqrt.pop %v2855
  %v2858 = vrsqrt.pop %v2856
  %v2859 = vmul.f32 %v2843, %v2857
  %v2860 = vmul.f32 %v2844, %v2858
  %2861 = vrot.lane.b32.xlu0 %v1640, 64
  %v2862 = vpop.permute.xlu0 %2861
  %v2864 = vmul.f32 %v2859, %v2862
  %v2865 = vmul.f32 %v2860, %v2862
  %2866 = vrot.lane.b32.xlu0 %v1640, 32
  %v2867 = vpop.permute.xlu0 %2866
  %v2869 = vadd.f32 %v2864, %v2867
  %v2870 = vadd.f32 %v2865, %v2867
  %s2871 = scalar_lea.vmem %s6, 32
  %v2872 = vld [vmem:[%s2871] sm:$0xff]
  %v2873 = vld [vmem:[%s2871 + $0x8] sm:$0xff]
  %v2874 = vld [vmem:[%s2871 + $0x10] sm:$0xff]
  %v2875 = vld [vmem:[%s2871 + $0x18] sm:$0xff]
  %v2876 = vlaneseq
  %v2877 = vshrl.u32 %v2876, 7
  %v2878 = vsub.s32 2, %v2877
  %v2879 = vrot.slane %v1610, %v2878
  %v2881 = vsel %vm142, %v2869, 0
  %v2884 = vsel %vm142, %v2870, 0
  %2886 = vmatprep.subr.mxu0 0.0
  %2887 = vmatpush1.msra.mxu0 %v2872
  %2888 = vmatprep.subr.mxu0 0.0
  %2889 = vmatpush1.msra.mxu0 %v2873
  %2890 = vmatprep.subr.mxu0 0.0
  %2891 = vmatpush1.msra.mxu0 %v2874
  %2892 = vmatprep.subr.mxu0 0.0
  %2893 = vmatpush1.msra.mxu0 %v2875
  %2894 = vmatprep.subr.mxu0 0.0
  %2895 = vmatpush1.msra.mxu0 0.0
  %2896 = vmatprep.subr.mxu0 0.0
  %2897 = vmatpush1.msra.mxu0 0.0
  %2898 = vmatprep.subr.mxu0 0.0
  %2899 = vmatpush1.msra.mxu0 0.0
  %2900 = vmatprep.subr.mxu0 0.0
  %2901 = vmatpush1.msra.mxu0 0.0
  %2902 = vmatprep.subr.mxu0 0.0
  %2903 = vmatpush1.msra.mxu0 0.0
  %2904 = vmatprep.subr.mxu0 0.0
  %2905 = vmatpush1.msra.mxu0 0.0
  %2906 = vmatprep.subr.mxu0 0.0
  %2907 = vmatpush1.msra.mxu0 0.0
  %2908 = vmatprep.subr.mxu0 0.0
  %2909 = vmatpush1.msra.mxu0 0.0
  %2910 = vmatprep.subr.mxu0 0.0
  %2911 = vmatpush1.msra.mxu0 0.0
  %2912 = vmatprep.subr.mxu0 0.0
  %2913 = vmatpush1.msra.mxu0 0.0
  %2914 = vmatprep.subr.mxu0 0.0
  %2915 = vmatpush1.msra.mxu0 0.0
  %2916 = vmatprep.subr.mxu0 0.0
  %2917 = vmatpush1.msra.mxu0 0.0
  %2918 = vmatprep.subr.mxu0 0.0
  %2919 = vmatpush1.msra.mxu0 0.0
  %2920 = vmatprep.subr.mxu0 0.0
  %2921 = vmatpush1.msra.mxu0 0.0
  %2922 = vmatprep.subr.mxu0 0.0
  %2923 = vmatpush1.msra.mxu0 0.0
  %2924 = vmatprep.subr.mxu0 0.0
  %2925 = vmatpush1.msra.mxu0 0.0
  %2926 = vmatprep.subr.mxu0 0.0
  %2927 = vmatpush1.msra.mxu0 0.0
  %2928 = vmatprep.subr.mxu0 0.0
  %2929 = vmatpush1.msra.mxu0 0.0
  %2930 = vmatprep.subr.mxu0 0.0
  %2931 = vmatpush1.msra.mxu0 0.0
  %2932 = vmatprep.subr.mxu0 0.0
  %2933 = vmatpush1.msra.mxu0 0.0
  %2934 = vmatprep.subr.mxu0 0.0
  %2935 = vmatpush1.msra.mxu0 0.0
  %2936 = vmatprep.subr.mxu0 0.0
  %2937 = vmatpush1.msra.mxu0 0.0
  %2938 = vmatprep.subr.mxu0 0.0
  %2939 = vmatpush1.msra.mxu0 0.0
  %2940 = vmatprep.subr.mxu0 0.0
  %2941 = vmatpush1.msra.mxu0 0.0
  %2942 = vmatprep.subr.mxu0 0.0
  %2943 = vmatpush1.msra.mxu0 0.0
  %2944 = vmatprep.subr.mxu0 0.0
  %2945 = vmatpush1.msra.mxu0 0.0
  %2946 = vmatprep.subr.mxu0 0.0
  %2947 = vmatpush1.msra.mxu0 0.0
  %2948 = vmatprep.subr.mxu0 0.0
  %2949 = vmatpush1.msra.mxu0 0.0
  %2950 = vmatprep.mubr.f32.mxu0 0.0
  %2951 = vmatmul.mubr.f32.gmra.mrb[0].mxu0 %v2881
  %v2952 = vpop.f32.mrb[0].mxu0
  %v2953 = vadd.f32 %v2879, %v2952
  %v2954 = vpop.f32.mrb[0].mxu0
  %2955 = vmatprep.mubr.f32.mxu0 0.0
  %2956 = vmatmul.mubr.f32.gmra.mrb[0].mxu0 %v2884
  %v2957 = vpop.f32.mrb[0].mxu0
  %v2958 = vadd.f32 %v2879, %v2957
  %v2959 = vpop.f32.mrb[0].mxu0
  %2960 = vdwg.mxu0
  %v2961 = vmul.f32 %v2953, 0.5
  %v2962 = vmul.f32 %v2958, 0.5
  %v2963 = vmul.f32 %v2953, 0.044715
  %v2964 = vmul.f32 %v2958, 0.044715
  %v2965 = vmul.f32 %v2963, %v2953
  %v2966 = vmul.f32 %v2964, %v2958
  %v2967 = vmul.f32 %v2965, %v2953
  %v2968 = vmul.f32 %v2966, %v2958
  %v2969 = vadd.f32 %v2953, %v2967
  %v2970 = vadd.f32 %v2958, %v2968
  %v2971 = vmul.f32 %v2969, 0.7978846
  %v2972 = vmul.f32 %v2970, 0.7978846
  %v2973 = vtanh.pop %v2971
  %v2974 = vtanh.pop %v2972
  %v2975 = vadd.f32 %v2973, 1.0
  %v2976 = vadd.f32 %v2974, 1.0
  %v2977 = vmul.f32 %v2961, %v2975
  %v2978 = vmul.f32 %v2962, %v2976
  %s2979 = scalar_lea.vmem %s7, 128
  %v2980 = vld [vmem:[%s2979] sm:$0xff]
  %v2981 = vld [vmem:[%s2979 + $0x8] sm:$0xff]
  %v2982 = vld [vmem:[%s2979 + $0x10] sm:$0xff]
  %v2983 = vld [vmem:[%s2979 + $0x18] sm:$0xff]
  %v2984 = vld [vmem:[%s2979 + $0x20] sm:$0xff]
  %v2985 = vld [vmem:[%s2979 + $0x28] sm:$0xff]
  %v2986 = vld [vmem:[%s2979 + $0x30] sm:$0xff]
  %v2987 = vld [vmem:[%s2979 + $0x38] sm:$0xff]
  %v2988 = vld [vmem:[%s2979 + $0x40] sm:$0xff]
  %v2989 = vld [vmem:[%s2979 + $0x48] sm:$0xff]
  %v2990 = vld [vmem:[%s2979 + $0x50] sm:$0xff]
  %v2991 = vld [vmem:[%s2979 + $0x58] sm:$0xff]
  %v2992 = vld [vmem:[%s2979 + $0x60] sm:$0xff]
  %v2993 = vld [vmem:[%s2979 + $0x68] sm:$0xff]
  %v2994 = vld [vmem:[%s2979 + $0x70] sm:$0xff]
  %v2995 = vld [vmem:[%s2979 + $0x78] sm:$0xff]
  %v2996 = vlaneseq
  %v2997 = vshrl.u32 %v2996, 7
  %v2998 = vsub.s32 3, %v2997
  %v2999 = vrot.slane %v1610, %v2998
  %3000 = vmatprep.subr.mxu0 0.0
  %3001 = vmatpush1.msra.mxu0 %v2980
  %3002 = vmatprep.subr.mxu0 0.0
  %3003 = vmatpush1.msra.mxu0 %v2981
  %3004 = vmatprep.subr.mxu0 0.0
  %3005 = vmatpush1.msra.mxu0 %v2982
  %3006 = vmatprep.subr.mxu0 0.0
  %3007 = vmatpush1.msra.mxu0 %v2983
  %3008 = vmatprep.subr.mxu0 0.0
  %3009 = vmatpush1.msra.mxu0 %v2984
  %3010 = vmatprep.subr.mxu0 0.0
  %3011 = vmatpush1.msra.mxu0 %v2985
  %3012 = vmatprep.subr.mxu0 0.0
  %3013 = vmatpush1.msra.mxu0 %v2986
  %3014 = vmatprep.subr.mxu0 0.0
  %3015 = vmatpush1.msra.mxu0 %v2987
  %3016 = vmatprep.subr.mxu0 0.0
  %3017 = vmatpush1.msra.mxu0 %v2988
  %3018 = vmatprep.subr.mxu0 0.0
  %3019 = vmatpush1.msra.mxu0 %v2989
  %3020 = vmatprep.subr.mxu0 0.0
  %3021 = vmatpush1.msra.mxu0 %v2990
  %3022 = vmatprep.subr.mxu0 0.0
  %3023 = vmatpush1.msra.mxu0 %v2991
  %3024 = vmatprep.subr.mxu0 0.0
  %3025 = vmatpush1.msra.mxu0 %v2992
  %3026 = vmatprep.subr.mxu0 0.0
  %3027 = vmatpush1.msra.mxu0 %v2993
  %3028 = vmatprep.subr.mxu0 0.0
  %3029 = vmatpush1.msra.mxu0 %v2994
  %3030 = vmatprep.subr.mxu0 0.0
  %3031 = vmatpush1.msra.mxu0 %v2995
  %3032 = vmatprep.subr.mxu0 0.0
  %3033 = vmatpush1.msra.mxu0 0.0
  %3034 = vmatprep.subr.mxu0 0.0
  %3035 = vmatpush1.msra.mxu0 0.0
  %3036 = vmatprep.subr.mxu0 0.0
  %3037 = vmatpush1.msra.mxu0 0.0
  %3038 = vmatprep.subr.mxu0 0.0
  %3039 = vmatpush1.msra.mxu0 0.0
  %3040 = vmatprep.subr.mxu0 0.0
  %3041 = vmatpush1.msra.mxu0 0.0
  %3042 = vmatprep.subr.mxu0 0.0
  %3043 = vmatpush1.msra.mxu0 0.0
  %3044 = vmatprep.subr.mxu0 0.0
  %3045 = vmatpush1.msra.mxu0 0.0
  %3046 = vmatprep.subr.mxu0 0.0
  %3047 = vmatpush1.msra.mxu0 0.0
  %3048 = vmatprep.subr.mxu0 0.0
  %3049 = vmatpush1.msra.mxu0 0.0
  %3050 = vmatprep.subr.mxu0 0.0
  %3051 = vmatpush1.msra.mxu0 0.0
  %3052 = vmatprep.subr.mxu0 0.0
  %3053 = vmatpush1.msra.mxu0 0.0
  %3054 = vmatprep.subr.mxu0 0.0
  %3055 = vmatpush1.msra.mxu0 0.0
  %3056 = vmatprep.subr.mxu0 0.0
  %3057 = vmatpush1.msra.mxu0 0.0
  %3058 = vmatprep.subr.mxu0 0.0
  %3059 = vmatpush1.msra.mxu0 0.0
  %3060 = vmatprep.subr.mxu0 0.0
  %3061 = vmatpush1.msra.mxu0 0.0
  %3062 = vmatprep.subr.mxu0 0.0
  %3063 = vmatpush1.msra.mxu0 0.0
  %3064 = vmatprep.mubr.f32.mxu0 0.0
  %3065 = vmatmul.mubr.f32.gmra.mrb[0].mxu0 %v2977
  %v3066 = vpop.f32.mrb[0].mxu0
  %v3067 = vadd.f32 %v2999, %v3066
  %v3068 = vpop.f32.mrb[0].mxu0
  %3069 = vmatprep.mubr.f32.mxu0 0.0
  %3070 = vmatmul.mubr.f32.gmra.mrb[0].mxu0 %v2978
  %v3071 = vpop.f32.mrb[0].mxu0
  %v3072 = vadd.f32 %v2999, %v3071
  %v3073 = vpop.f32.mrb[0].mxu0
  %3074 = vdwg.mxu0
  %v3075 = vadd.f32 %v2833, %v3067
  %v3076 = vadd.f32 %v2834, %v3072
  %v3077 = vsel %vm142, %v3075, 0.0
  %3078 = vadd.xlane.f32.xlu0 %v3077
  %v3079 = vpop.xlane.xlu0 %3078
  %v3080 = vsel %vm142, %v3076, 0.0
  %3081 = vadd.xlane.f32.xlu0 %v3080
  %v3082 = vpop.xlane.xlu0 %3081
  %v3083 = vmul.f32 %v3079, %v149
  %v3084 = vmul.f32 %v3082, %v149
  %v3085 = vsub.f32 %v3075, %v3083
  %v3086 = vsub.f32 %v3076, %v3084
  %v3087 = vmul.f32 %v3085, %v3085
  %v3088 = vmul.f32 %v3086, %v3086
  %v3089 = vsel %vm142, %v3087, 0.0
  %3090 = vadd.xlane.f32.xlu0 %v3089
  %v3091 = vpop.xlane.xlu0 %3090
  %v3092 = vsel %vm142, %v3088, 0.0
  %3093 = vadd.xlane.f32.xlu0 %v3092
  %v3094 = vpop.xlane.xlu0 %3093
  %v3095 = vmul.f32 %v3091, %v149
  %v3096 = vmul.f32 %v3094, %v149
  %v3097 = vadd.f32 %v3095, 1e-05
  %v3098 = vadd.f32 %v3096, 1e-05
  %v3099 = vrsqrt.pop %v3097
  %v3100 = vrsqrt.pop %v3098
  %v3101 = vmul.f32 %v3085, %v3099
  %v3102 = vmul.f32 %v3086, %v3100
  %3104 = vrot.lane.b32.xlu0 %v1531, 96
  %v3105 = vpop.permute.xlu0 %3104
  %v3107 = vmul.f32 %v3101, %v3105
  %v3108 = vmul.f32 %v3102, %v3105
  %3109 = vrot.lane.b32.xlu0 %v1531, 64
  %v3110 = vpop.permute.xlu0 %3109
  %v3112 = vadd.f32 %v3107, %v3110
  %v3113 = vadd.f32 %v3108, %v3110
  %v3115 = vsel %vm142, %v3112, 0
  %v3118 = vsel %vm142, %v3113, 0
  %v3121 = vsel %vm142, %v32, 0
  %v3124 = vsel %vm142, %v33, 0
  %v3127 = vsel %vm142, %v34, 0
  %v3130 = vsel %vm142, %v35, 0
  %v3133 = vsel %vm142, %v36, 0
  %v3136 = vsel %vm142, %v37, 0
  %v3139 = vsel %vm142, %v38, 0
  %v3142 = vsel %vm142, %v39, 0
  %v3145 = vsel %vm142, %v40, 0
  %v3148 = vsel %vm142, %v41, 0
  %v3151 = vsel %vm142, %v42, 0
  %v3154 = vsel %vm142, %v43, 0
  %v3157 = vsel %vm142, %v44, 0
  %v3160 = vsel %vm142, %v45, 0
  %v3163 = vsel %vm142, %v46, 0
  %v3166 = vsel %vm142, %v47, 0
  %3168 = vmatprep.subr.mxu0 0.0
  %3169 = vmatpush1.xpose.msra.mxu0 %v3121
  %3170 = vmatprep.subr.mxu0 0.0
  %3171 = vmatpush1.xpose.msra.mxu0 %v3124
  %3172 = vmatprep.subr.mxu0 0.0
  %3173 = vmatpush1.xpose.msra.mxu0 %v3127
  %3174 = vmatprep.subr.mxu0 0.0
  %3175 = vmatpush1.xpose.msra.mxu0 %v3130
  %3176 = vmatprep.subr.mxu0 0.0
  %3177 = vmatpush1.xpose.msra.mxu0 %v3133
  %3178 = vmatprep.subr.mxu0 0.0
  %3179 = vmatpush1.xpose.msra.mxu0 %v3136
  %3180 = vmatprep.subr.mxu0 0.0
  %3181 = vmatpush1.xpose.msra.mxu0 %v3139
  %3182 = vmatprep.subr.mxu0 0.0
  %3183 = vmatpush1.xpose.msra.mxu0 %v3142
  %3184 = vmatprep.subr.mxu0 0.0
  %3185 = vmatpush1.xpose.msra.mxu0 %v3145
  %3186 = vmatprep.subr.mxu0 0.0
  %3187 = vmatpush1.xpose.msra.mxu0 %v3148
  %3188 = vmatprep.subr.mxu0 0.0
  %3189 = vmatpush1.xpose.msra.mxu0 %v3151
  %3190 = vmatprep.subr.mxu0 0.0
  %3191 = vmatpush1.xpose.msra.mxu0 %v3154
  %3192 = vmatprep.subr.mxu0 0.0
  %3193 = vmatpush1.xpose.msra.mxu0 %v3157
  %3194 = vmatprep.subr.mxu0 0.0
  %3195 = vmatpush1.xpose.msra.mxu0 %v3160
  %3196 = vmatprep.subr.mxu0 0.0
  %3197 = vmatpush1.xpose.msra.mxu0 %v3163
  %3198 = vmatprep.subr.mxu0 0.0
  %3199 = vmatpush1.xpose.msra.mxu0 %v3166
  %3200 = vmatprep.subr.mxu0 0.0
  %3201 = vmatpush1.xpose.msra.mxu0 0.0
  %3202 = vmatprep.subr.mxu0 0.0
  %3203 = vmatpush1.xpose.msra.mxu0 0.0
  %3204 = vmatprep.subr.mxu0 0.0
  %3205 = vmatpush1.xpose.msra.mxu0 0.0
  %3206 = vmatprep.subr.mxu0 0.0
  %3207 = vmatpush1.xpose.msra.mxu0 0.0
  %3208 = vmatprep.subr.mxu0 0.0
  %3209 = vmatpush1.xpose.msra.mxu0 0.0
  %3210 = vmatprep.subr.mxu0 0.0
  %3211 = vmatpush1.xpose.msra.mxu0 0.0
  %3212 = vmatprep.subr.mxu0 0.0
  %3213 = vmatpush1.xpose.msra.mxu0 0.0
  %3214 = vmatprep.subr.mxu0 0.0
  %3215 = vmatpush1.xpose.msra.mxu0 0.0
  %3216 = vmatprep.subr.mxu0 0.0
  %3217 = vmatpush1.xpose.msra.mxu0 0.0
  %3218 = vmatprep.subr.mxu0 0.0
  %3219 = vmatpush1.xpose.msra.mxu0 0.0
  %3220 = vmatprep.subr.mxu0 0.0
  %3221 = vmatpush1.xpose.msra.mxu0 0.0
  %3222 = vmatprep.subr.mxu0 0.0
  %3223 = vmatpush1.xpose.msra.mxu0 0.0
  %3224 = vmatprep.subr.mxu0 0.0
  %3225 = vmatpush1.xpose.msra.mxu0 0.0
  %3226 = vmatprep.subr.mxu0 0.0
  %3227 = vmatpush1.xpose.msra.mxu0 0.0
  %3228 = vmatprep.subr.mxu0 0.0
  %3229 = vmatpush1.xpose.msra.mxu0 0.0
  %3230 = vmatprep.subr.mxu0 0.0
  %3231 = vmatpush1.xpose.msra.mxu0 0.0
  %3232 = vmatprep.mubr.f32.mxu0 0.0
  %3233 = vmatmul.mubr.f32.gmra.mrb[0].mxu0 %v3115
  %v3234 = vpop.f32.mrb[0].mxu0
  %v3235 = vadd.f32 0.0, %v3234
  %v3236 = vpop.f32.mrb[0].mxu0
  %3237 = vmatprep.mubr.f32.mxu0 0.0
  %3238 = vmatmul.mubr.f32.gmra.mrb[0].mxu0 %v3118
  %v3239 = vpop.f32.mrb[0].mxu0
  %v3240 = vadd.f32 0.0, %v3239
  %v3241 = vpop.f32.mrb[0].mxu0
  %3242 = vdwg.mxu0
  %3243 = vst [vmem:[%s9] sm:$0xff] %v3235
  %3244 = vst [vmem:[%s9 + $0x8] sm:$0xff] %v3240
  // Predicated region
  $region38: #{text_decoder_forward.1} parent=0 // pred_check
    _
  $region39: #{text_decoder_forward.1} parent=0 // pred_check_branch
    %3246 = sbr.rel (0) target = $region41
  $region40: #{text_decoder_forward.1} parent=0 // pred_region
    _
  $region41: #{text_decoder_forward.1} parent=0 // pred_fallthru
    _
  // Predicated region
  $region42: #{text_decoder_forward.1} parent=0 // pred_check
    _
  $region43: #{text_decoder_forward.1} parent=0 // pred_check_branch
    %3248 = sbr.rel (0) target = $region45
  $region44: #{text_decoder_forward.1} parent=0 // pred_region
    _
  $region45: #{text_decoder_forward.1} parent=0 // pred_fallthru
    _

</llo_original>
